<compile_context>
chip_gen: v7x
topology: tpu7x:2x2x1
jax: 0.10.0
libtpu: 0.0.40
codegen_flags: <defaults>
</compile_context>

<pallas_src>
import math

import jax
import jax.numpy as jnp
from jax.experimental import pallas as pl
from jax.experimental.pallas import tpu as pltpu


# ----------------------------- small helpers ---------------------------------

def _gelu_tanh(x):
    # TODO(synk): PyTorch activation='gelu' is the exact erf GELU; erf lowering on
    # Mosaic is not guaranteed, so the tanh approximation is used (~1e-3 max diff).
    c = math.sqrt(2.0 / math.pi)
    return 0.5 * x * (1.0 + jnp.tanh(c * (x + 0.044715 * x * x * x)))


def _layernorm(z, g, b):
    mu = jnp.mean(z, axis=-1, keepdims=True)
    var = jnp.mean((z - mu) * (z - mu), axis=-1, keepdims=True)
    return (z - mu) * jax.lax.rsqrt(var + 1e-5) * g + b       # eps = nn.LayerNorm default


def _lrelu(y):
    return jnp.where(y > 0, y, 0.2 * y)                       # LeakyReLU(0.2)


def _shifted(h):
    """x_prev[l] = h[l-1] (0 at l=0); x_next[l] = h[l+1] (0 at l=L-1).

    Zero-padded shifts via an XLU sublane roll + one-row iota mask. Replaces the
    old O(L^2) banded shift-matrix matmuls (MXU work + VMEM hazard at large L).
    """
    L = h.shape[0]
    rows = jax.lax.broadcasted_iota(jnp.int32, h.shape, 0)
    zero = jnp.zeros_like(h)
    prev = jnp.where(rows == 0, zero, pltpu.roll(h, 1, 0))
    nxt = jnp.where(rows == L - 1, zero, pltpu.roll(h, L - 1, 0))
    return prev, nxt


def _conv3(h, w, b):
    """Conv1d(k=3, stride=1, pad=1), channels-last, as ONE im2col matmul.

    w: (3*Cin, Cout), rows packed as [tap for x[l-1] | tap for x[l] | tap for x[l+1]]
    (PyTorch: Conv1d.weight.permute(2, 1, 0).reshape(3*Cin, Cout)).
    """
    prev, nxt = _shifted(h)
    hc = jnp.concatenate([prev, h, nxt], axis=-1)
    return jnp.dot(hc, w, preferred_element_type=jnp.float32) + b


def _rep_spec(shape):
    n = len(shape)
    return pl.BlockSpec(shape, lambda i, n=n: (0,) * n)


def _batch_spec(shape):
    n = len(shape)
    return pl.BlockSpec(shape, lambda i, n=n: (i,) + (0,) * (n - 1))


_PARALLEL = pltpu.CompilerParams(dimension_semantics=("parallel",))


# ---------- fused conv front: conv_in + ResBlocks + first Upsample/Conv -------

def _make_front_kernel(n_resblk, has_conv_in, has_up):
    def kernel(*refs):
        o_ref = refs[-1]
        it = iter(refs[:-1])
        x = next(it)[0]                                       # (T, Cin)
        if has_conv_in:
            wci, bci = next(it), next(it)
            x = _conv3(x, wci[...], bci[...])
        if n_resblk:
            # TODO(synk): ResBlock source not provided; assumed conv3 -> LeakyReLU(0.2)
            # -> conv3 with an additive skip, at channels[0].
            wrb, brb = next(it), next(it)
            for r in range(n_resblk):
                h = _lrelu(_conv3(x, wrb[2 * r], brb[2 * r]))
                h = _conv3(h, wrb[2 * r + 1], brb[2 * r + 1])
                x = x + h
        if has_up:
            # Folded Upsample(2,'nearest') + Conv1d(k=3,pad=1) + LeakyReLU:
            # one (T,3C)@(3C,2C) matmul emits even (lanes [:C]) and odd (lanes [C:])
            # output streams directly; no jnp.repeat of the activation.
            wup, bup = next(it), next(it)
            prev, nxt = _shifted(x)
            xc = jnp.concatenate([prev, x, nxt], axis=-1)
            x = _lrelu(jnp.dot(xc, wup[...], preferred_element_type=jnp.float32)
                       + bup[...])
        o_ref[0] = x
    return kernel


def conv_front(x, params, cfg):
    """conv_in + all ResBlocks + first up stage in ONE pallas_call."""
    B, T, cin = x.shape
    C0 = cfg["channels"][0]
    n_resblk = cfg["n_resblk"]
    has_conv_in = params["conv_in"] is not None
    has_up = cfg["n_up"] >= 1

    ins = [x]
    if has_conv_in:
        ins += [params["conv_in"]["w"], params["conv_in"]["b"]]
    if n_resblk:
        ins += [params["res_w"], params["res_b"]]
    if has_up:
        ins += [params["ups"][0]["w"], params["ups"][0]["b"]]
    in_specs = [_batch_spec((1, T, cin))] + [_rep_spec(a.shape) for a in ins[1:]]

    if has_up:
        out_c = 2 * C0
    elif has_conv_in or n_resblk:
        out_c = C0
    else:
        out_c = cin

    y = pl.pallas_call(
        _make_front_kernel(n_resblk, has_conv_in, has_up),
        grid=(B,), in_specs=in_specs,
        out_specs=_batch_spec((1, T, out_c)),
        out_shape=jax.ShapeDtypeStruct((B, T, out_c), jnp.float32),
        compiler_params=_PARALLEL,
    )(*ins)
    if has_up:
        # lane-packed (B,T,2C) -> (B,2T,C): contiguous row-major view, free.
        y = y.reshape(B, 2 * T, C0)
    return y


# ------------- extra up stages (n_up > 1), same folded formulation -----------

def _up_kernel(x_ref, w_ref, b_ref, o_ref):
    x = x_ref[0]
    prev, nxt = _shifted(x)
    xc = jnp.concatenate([prev, x, nxt], axis=-1)
    o_ref[0] = _lrelu(jnp.dot(xc, w_ref[...], preferred_element_type=jnp.float32)
                      + b_ref[...])


def up_stage(x, w, b):
    B, L, C = x.shape
    y = pl.pallas_call(
        _up_kernel, grid=(B,),
        in_specs=[_batch_spec((1, L, C)), _rep_spec(w.shape), _rep_spec(b.shape)],
        out_specs=_batch_spec((1, L, 2 * C)),
        out_shape=jax.ShapeDtypeStruct((B, L, 2 * C), jnp.float32),
        compiler_params=_PARALLEL,
    )(x, w, b)
    return y.reshape(B, 2 * L, C)


# --------- fused PE + all TransformerEncoderLayers + out-linear + vel ---------

def _make_transformer_head_kernel(num_layers, num_heads, d_model, return_pose):
    H, D = num_heads, d_model
    Dh = D // H
    scale = 1.0 / math.sqrt(Dh)

    def kernel(x_ref, pe_ref, wqkv_ref, bqkv_ref, wo_ref, bo_ref, ln_ref,
               f1w_ref, f1b_ref, f2w_ref, f2b_ref,
               ow_ref, ob_ref, vw_ref, vb_ref, *out_refs):
        x = x_ref[0] + pe_ref[...]                            # fold PE, (L, D)
        for li in range(num_layers):                          # static unroll over layers
            # --- self-attention: one wide QKV matmul; per-head softmax/PV only ---
            qkv = (jnp.dot(x, wqkv_ref[li], preferred_element_type=jnp.float32)
                   + bqkv_ref[li])                            # (L, 3D)
            heads = []
            for h in range(H):
                q = qkv[:, h * Dh:(h + 1) * Dh]
                k = qkv[:, D + h * Dh:D + (h + 1) * Dh]
                v = qkv[:, 2 * D + h * Dh:2 * D + (h + 1) * Dh]
                s = jax.lax.dot_general(q, k, (((1,), (1,)), ((), ())),
                                        preferred_element_type=jnp.float32) * scale
                s = s - jnp.max(s, axis=-1, keepdims=True)
                p = jnp.exp(s)
                p = p * pl.reciprocal(jnp.sum(p, axis=-1, keepdims=True), approx=True)
                heads.append(jnp.dot(p, v, preferred_element_type=jnp.float32))
            attn = jnp.concatenate(heads, axis=-1)            # (L, D)
            attn = (jnp.dot(attn, wo_ref[li], preferred_element_type=jnp.float32)
                    + bo_ref[li])
            # --- add & LN1, FFN(gelu), add & LN2 (dropout = identity, inference) ---
            x = _layernorm(x + attn, ln_ref[li, 0], ln_ref[li, 1])
            f = _gelu_tanh(jnp.dot(x, f1w_ref[li], preferred_element_type=jnp.float32)
                           + f1b_ref[li])
            f = jnp.dot(f, f2w_ref[li], preferred_element_type=jnp.float32) + f2b_ref[li]
            x = _layernorm(x + f, ln_ref[li, 2], ln_ref[li, 3])
        pose = jnp.dot(x, ow_ref[...], preferred_element_type=jnp.float32) + ob_ref[...]
        # TODO(synk): vel_decoder is importlib-loaded in PyTorch (arch unknown at
        # translation time); a Linear(out_dim -> out_dim) proxy is used here.
        vel = jnp.dot(pose, vw_ref[...], preferred_element_type=jnp.float32) + vb_ref[...]
        if return_pose:
            out_refs[0][0] = pose
            out_refs[1][0] = vel
        else:
            out_refs[0][0] = vel                              # pose never leaves VMEM
    return kernel


def transformer_head(x, params, cfg, return_pose=False):
    B, L, D = x.shape
    out_dim = cfg["channels"][-1]
    weights = [params["pe"][:L], params["wqkv"], params["bqkv"], params["wo"],
               params["bo"], params["lnp"], params["ff1w"], params["ff1b"],
               params["ff2w"], params["ff2b"], params["out_w"], params["out_b"],
               params["vel_w"], params["vel_b"]]
    ins = [x] + weights
    in_specs = [_batch_spec((1, L, D))] + [_rep_spec(w.shape) for w in weights]
    if return_pose:
        out_specs = (_batch_spec((1, L, out_dim)), _batch_spec((1, L, out_dim)))
        out_shape = (jax.ShapeDtypeStruct((B, L, out_dim), jnp.float32),
                     jax.ShapeDtypeStruct((B, L, out_dim), jnp.float32))
    else:
        out_specs = _batch_spec((1, L, out_dim))
        out_shape = jax.ShapeDtypeStruct((B, L, out_dim), jnp.float32)
    return pl.pallas_call(
        _make_transformer_head_kernel(cfg["num_layers"], cfg["num_heads"], D,
                                      return_pose),
        grid=(B,), in_specs=in_specs, out_specs=out_specs, out_shape=out_shape,
        compiler_params=_PARALLEL,
    )(*ins)


# ----------------------------- params / model glue ----------------------------

def sinusoidal_pe(max_len, d_model):
    pos = jnp.arange(max_len, dtype=jnp.float32)[:, None]
    div = jnp.exp(jnp.arange(0, d_model, 2, dtype=jnp.float32)
                  * (-math.log(10000.0) / d_model))
    pe = jnp.zeros((max_len, d_model), jnp.float32)
    pe = pe.at[:, 0::2].set(jnp.sin(pos * div))
    pe = pe.at[:, 1::2].set(jnp.cos(pos * div))
    return pe


def init_params(key, cfg):
    input_size = cfg["input_size"]
    channels = cfg["channels"]
    C0, D, out_dim = channels[0], channels[-2], channels[-1]
    Hff = cfg["hidden_dims"]
    n_resblk, n_up, num_layers = cfg["n_resblk"], cfg["n_up"], cfg["num_layers"]

    def nrm(k, shape, scale=0.1):
        return scale * jax.random.normal(k, shape, jnp.float32)

    keys = iter(jax.random.split(key, 64))
    p = {}
    # conv weight layout: PyTorch Conv1d.weight (Cout,Cin,3) -> permute(2,1,0).reshape(3*Cin,Cout)
    if input_size != C0:
        p["conv_in"] = dict(w=nrm(next(keys), (3 * input_size, C0)),
                            b=jnp.zeros((1, C0), jnp.float32))
    else:
        p["conv_in"] = None
    if n_resblk:
        p["res_w"] = nrm(next(keys), (2 * n_resblk, 3 * C0, C0))
        p["res_b"] = jnp.zeros((2 * n_resblk, 1, C0), jnp.float32)
    # up stages: folded 2x-nearest-upsample + conv(k=3) weights -> (3C, 2C), host-built.
    p["ups"] = []
    for i in range(n_up):
        C = channels[i]
        taps = nrm(next(keys), (3, C, C))          # taps[j] = Conv1d.weight[:, :, j].T
        w0, w1, w2 = taps[0], taps[1], taps[2]
        wf = jnp.zeros((3 * C, 2 * C), jnp.float32)
        wf = wf.at[0:C, 0:C].set(w0)               # even: x[l-1] @ w0
        wf = wf.at[C:2 * C, 0:C].set(w1 + w2)      # even: x[l]   @ (w1+w2)
        wf = wf.at[C:2 * C, C:2 * C].set(w0 + w1)  # odd : x[l]   @ (w0+w1)
        wf = wf.at[2 * C:3 * C, C:2 * C].set(w2)   # odd : x[l+1] @ w2
        bf = jnp.zeros((1, 2 * C), jnp.float32)
        p["ups"].append(dict(w=wf, b=bf))
    # transformer layers, stacked along a leading layer axis.
    # wqkv[l] = in_proj_weight.T; wo[l] = out_proj.weight.T; ff*w[l] = linear*.weight.T
    p["wqkv"] = nrm(next(keys), (num_layers, D, 3 * D))
    p["bqkv"] = jnp.zeros((num_layers, 1, 3 * D), jnp.float32)
    p["wo"] = nrm(next(keys), (num_layers, D, D))
    p["bo"] = jnp.zeros((num_layers, 1, D), jnp.float32)
    lnp = jnp.zeros((num_layers, 4, 1, D), jnp.float32)      # [ln1_g, ln1_b, ln2_g, ln2_b]
    p["lnp"] = lnp.at[:, 0].set(1.0).at[:, 2].set(1.0)
    p["ff1w"] = nrm(next(keys), (num_layers, D, Hff))
    p["ff1b"] = jnp.zeros((num_layers, 1, Hff), jnp.float32)
    p["ff2w"] = nrm(next(keys), (num_layers, Hff, D))
    p["ff2b"] = jnp.zeros((num_layers, 1, D), jnp.float32)
    p["out_w"] = nrm(next(keys), (D, out_dim))
    p["out_b"] = jnp.zeros((1, out_dim), jnp.float32)
    # TODO(synk): vel_decoder proxy (real arch is importlib-loaded in PyTorch).
    p["vel_w"] = nrm(next(keys), (out_dim, out_dim))
    p["vel_b"] = jnp.zeros((1, out_dim), jnp.float32)
    p["pe"] = sinusoidal_pe(cfg["max_len"], D)
    return p


def vq_decoder_velocity_v2_forward(params, cfg, inputs, return_pose=False):
    """inputs: (B, T, input_size) float32 (channels-last; PyTorch permutes absorbed)."""
    x = inputs.astype(jnp.float32)
    # kernel 1: conv_in + ResBlocks + first Upsample/Conv/LeakyReLU (fused)
    x = conv_front(x, params, cfg)
    # extra up stages (none in the demo config)
    for i in range(1, cfg["n_up"]):
        x = up_stage(x, params["ups"][i]["w"], params["ups"][i]["b"])
    # kernel 2: PE + all transformer layers + out-linear + velocity proxy (fused)
    return transformer_head(x, params, cfg, return_pose)


# ----------------------------- main -------------------------------------------

if __name__ == "__main__":
    cfg = dict(input_size=16, channels=[32, 16], n_resblk=2, n_up=1,
               hidden_dims=64, num_layers=2, num_heads=4, dropout=0.1,
               activation="gelu", max_len=128)
    key = jax.random.PRNGKey(0)
    pkey, xkey = jax.random.split(key)
    params = init_params(pkey, cfg)

    B, T = 2, 8
    inputs = jax.random.normal(xkey, (B, T, cfg["input_size"]), jnp.float32)

    fwd = jax.jit(lambda inp: vq_decoder_velocity_v2_forward(params, cfg, inp))
    vel = fwd(inputs)
    jax.block_until_ready(vel)

    assert vel.shape == (B, T * 2 ** cfg["n_up"], cfg["channels"][-1]), vel.shape
    assert bool(jnp.all(jnp.isfinite(vel)))
    print("KERNEL_OK")
</pallas_src>

<mosaic_0001>
module attributes {stable_mosaic.version = 11 : i64} {
  func.func @kernel(%arg0: i32, %arg1: memref<1x8x16xf32, #tpu.memory_space<vmem>>, %arg2: memref<48x32xf32, #tpu.memory_space<vmem>>, %arg3: memref<1x32xf32, #tpu.memory_space<vmem>>, %arg4: memref<4x96x32xf32, #tpu.memory_space<vmem>>, %arg5: memref<4x1x32xf32, #tpu.memory_space<vmem>>, %arg6: memref<96x64xf32, #tpu.memory_space<vmem>>, %arg7: memref<1x64xf32, #tpu.memory_space<vmem>>, %arg8: memref<1x8x64xf32, #tpu.memory_space<vmem>>) attributes {dimension_semantics = [#tpu.dimension_semantics<parallel>], iteration_bounds = array<i64: 2>, scalar_prefetch = 0 : i64, scratch_operands = 0 : i64, tpu.core_type = #tpu.core_type<tc>, window_params = [{transform_indices = @transform_0, window_bounds = array<i64: 1, 8, 16>}, {pipeline_mode = #tpu.pipeline_mode<synchronous>, transform_indices = @transform_1, window_bounds = array<i64: 48, 32>}, {pipeline_mode = #tpu.pipeline_mode<synchronous>, transform_indices = @transform_2, window_bounds = array<i64: 1, 32>}, {pipeline_mode = #tpu.pipeline_mode<synchronous>, transform_indices = @transform_3, window_bounds = array<i64: 4, 96, 32>}, {pipeline_mode = #tpu.pipeline_mode<synchronous>, transform_indices = @transform_4, window_bounds = array<i64: 4, 1, 32>}, {pipeline_mode = #tpu.pipeline_mode<synchronous>, transform_indices = @transform_5, window_bounds = array<i64: 96, 64>}, {pipeline_mode = #tpu.pipeline_mode<synchronous>, transform_indices = @transform_6, window_bounds = array<i64: 1, 64>}, {transform_indices = @transform_7, window_bounds = array<i64: 1, 8, 64>}]} {
    %c0 = arith.constant 0 : index
    %c0_0 = arith.constant 0 : index
    %c0_1 = arith.constant 0 : index
    %0 = vector.load %arg1[%c0, %c0_0, %c0_1] : memref<1x8x16xf32, #tpu.memory_space<vmem>>, vector<1x8x16xf32>
    %1 = vector.shape_cast %0 : vector<1x8x16xf32> to vector<8x16xf32>
    %c0_2 = arith.constant 0 : index
    %c0_3 = arith.constant 0 : index
    %2 = vector.load %arg2[%c0_2, %c0_3] : memref<48x32xf32, #tpu.memory_space<vmem>>, vector<48x32xf32>
    %c0_4 = arith.constant 0 : index
    %c0_5 = arith.constant 0 : index
    %3 = vector.load %arg3[%c0_4, %c0_5] : memref<1x32xf32, #tpu.memory_space<vmem>>, vector<1x32xf32>
    %4 = tpu.iota {dimensions = array<i32: 0>} : vector<8x16xi32>
    %cst = arith.constant 0.000000e+00 : f32
    %5 = vector.broadcast %cst : f32 to vector<8x16xf32>
    %c0_i32 = arith.constant 0 : i32
    %6 = vector.broadcast %c0_i32 : i32 to vector<8x16xi32>
    %7 = arith.cmpi eq, %4, %6 : vector<8x16xi32>
    %c1_i32 = arith.constant 1 : i32
    %8 = tpu.dynamic_rotate %1 by %c1_i32 dim 0 : vector<8x16xf32>, i32 -> vector<8x16xf32>
    %9 = arith.select %7, %5, %8 : vector<8x16xi1>, vector<8x16xf32>
    %c7_i32 = arith.constant 7 : i32
    %10 = vector.broadcast %c7_i32 : i32 to vector<8x16xi32>
    %11 = arith.cmpi eq, %4, %10 : vector<8x16xi32>
    %c7_i32_6 = arith.constant 7 : i32
    %12 = tpu.dynamic_rotate %1 by %c7_i32_6 dim 0 : vector<8x16xf32>, i32 -> vector<8x16xf32>
    %13 = arith.select %11, %5, %12 : vector<8x16xi1>, vector<8x16xf32>
    %14 = tpu.concatenate %9, %1, %13 in 1 : vector<8x16xf32>, vector<8x16xf32>, vector<8x16xf32> -> vector<8x48xf32>
    %cst_7 = arith.constant dense<0.000000e+00> : vector<8x32xf32>
    %15 = tpu.matmul %14, %2, %cst_7 {dimension_numbers = #tpu.dot_dimension_numbers<[1], [0], [0], [1], [0, 0, 1, 1], [], []>} : vector<8x48xf32>, vector<48x32xf32>, vector<8x32xf32> -> vector<8x32xf32>
    %16 = vector.broadcast %3 : vector<1x32xf32> to vector<8x32xf32>
    %17 = arith.addf %15, %16 : vector<8x32xf32>
    %c0_8 = arith.constant 0 : index
    %c0_9 = arith.constant 0 : index
    %c0_10 = arith.constant 0 : index
    %18 = vector.load %arg4[%c0_8, %c0_9, %c0_10] : memref<4x96x32xf32, #tpu.memory_space<vmem>>, vector<1x96x32xf32>
    %19 = vector.shape_cast %18 : vector<1x96x32xf32> to vector<96x32xf32>
    %c0_11 = arith.constant 0 : index
    %c0_12 = arith.constant 0 : index
    %c0_13 = arith.constant 0 : index
    %20 = vector.load %arg5[%c0_11, %c0_12, %c0_13] : memref<4x1x32xf32, #tpu.memory_space<vmem>>, vector<1x1x32xf32>
    %21 = vector.shape_cast %20 : vector<1x1x32xf32> to vector<1x32xf32>
    %22 = tpu.iota {dimensions = array<i32: 0>} : vector<8x32xi32>
    %cst_14 = arith.constant 0.000000e+00 : f32
    %23 = vector.broadcast %cst_14 : f32 to vector<8x32xf32>
    %c0_i32_15 = arith.constant 0 : i32
    %24 = vector.broadcast %c0_i32_15 : i32 to vector<8x32xi32>
    %25 = arith.cmpi eq, %22, %24 : vector<8x32xi32>
    %c1_i32_16 = arith.constant 1 : i32
    %26 = tpu.dynamic_rotate %17 by %c1_i32_16 dim 0 : vector<8x32xf32>, i32 -> vector<8x32xf32>
    %27 = arith.select %25, %23, %26 : vector<8x32xi1>, vector<8x32xf32>
    %c7_i32_17 = arith.constant 7 : i32
    %28 = vector.broadcast %c7_i32_17 : i32 to vector<8x32xi32>
    %29 = arith.cmpi eq, %22, %28 : vector<8x32xi32>
    %c7_i32_18 = arith.constant 7 : i32
    %30 = tpu.dynamic_rotate %17 by %c7_i32_18 dim 0 : vector<8x32xf32>, i32 -> vector<8x32xf32>
    %31 = arith.select %29, %23, %30 : vector<8x32xi1>, vector<8x32xf32>
    %32 = tpu.concatenate %27, %17, %31 in 1 : vector<8x32xf32>, vector<8x32xf32>, vector<8x32xf32> -> vector<8x96xf32>
    %cst_19 = arith.constant dense<0.000000e+00> : vector<8x32xf32>
    %33 = tpu.matmul %32, %19, %cst_19 {dimension_numbers = #tpu.dot_dimension_numbers<[1], [0], [0], [1], [0, 0, 1, 1], [], []>} : vector<8x96xf32>, vector<96x32xf32>, vector<8x32xf32> -> vector<8x32xf32>
    %34 = vector.broadcast %21 : vector<1x32xf32> to vector<8x32xf32>
    %35 = arith.addf %33, %34 : vector<8x32xf32>
    %cst_20 = arith.constant 0.000000e+00 : f32
    %36 = vector.broadcast %cst_20 : f32 to vector<8x32xf32>
    %37 = arith.cmpf ogt, %35, %36 : vector<8x32xf32>
    %cst_21 = arith.constant 2.000000e-01 : f32
    %38 = vector.broadcast %cst_21 : f32 to vector<8x32xf32>
    %39 = arith.mulf %38, %35 : vector<8x32xf32>
    %40 = arith.select %37, %35, %39 : vector<8x32xi1>, vector<8x32xf32>
    %c1 = arith.constant 1 : index
    %c0_22 = arith.constant 0 : index
    %c0_23 = arith.constant 0 : index
    %41 = vector.load %arg4[%c1, %c0_22, %c0_23] : memref<4x96x32xf32, #tpu.memory_space<vmem>>, vector<1x96x32xf32>
    %42 = vector.shape_cast %41 : vector<1x96x32xf32> to vector<96x32xf32>
    %c1_24 = arith.constant 1 : index
    %c0_25 = arith.constant 0 : index
    %c0_26 = arith.constant 0 : index
    %43 = vector.load %arg5[%c1_24, %c0_25, %c0_26] : memref<4x1x32xf32, #tpu.memory_space<vmem>>, vector<1x1x32xf32>
    %44 = vector.shape_cast %43 : vector<1x1x32xf32> to vector<1x32xf32>
    %45 = tpu.iota {dimensions = array<i32: 0>} : vector<8x32xi32>
    %cst_27 = arith.constant 0.000000e+00 : f32
    %46 = vector.broadcast %cst_27 : f32 to vector<8x32xf32>
    %c0_i32_28 = arith.constant 0 : i32
    %47 = vector.broadcast %c0_i32_28 : i32 to vector<8x32xi32>
    %48 = arith.cmpi eq, %45, %47 : vector<8x32xi32>
    %c1_i32_29 = arith.constant 1 : i32
    %49 = tpu.dynamic_rotate %40 by %c1_i32_29 dim 0 : vector<8x32xf32>, i32 -> vector<8x32xf32>
    %50 = arith.select %48, %46, %49 : vector<8x32xi1>, vector<8x32xf32>
    %c7_i32_30 = arith.constant 7 : i32
    %51 = vector.broadcast %c7_i32_30 : i32 to vector<8x32xi32>
    %52 = arith.cmpi eq, %45, %51 : vector<8x32xi32>
    %c7_i32_31 = arith.constant 7 : i32
    %53 = tpu.dynamic_rotate %40 by %c7_i32_31 dim 0 : vector<8x32xf32>, i32 -> vector<8x32xf32>
    %54 = arith.select %52, %46, %53 : vector<8x32xi1>, vector<8x32xf32>
    %55 = tpu.concatenate %50, %40, %54 in 1 : vector<8x32xf32>, vector<8x32xf32>, vector<8x32xf32> -> vector<8x96xf32>
    %cst_32 = arith.constant dense<0.000000e+00> : vector<8x32xf32>
    %56 = tpu.matmul %55, %42, %cst_32 {dimension_numbers = #tpu.dot_dimension_numbers<[1], [0], [0], [1], [0, 0, 1, 1], [], []>} : vector<8x96xf32>, vector<96x32xf32>, vector<8x32xf32> -> vector<8x32xf32>
    %57 = vector.broadcast %44 : vector<1x32xf32> to vector<8x32xf32>
    %58 = arith.addf %56, %57 : vector<8x32xf32>
    %59 = arith.addf %17, %58 : vector<8x32xf32>
    %c2 = arith.constant 2 : index
    %c0_33 = arith.constant 0 : index
    %c0_34 = arith.constant 0 : index
    %60 = vector.load %arg4[%c2, %c0_33, %c0_34] : memref<4x96x32xf32, #tpu.memory_space<vmem>>, vector<1x96x32xf32>
    %61 = vector.shape_cast %60 : vector<1x96x32xf32> to vector<96x32xf32>
    %c2_35 = arith.constant 2 : index
    %c0_36 = arith.constant 0 : index
    %c0_37 = arith.constant 0 : index
    %62 = vector.load %arg5[%c2_35, %c0_36, %c0_37] : memref<4x1x32xf32, #tpu.memory_space<vmem>>, vector<1x1x32xf32>
    %63 = vector.shape_cast %62 : vector<1x1x32xf32> to vector<1x32xf32>
    %64 = tpu.iota {dimensions = array<i32: 0>} : vector<8x32xi32>
    %cst_38 = arith.constant 0.000000e+00 : f32
    %65 = vector.broadcast %cst_38 : f32 to vector<8x32xf32>
    %c0_i32_39 = arith.constant 0 : i32
    %66 = vector.broadcast %c0_i32_39 : i32 to vector<8x32xi32>
    %67 = arith.cmpi eq, %64, %66 : vector<8x32xi32>
    %c1_i32_40 = arith.constant 1 : i32
    %68 = tpu.dynamic_rotate %59 by %c1_i32_40 dim 0 : vector<8x32xf32>, i32 -> vector<8x32xf32>
    %69 = arith.select %67, %65, %68 : vector<8x32xi1>, vector<8x32xf32>
    %c7_i32_41 = arith.constant 7 : i32
    %70 = vector.broadcast %c7_i32_41 : i32 to vector<8x32xi32>
    %71 = arith.cmpi eq, %64, %70 : vector<8x32xi32>
    %c7_i32_42 = arith.constant 7 : i32
    %72 = tpu.dynamic_rotate %59 by %c7_i32_42 dim 0 : vector<8x32xf32>, i32 -> vector<8x32xf32>
    %73 = arith.select %71, %65, %72 : vector<8x32xi1>, vector<8x32xf32>
    %74 = tpu.concatenate %69, %59, %73 in 1 : vector<8x32xf32>, vector<8x32xf32>, vector<8x32xf32> -> vector<8x96xf32>
    %cst_43 = arith.constant dense<0.000000e+00> : vector<8x32xf32>
    %75 = tpu.matmul %74, %61, %cst_43 {dimension_numbers = #tpu.dot_dimension_numbers<[1], [0], [0], [1], [0, 0, 1, 1], [], []>} : vector<8x96xf32>, vector<96x32xf32>, vector<8x32xf32> -> vector<8x32xf32>
    %76 = vector.broadcast %63 : vector<1x32xf32> to vector<8x32xf32>
    %77 = arith.addf %75, %76 : vector<8x32xf32>
    %cst_44 = arith.constant 0.000000e+00 : f32
    %78 = vector.broadcast %cst_44 : f32 to vector<8x32xf32>
    %79 = arith.cmpf ogt, %77, %78 : vector<8x32xf32>
    %cst_45 = arith.constant 2.000000e-01 : f32
    %80 = vector.broadcast %cst_45 : f32 to vector<8x32xf32>
    %81 = arith.mulf %80, %77 : vector<8x32xf32>
    %82 = arith.select %79, %77, %81 : vector<8x32xi1>, vector<8x32xf32>
    %c3 = arith.constant 3 : index
    %c0_46 = arith.constant 0 : index
    %c0_47 = arith.constant 0 : index
    %83 = vector.load %arg4[%c3, %c0_46, %c0_47] : memref<4x96x32xf32, #tpu.memory_space<vmem>>, vector<1x96x32xf32>
    %84 = vector.shape_cast %83 : vector<1x96x32xf32> to vector<96x32xf32>
    %c3_48 = arith.constant 3 : index
    %c0_49 = arith.constant 0 : index
    %c0_50 = arith.constant 0 : index
    %85 = vector.load %arg5[%c3_48, %c0_49, %c0_50] : memref<4x1x32xf32, #tpu.memory_space<vmem>>, vector<1x1x32xf32>
    %86 = vector.shape_cast %85 : vector<1x1x32xf32> to vector<1x32xf32>
    %87 = tpu.iota {dimensions = array<i32: 0>} : vector<8x32xi32>
    %cst_51 = arith.constant 0.000000e+00 : f32
    %88 = vector.broadcast %cst_51 : f32 to vector<8x32xf32>
    %c0_i32_52 = arith.constant 0 : i32
    %89 = vector.broadcast %c0_i32_52 : i32 to vector<8x32xi32>
    %90 = arith.cmpi eq, %87, %89 : vector<8x32xi32>
    %c1_i32_53 = arith.constant 1 : i32
    %91 = tpu.dynamic_rotate %82 by %c1_i32_53 dim 0 : vector<8x32xf32>, i32 -> vector<8x32xf32>
    %92 = arith.select %90, %88, %91 : vector<8x32xi1>, vector<8x32xf32>
    %c7_i32_54 = arith.constant 7 : i32
    %93 = vector.broadcast %c7_i32_54 : i32 to vector<8x32xi32>
    %94 = arith.cmpi eq, %87, %93 : vector<8x32xi32>
    %c7_i32_55 = arith.constant 7 : i32
    %95 = tpu.dynamic_rotate %82 by %c7_i32_55 dim 0 : vector<8x32xf32>, i32 -> vector<8x32xf32>
    %96 = arith.select %94, %88, %95 : vector<8x32xi1>, vector<8x32xf32>
    %97 = tpu.concatenate %92, %82, %96 in 1 : vector<8x32xf32>, vector<8x32xf32>, vector<8x32xf32> -> vector<8x96xf32>
    %cst_56 = arith.constant dense<0.000000e+00> : vector<8x32xf32>
    %98 = tpu.matmul %97, %84, %cst_56 {dimension_numbers = #tpu.dot_dimension_numbers<[1], [0], [0], [1], [0, 0, 1, 1], [], []>} : vector<8x96xf32>, vector<96x32xf32>, vector<8x32xf32> -> vector<8x32xf32>
    %99 = vector.broadcast %86 : vector<1x32xf32> to vector<8x32xf32>
    %100 = arith.addf %98, %99 : vector<8x32xf32>
    %101 = arith.addf %59, %100 : vector<8x32xf32>
    %102 = tpu.iota {dimensions = array<i32: 0>} : vector<8x32xi32>
    %cst_57 = arith.constant 0.000000e+00 : f32
    %103 = vector.broadcast %cst_57 : f32 to vector<8x32xf32>
    %c0_i32_58 = arith.constant 0 : i32
    %104 = vector.broadcast %c0_i32_58 : i32 to vector<8x32xi32>
    %105 = arith.cmpi eq, %102, %104 : vector<8x32xi32>
    %c1_i32_59 = arith.constant 1 : i32
    %106 = tpu.dynamic_rotate %101 by %c1_i32_59 dim 0 : vector<8x32xf32>, i32 -> vector<8x32xf32>
    %107 = arith.select %105, %103, %106 : vector<8x32xi1>, vector<8x32xf32>
    %c7_i32_60 = arith.constant 7 : i32
    %108 = vector.broadcast %c7_i32_60 : i32 to vector<8x32xi32>
    %109 = arith.cmpi eq, %102, %108 : vector<8x32xi32>
    %c7_i32_61 = arith.constant 7 : i32
    %110 = tpu.dynamic_rotate %101 by %c7_i32_61 dim 0 : vector<8x32xf32>, i32 -> vector<8x32xf32>
    %111 = arith.select %109, %103, %110 : vector<8x32xi1>, vector<8x32xf32>
    %112 = tpu.concatenate %107, %101, %111 in 1 : vector<8x32xf32>, vector<8x32xf32>, vector<8x32xf32> -> vector<8x96xf32>
    %c0_62 = arith.constant 0 : index
    %c0_63 = arith.constant 0 : index
    %113 = vector.load %arg6[%c0_62, %c0_63] : memref<96x64xf32, #tpu.memory_space<vmem>>, vector<96x64xf32>
    %cst_64 = arith.constant dense<0.000000e+00> : vector<8x64xf32>
    %114 = tpu.matmul %112, %113, %cst_64 {dimension_numbers = #tpu.dot_dimension_numbers<[1], [0], [0], [1], [0, 0, 1, 1], [], []>} : vector<8x96xf32>, vector<96x64xf32>, vector<8x64xf32> -> vector<8x64xf32>
    %c0_65 = arith.constant 0 : index
    %c0_66 = arith.constant 0 : index
    %115 = vector.load %arg7[%c0_65, %c0_66] : memref<1x64xf32, #tpu.memory_space<vmem>>, vector<1x64xf32>
    %116 = vector.broadcast %115 : vector<1x64xf32> to vector<8x64xf32>
    %117 = arith.addf %114, %116 : vector<8x64xf32>
    %cst_67 = arith.constant 0.000000e+00 : f32
    %118 = vector.broadcast %cst_67 : f32 to vector<8x64xf32>
    %119 = arith.cmpf ogt, %117, %118 : vector<8x64xf32>
    %cst_68 = arith.constant 2.000000e-01 : f32
    %120 = vector.broadcast %cst_68 : f32 to vector<8x64xf32>
    %121 = arith.mulf %120, %117 : vector<8x64xf32>
    %122 = arith.select %119, %117, %121 : vector<8x64xi1>, vector<8x64xf32>
    %c0_69 = arith.constant 0 : index
    %c0_70 = arith.constant 0 : index
    %c0_71 = arith.constant 0 : index
    %123 = vector.load %arg8[%c0_69, %c0_70, %c0_71] : memref<1x8x64xf32, #tpu.memory_space<vmem>>, vector<1x8x64xf32>
    %124 = vector.shape_cast %123 : vector<1x8x64xf32> to vector<8x64xf32>
    %125 = vector.shape_cast %122 : vector<8x64xf32> to vector<1x8x64xf32>
    tpu.vector_store %arg8[%c0_69, %c0_70, %c0_71], %125 {strides = array<i32>} : memref<1x8x64xf32, #tpu.memory_space<vmem>>, vector<1x8x64xf32>,
    return
  }
  func.func @transform_0(%arg0: i32) -> (i32, i32, i32) {
    %c0_i32 = arith.constant 0 : i32
    %c0_i32_0 = arith.constant 0 : i32
    %c0_i32_1 = arith.constant 0 : i32
    return %arg0, %c0_i32, %c0_i32_0 : i32, i32, i32
  }
  func.func @transform_1(%arg0: i32) -> (i32, i32) {
    %c0_i32 = arith.constant 0 : i32
    %c0_i32_0 = arith.constant 0 : i32
    %c0_i32_1 = arith.constant 0 : i32
    return %c0_i32, %c0_i32_0 : i32, i32
  }
  func.func @transform_2(%arg0: i32) -> (i32, i32) {
    %c0_i32 = arith.constant 0 : i32
    %c0_i32_0 = arith.constant 0 : i32
    %c0_i32_1 = arith.constant 0 : i32
    return %c0_i32, %c0_i32_0 : i32, i32
  }
  func.func @transform_3(%arg0: i32) -> (i32, i32, i32) {
    %c0_i32 = arith.constant 0 : i32
    %c0_i32_0 = arith.constant 0 : i32
    %c0_i32_1 = arith.constant 0 : i32
    %c0_i32_2 = arith.constant 0 : i32
    return %c0_i32, %c0_i32_0, %c0_i32_1 : i32, i32, i32
  }
  func.func @transform_4(%arg0: i32) -> (i32, i32, i32) {
    %c0_i32 = arith.constant 0 : i32
    %c0_i32_0 = arith.constant 0 : i32
    %c0_i32_1 = arith.constant 0 : i32
    %c0_i32_2 = arith.constant 0 : i32
    return %c0_i32, %c0_i32_0, %c0_i32_1 : i32, i32, i32
  }
  func.func @transform_5(%arg0: i32) -> (i32, i32) {
    %c0_i32 = arith.constant 0 : i32
    %c0_i32_0 = arith.constant 0 : i32
    %c0_i32_1 = arith.constant 0 : i32
    return %c0_i32, %c0_i32_0 : i32, i32
  }
  func.func @transform_6(%arg0: i32) -> (i32, i32) {
    %c0_i32 = arith.constant 0 : i32
    %c0_i32_0 = arith.constant 0 : i32
    %c0_i32_1 = arith.constant 0 : i32
    return %c0_i32, %c0_i32_0 : i32, i32
  }
  func.func @transform_7(%arg0: i32) -> (i32, i32, i32) {
    %c0_i32 = arith.constant 0 : i32
    %c0_i32_0 = arith.constant 0 : i32
    %c0_i32_1 = arith.constant 0 : i32
    return %arg0, %c0_i32, %c0_i32_0 : i32, i32, i32
  }
}

module attributes {stable_mosaic.version = 11 : i64} {
  func.func @kernel(%arg0: i32, %arg1: memref<1x16x32xf32, #tpu.memory_space<vmem>>, %arg2: memref<16x32xf32, #tpu.memory_space<vmem>>, %arg3: memref<2x32x96xf32, #tpu.memory_space<vmem>>, %arg4: memref<2x1x96xf32, #tpu.memory_space<vmem>>, %arg5: memref<2x32x32xf32, #tpu.memory_space<vmem>>, %arg6: memref<2x1x32xf32, #tpu.memory_space<vmem>>, %arg7: memref<2x4x1x32xf32, #tpu.memory_space<vmem>>, %arg8: memref<2x32x64xf32, #tpu.memory_space<vmem>>, %arg9: memref<2x1x64xf32, #tpu.memory_space<vmem>>, %arg10: memref<2x64x32xf32, #tpu.memory_space<vmem>>, %arg11: memref<2x1x32xf32, #tpu.memory_space<vmem>>, %arg12: memref<32x16xf32, #tpu.memory_space<vmem>>, %arg13: memref<1x16xf32, #tpu.memory_space<vmem>>, %arg14: memref<16x16xf32, #tpu.memory_space<vmem>>, %arg15: memref<1x16xf32, #tpu.memory_space<vmem>>, %arg16: memref<1x16x16xf32, #tpu.memory_space<vmem>>) attributes {dimension_semantics = [#tpu.dimension_semantics<parallel>], iteration_bounds = array<i64: 2>, scalar_prefetch = 0 : i64, scratch_operands = 0 : i64, tpu.core_type = #tpu.core_type<tc>, window_params = [{transform_indices = @transform_0, window_bounds = array<i64: 1, 16, 32>}, {pipeline_mode = #tpu.pipeline_mode<synchronous>, transform_indices = @transform_1, window_bounds = array<i64: 16, 32>}, {pipeline_mode = #tpu.pipeline_mode<synchronous>, transform_indices = @transform_2, window_bounds = array<i64: 2, 32, 96>}, {pipeline_mode = #tpu.pipeline_mode<synchronous>, transform_indices = @transform_3, window_bounds = array<i64: 2, 1, 96>}, {pipeline_mode = #tpu.pipeline_mode<synchronous>, transform_indices = @transform_4, window_bounds = array<i64: 2, 32, 32>}, {pipeline_mode = #tpu.pipeline_mode<synchronous>, transform_indices = @transform_5, window_bounds = array<i64: 2, 1, 32>}, {pipeline_mode = #tpu.pipeline_mode<synchronous>, transform_indices = @transform_6, window_bounds = array<i64: 2, 4, 1, 32>}, {pipeline_mode = #tpu.pipeline_mode<synchronous>, transform_indices = @transform_7, window_bounds = array<i64: 2, 32, 64>}, {pipeline_mode = #tpu.pipeline_mode<synchronous>, transform_indices = @transform_8, window_bounds = array<i64: 2, 1, 64>}, {pipeline_mode = #tpu.pipeline_mode<synchronous>, transform_indices = @transform_9, window_bounds = array<i64: 2, 64, 32>}, {pipeline_mode = #tpu.pipeline_mode<synchronous>, transform_indices = @transform_10, window_bounds = array<i64: 2, 1, 32>}, {pipeline_mode = #tpu.pipeline_mode<synchronous>, transform_indices = @transform_11, window_bounds = array<i64: 32, 16>}, {pipeline_mode = #tpu.pipeline_mode<synchronous>, transform_indices = @transform_12, window_bounds = array<i64: 1, 16>}, {pipeline_mode = #tpu.pipeline_mode<synchronous>, transform_indices = @transform_13, window_bounds = array<i64: 16, 16>}, {pipeline_mode = #tpu.pipeline_mode<synchronous>, transform_indices = @transform_14, window_bounds = array<i64: 1, 16>}, {transform_indices = @transform_15, window_bounds = array<i64: 1, 16, 16>}]} {
    %c0 = arith.constant 0 : index
    %c0_0 = arith.constant 0 : index
    %c0_1 = arith.constant 0 : index
    %0 = vector.load %arg1[%c0, %c0_0, %c0_1] : memref<1x16x32xf32, #tpu.memory_space<vmem>>, vector<1x16x32xf32>
    %1 = vector.shape_cast %0 : vector<1x16x32xf32> to vector<16x32xf32>
    %c0_2 = arith.constant 0 : index
    %c0_3 = arith.constant 0 : index
    %2 = vector.load %arg2[%c0_2, %c0_3] : memref<16x32xf32, #tpu.memory_space<vmem>>, vector<16x32xf32>
    %3 = arith.addf %1, %2 : vector<16x32xf32>
    %c0_4 = arith.constant 0 : index
    %c0_5 = arith.constant 0 : index
    %c0_6 = arith.constant 0 : index
    %4 = vector.load %arg3[%c0_4, %c0_5, %c0_6] : memref<2x32x96xf32, #tpu.memory_space<vmem>>, vector<1x32x96xf32>
    %5 = vector.shape_cast %4 : vector<1x32x96xf32> to vector<32x96xf32>
    %cst = arith.constant dense<0.000000e+00> : vector<16x96xf32>
    %6 = tpu.matmul %3, %5, %cst {dimension_numbers = #tpu.dot_dimension_numbers<[1], [0], [0], [1], [0, 0, 1, 1], [], []>} : vector<16x32xf32>, vector<32x96xf32>, vector<16x96xf32> -> vector<16x96xf32>
    %c0_7 = arith.constant 0 : index
    %c0_8 = arith.constant 0 : index
    %c0_9 = arith.constant 0 : index
    %7 = vector.load %arg4[%c0_7, %c0_8, %c0_9] : memref<2x1x96xf32, #tpu.memory_space<vmem>>, vector<1x1x96xf32>
    %8 = vector.shape_cast %7 : vector<1x1x96xf32> to vector<1x96xf32>
    %9 = vector.broadcast %8 : vector<1x96xf32> to vector<16x96xf32>
    %10 = arith.addf %6, %9 : vector<16x96xf32>
    %11 = vector.extract_strided_slice %10 {offsets = [0, 0], sizes = [16, 8], strides = [1, 1]} : vector<16x96xf32> to vector<16x8xf32>
    %12 = vector.extract_strided_slice %10 {offsets = [0, 32], sizes = [16, 8], strides = [1, 1]} : vector<16x96xf32> to vector<16x8xf32>
    %13 = vector.extract_strided_slice %10 {offsets = [0, 64], sizes = [16, 8], strides = [1, 1]} : vector<16x96xf32> to vector<16x8xf32>
    %cst_10 = arith.constant dense<0.000000e+00> : vector<16x16xf32>
    %14 = tpu.matmul %11, %12, %cst_10 {dimension_numbers = #tpu.dot_dimension_numbers<[1], [1], [0], [0], [0, 0, 1, 0], [], []>} : vector<16x8xf32>, vector<16x8xf32>, vector<16x16xf32> -> vector<16x16xf32>
    %cst_11 = arith.constant 0.353553385 : f32
    %15 = vector.broadcast %cst_11 : f32 to vector<16x16xf32>
    %16 = arith.mulf %14, %15 : vector<16x16xf32>
    %cst_12 = arith.constant dense<0xFF800000> : vector<16xf32>
    %17 = vector.multi_reduction <maximumf>, %16, %cst_12 [1] : vector<16x16xf32> to vector<16xf32>
    %18 = vector.shape_cast %17 : vector<16xf32> to vector<16x1xf32>
    %19 = vector.broadcast %18 : vector<16x1xf32> to vector<16x16xf32>
    %20 = arith.subf %16, %19 : vector<16x16xf32>
    %21 = math.exp %20 : vector<16x16xf32>
    %cst_13 = arith.constant dense<0.000000e+00> : vector<16xf32>
    %22 = vector.multi_reduction <add>, %21, %cst_13 [1] : vector<16x16xf32> to vector<16xf32>
    %23 = vector.shape_cast %22 : vector<16xf32> to vector<16x1xf32>
    %24 = tpu.reciprocal %23 {approx = true} : vector<16x1xf32> -> vector<16x1xf32>
    %25 = vector.broadcast %24 : vector<16x1xf32> to vector<16x16xf32>
    %26 = arith.mulf %21, %25 : vector<16x16xf32>
    %cst_14 = arith.constant dense<0.000000e+00> : vector<16x8xf32>
    %27 = tpu.matmul %26, %13, %cst_14 {dimension_numbers = #tpu.dot_dimension_numbers<[1], [0], [0], [1], [0, 0, 1, 1], [], []>} : vector<16x16xf32>, vector<16x8xf32>, vector<16x8xf32> -> vector<16x8xf32>
    %28 = vector.extract_strided_slice %10 {offsets = [0, 8], sizes = [16, 8], strides = [1, 1]} : vector<16x96xf32> to vector<16x8xf32>
    %29 = vector.extract_strided_slice %10 {offsets = [0, 40], sizes = [16, 8], strides = [1, 1]} : vector<16x96xf32> to vector<16x8xf32>
    %30 = vector.extract_strided_slice %10 {offsets = [0, 72], sizes = [16, 8], strides = [1, 1]} : vector<16x96xf32> to vector<16x8xf32>
    %cst_15 = arith.constant dense<0.000000e+00> : vector<16x16xf32>
    %31 = tpu.matmul %28, %29, %cst_15 {dimension_numbers = #tpu.dot_dimension_numbers<[1], [1], [0], [0], [0, 0, 1, 0], [], []>} : vector<16x8xf32>, vector<16x8xf32>, vector<16x16xf32> -> vector<16x16xf32>
    %cst_16 = arith.constant 0.353553385 : f32
    %32 = vector.broadcast %cst_16 : f32 to vector<16x16xf32>
    %33 = arith.mulf %31, %32 : vector<16x16xf32>
    %cst_17 = arith.constant dense<0xFF800000> : vector<16xf32>
    %34 = vector.multi_reduction <maximumf>, %33, %cst_17 [1] : vector<16x16xf32> to vector<16xf32>
    %35 = vector.shape_cast %34 : vector<16xf32> to vector<16x1xf32>
    %36 = vector.broadcast %35 : vector<16x1xf32> to vector<16x16xf32>
    %37 = arith.subf %33, %36 : vector<16x16xf32>
    %38 = math.exp %37 : vector<16x16xf32>
    %cst_18 = arith.constant dense<0.000000e+00> : vector<16xf32>
    %39 = vector.multi_reduction <add>, %38, %cst_18 [1] : vector<16x16xf32> to vector<16xf32>
    %40 = vector.shape_cast %39 : vector<16xf32> to vector<16x1xf32>
    %41 = tpu.reciprocal %40 {approx = true} : vector<16x1xf32> -> vector<16x1xf32>
    %42 = vector.broadcast %41 : vector<16x1xf32> to vector<16x16xf32>
    %43 = arith.mulf %38, %42 : vector<16x16xf32>
    %cst_19 = arith.constant dense<0.000000e+00> : vector<16x8xf32>
    %44 = tpu.matmul %43, %30, %cst_19 {dimension_numbers = #tpu.dot_dimension_numbers<[1], [0], [0], [1], [0, 0, 1, 1], [], []>} : vector<16x16xf32>, vector<16x8xf32>, vector<16x8xf32> -> vector<16x8xf32>
    %45 = vector.extract_strided_slice %10 {offsets = [0, 16], sizes = [16, 8], strides = [1, 1]} : vector<16x96xf32> to vector<16x8xf32>
    %46 = vector.extract_strided_slice %10 {offsets = [0, 48], sizes = [16, 8], strides = [1, 1]} : vector<16x96xf32> to vector<16x8xf32>
    %47 = vector.extract_strided_slice %10 {offsets = [0, 80], sizes = [16, 8], strides = [1, 1]} : vector<16x96xf32> to vector<16x8xf32>
    %cst_20 = arith.constant dense<0.000000e+00> : vector<16x16xf32>
    %48 = tpu.matmul %45, %46, %cst_20 {dimension_numbers = #tpu.dot_dimension_numbers<[1], [1], [0], [0], [0, 0, 1, 0], [], []>} : vector<16x8xf32>, vector<16x8xf32>, vector<16x16xf32> -> vector<16x16xf32>
    %cst_21 = arith.constant 0.353553385 : f32
    %49 = vector.broadcast %cst_21 : f32 to vector<16x16xf32>
    %50 = arith.mulf %48, %49 : vector<16x16xf32>
    %cst_22 = arith.constant dense<0xFF800000> : vector<16xf32>
    %51 = vector.multi_reduction <maximumf>, %50, %cst_22 [1] : vector<16x16xf32> to vector<16xf32>
    %52 = vector.shape_cast %51 : vector<16xf32> to vector<16x1xf32>
    %53 = vector.broadcast %52 : vector<16x1xf32> to vector<16x16xf32>
    %54 = arith.subf %50, %53 : vector<16x16xf32>
    %55 = math.exp %54 : vector<16x16xf32>
    %cst_23 = arith.constant dense<0.000000e+00> : vector<16xf32>
    %56 = vector.multi_reduction <add>, %55, %cst_23 [1] : vector<16x16xf32> to vector<16xf32>
    %57 = vector.shape_cast %56 : vector<16xf32> to vector<16x1xf32>
    %58 = tpu.reciprocal %57 {approx = true} : vector<16x1xf32> -> vector<16x1xf32>
    %59 = vector.broadcast %58 : vector<16x1xf32> to vector<16x16xf32>
    %60 = arith.mulf %55, %59 : vector<16x16xf32>
    %cst_24 = arith.constant dense<0.000000e+00> : vector<16x8xf32>
    %61 = tpu.matmul %60, %47, %cst_24 {dimension_numbers = #tpu.dot_dimension_numbers<[1], [0], [0], [1], [0, 0, 1, 1], [], []>} : vector<16x16xf32>, vector<16x8xf32>, vector<16x8xf32> -> vector<16x8xf32>
    %62 = vector.extract_strided_slice %10 {offsets = [0, 24], sizes = [16, 8], strides = [1, 1]} : vector<16x96xf32> to vector<16x8xf32>
    %63 = vector.extract_strided_slice %10 {offsets = [0, 56], sizes = [16, 8], strides = [1, 1]} : vector<16x96xf32> to vector<16x8xf32>
    %64 = vector.extract_strided_slice %10 {offsets = [0, 88], sizes = [16, 8], strides = [1, 1]} : vector<16x96xf32> to vector<16x8xf32>
    %cst_25 = arith.constant dense<0.000000e+00> : vector<16x16xf32>
    %65 = tpu.matmul %62, %63, %cst_25 {dimension_numbers = #tpu.dot_dimension_numbers<[1], [1], [0], [0], [0, 0, 1, 0], [], []>} : vector<16x8xf32>, vector<16x8xf32>, vector<16x16xf32> -> vector<16x16xf32>
    %cst_26 = arith.constant 0.353553385 : f32
    %66 = vector.broadcast %cst_26 : f32 to vector<16x16xf32>
    %67 = arith.mulf %65, %66 : vector<16x16xf32>
    %cst_27 = arith.constant dense<0xFF800000> : vector<16xf32>
    %68 = vector.multi_reduction <maximumf>, %67, %cst_27 [1] : vector<16x16xf32> to vector<16xf32>
    %69 = vector.shape_cast %68 : vector<16xf32> to vector<16x1xf32>
    %70 = vector.broadcast %69 : vector<16x1xf32> to vector<16x16xf32>
    %71 = arith.subf %67, %70 : vector<16x16xf32>
    %72 = math.exp %71 : vector<16x16xf32>
    %cst_28 = arith.constant dense<0.000000e+00> : vector<16xf32>
    %73 = vector.multi_reduction <add>, %72, %cst_28 [1] : vector<16x16xf32> to vector<16xf32>
    %74 = vector.shape_cast %73 : vector<16xf32> to vector<16x1xf32>
    %75 = tpu.reciprocal %74 {approx = true} : vector<16x1xf32> -> vector<16x1xf32>
    %76 = vector.broadcast %75 : vector<16x1xf32> to vector<16x16xf32>
    %77 = arith.mulf %72, %76 : vector<16x16xf32>
    %cst_29 = arith.constant dense<0.000000e+00> : vector<16x8xf32>
    %78 = tpu.matmul %77, %64, %cst_29 {dimension_numbers = #tpu.dot_dimension_numbers<[1], [0], [0], [1], [0, 0, 1, 1], [], []>} : vector<16x16xf32>, vector<16x8xf32>, vector<16x8xf32> -> vector<16x8xf32>
    %79 = tpu.concatenate %27, %44, %61, %78 in 1 : vector<16x8xf32>, vector<16x8xf32>, vector<16x8xf32>, vector<16x8xf32> -> vector<16x32xf32>
    %c0_30 = arith.constant 0 : index
    %c0_31 = arith.constant 0 : index
    %c0_32 = arith.constant 0 : index
    %80 = vector.load %arg5[%c0_30, %c0_31, %c0_32] : memref<2x32x32xf32, #tpu.memory_space<vmem>>, vector<1x32x32xf32>
    %81 = vector.shape_cast %80 : vector<1x32x32xf32> to vector<32x32xf32>
    %cst_33 = arith.constant dense<0.000000e+00> : vector<16x32xf32>
    %82 = tpu.matmul %79, %81, %cst_33 {dimension_numbers = #tpu.dot_dimension_numbers<[1], [0], [0], [1], [0, 0, 1, 1], [], []>} : vector<16x32xf32>, vector<32x32xf32>, vector<16x32xf32> -> vector<16x32xf32>
    %c0_34 = arith.constant 0 : index
    %c0_35 = arith.constant 0 : index
    %c0_36 = arith.constant 0 : index
    %83 = vector.load %arg6[%c0_34, %c0_35, %c0_36] : memref<2x1x32xf32, #tpu.memory_space<vmem>>, vector<1x1x32xf32>
    %84 = vector.shape_cast %83 : vector<1x1x32xf32> to vector<1x32xf32>
    %85 = vector.broadcast %84 : vector<1x32xf32> to vector<16x32xf32>
    %86 = arith.addf %82, %85 : vector<16x32xf32>
    %87 = arith.addf %3, %86 : vector<16x32xf32>
    %c0_37 = arith.constant 0 : index
    %c0_38 = arith.constant 0 : index
    %c0_39 = arith.constant 0 : index
    %c0_40 = arith.constant 0 : index
    %88 = vector.load %arg7[%c0_37, %c0_38, %c0_39, %c0_40] : memref<2x4x1x32xf32, #tpu.memory_space<vmem>>, vector<1x1x1x32xf32>
    %89 = vector.shape_cast %88 : vector<1x1x1x32xf32> to vector<1x32xf32>
    %c0_41 = arith.constant 0 : index
    %c1 = arith.constant 1 : index
    %c0_42 = arith.constant 0 : index
    %c0_43 = arith.constant 0 : index
    %90 = vector.load %arg7[%c0_41, %c1, %c0_42, %c0_43] : memref<2x4x1x32xf32, #tpu.memory_space<vmem>>, vector<1x1x1x32xf32>
    %91 = vector.shape_cast %90 : vector<1x1x1x32xf32> to vector<1x32xf32>
    %cst_44 = arith.constant dense<0.000000e+00> : vector<16xf32>
    %92 = vector.multi_reduction <add>, %87, %cst_44 [1] : vector<16x32xf32> to vector<16xf32>
    %93 = vector.shape_cast %92 : vector<16xf32> to vector<16x1xf32>
    %cst_45 = arith.constant 3.200000e+01 : f32
    %94 = vector.broadcast %cst_45 : f32 to vector<16x1xf32>
    %95 = arith.divf %93, %94 : vector<16x1xf32>
    %96 = vector.broadcast %95 : vector<16x1xf32> to vector<16x32xf32>
    %97 = arith.subf %87, %96 : vector<16x32xf32>
    %98 = vector.broadcast %95 : vector<16x1xf32> to vector<16x32xf32>
    %99 = arith.subf %87, %98 : vector<16x32xf32>
    %100 = arith.mulf %97, %99 : vector<16x32xf32>
    %cst_46 = arith.constant dense<0.000000e+00> : vector<16xf32>
    %101 = vector.multi_reduction <add>, %100, %cst_46 [1] : vector<16x32xf32> to vector<16xf32>
    %102 = vector.shape_cast %101 : vector<16xf32> to vector<16x1xf32>
    %cst_47 = arith.constant 3.200000e+01 : f32
    %103 = vector.broadcast %cst_47 : f32 to vector<16x1xf32>
    %104 = arith.divf %102, %103 : vector<16x1xf32>
    %105 = vector.broadcast %95 : vector<16x1xf32> to vector<16x32xf32>
    %106 = arith.subf %87, %105 : vector<16x32xf32>
    %cst_48 = arith.constant 9.99999974E-6 : f32
    %107 = vector.broadcast %cst_48 : f32 to vector<16x1xf32>
    %108 = arith.addf %104, %107 : vector<16x1xf32>
    %109 = math.rsqrt %108 : vector<16x1xf32>
    %110 = vector.broadcast %109 : vector<16x1xf32> to vector<16x32xf32>
    %111 = arith.mulf %106, %110 : vector<16x32xf32>
    %112 = vector.broadcast %89 : vector<1x32xf32> to vector<16x32xf32>
    %113 = arith.mulf %111, %112 : vector<16x32xf32>
    %114 = vector.broadcast %91 : vector<1x32xf32> to vector<16x32xf32>
    %115 = arith.addf %113, %114 : vector<16x32xf32>
    %c0_49 = arith.constant 0 : index
    %c0_50 = arith.constant 0 : index
    %c0_51 = arith.constant 0 : index
    %116 = vector.load %arg8[%c0_49, %c0_50, %c0_51] : memref<2x32x64xf32, #tpu.memory_space<vmem>>, vector<1x32x64xf32>
    %117 = vector.shape_cast %116 : vector<1x32x64xf32> to vector<32x64xf32>
    %cst_52 = arith.constant dense<0.000000e+00> : vector<16x64xf32>
    %118 = tpu.matmul %115, %117, %cst_52 {dimension_numbers = #tpu.dot_dimension_numbers<[1], [0], [0], [1], [0, 0, 1, 1], [], []>} : vector<16x32xf32>, vector<32x64xf32>, vector<16x64xf32> -> vector<16x64xf32>
    %c0_53 = arith.constant 0 : index
    %c0_54 = arith.constant 0 : index
    %c0_55 = arith.constant 0 : index
    %119 = vector.load %arg9[%c0_53, %c0_54, %c0_55] : memref<2x1x64xf32, #tpu.memory_space<vmem>>, vector<1x1x64xf32>
    %120 = vector.shape_cast %119 : vector<1x1x64xf32> to vector<1x64xf32>
    %121 = vector.broadcast %120 : vector<1x64xf32> to vector<16x64xf32>
    %122 = arith.addf %118, %121 : vector<16x64xf32>
    %cst_56 = arith.constant 5.000000e-01 : f32
    %123 = vector.broadcast %cst_56 : f32 to vector<16x64xf32>
    %124 = arith.mulf %123, %122 : vector<16x64xf32>
    %cst_57 = arith.constant 4.471500e-02 : f32
    %125 = vector.broadcast %cst_57 : f32 to vector<16x64xf32>
    %126 = arith.mulf %125, %122 : vector<16x64xf32>
    %127 = arith.mulf %126, %122 : vector<16x64xf32>
    %128 = arith.mulf %127, %122 : vector<16x64xf32>
    %129 = arith.addf %122, %128 : vector<16x64xf32>
    %cst_58 = arith.constant 0.797884583 : f32
    %130 = vector.broadcast %cst_58 : f32 to vector<16x64xf32>
    %131 = arith.mulf %130, %129 : vector<16x64xf32>
    %132 = math.tanh %131 : vector<16x64xf32>
    %cst_59 = arith.constant 1.000000e+00 : f32
    %133 = vector.broadcast %cst_59 : f32 to vector<16x64xf32>
    %134 = arith.addf %133, %132 : vector<16x64xf32>
    %135 = arith.mulf %124, %134 : vector<16x64xf32>
    %c0_60 = arith.constant 0 : index
    %c0_61 = arith.constant 0 : index
    %c0_62 = arith.constant 0 : index
    %136 = vector.load %arg10[%c0_60, %c0_61, %c0_62] : memref<2x64x32xf32, #tpu.memory_space<vmem>>, vector<1x64x32xf32>
    %137 = vector.shape_cast %136 : vector<1x64x32xf32> to vector<64x32xf32>
    %cst_63 = arith.constant dense<0.000000e+00> : vector<16x32xf32>
    %138 = tpu.matmul %135, %137, %cst_63 {dimension_numbers = #tpu.dot_dimension_numbers<[1], [0], [0], [1], [0, 0, 1, 1], [], []>} : vector<16x64xf32>, vector<64x32xf32>, vector<16x32xf32> -> vector<16x32xf32>
    %c0_64 = arith.constant 0 : index
    %c0_65 = arith.constant 0 : index
    %c0_66 = arith.constant 0 : index
    %139 = vector.load %arg11[%c0_64, %c0_65, %c0_66] : memref<2x1x32xf32, #tpu.memory_space<vmem>>, vector<1x1x32xf32>
    %140 = vector.shape_cast %139 : vector<1x1x32xf32> to vector<1x32xf32>
    %141 = vector.broadcast %140 : vector<1x32xf32> to vector<16x32xf32>
    %142 = arith.addf %138, %141 : vector<16x32xf32>
    %143 = arith.addf %115, %142 : vector<16x32xf32>
    %c0_67 = arith.constant 0 : index
    %c2 = arith.constant 2 : index
    %c0_68 = arith.constant 0 : index
    %c0_69 = arith.constant 0 : index
    %144 = vector.load %arg7[%c0_67, %c2, %c0_68, %c0_69] : memref<2x4x1x32xf32, #tpu.memory_space<vmem>>, vector<1x1x1x32xf32>
    %145 = vector.shape_cast %144 : vector<1x1x1x32xf32> to vector<1x32xf32>
    %c0_70 = arith.constant 0 : index
    %c3 = arith.constant 3 : index
    %c0_71 = arith.constant 0 : index
    %c0_72 = arith.constant 0 : index
    %146 = vector.load %arg7[%c0_70, %c3, %c0_71, %c0_72] : memref<2x4x1x32xf32, #tpu.memory_space<vmem>>, vector<1x1x1x32xf32>
    %147 = vector.shape_cast %146 : vector<1x1x1x32xf32> to vector<1x32xf32>
    %cst_73 = arith.constant dense<0.000000e+00> : vector<16xf32>
    %148 = vector.multi_reduction <add>, %143, %cst_73 [1] : vector<16x32xf32> to vector<16xf32>
    %149 = vector.shape_cast %148 : vector<16xf32> to vector<16x1xf32>
    %cst_74 = arith.constant 3.200000e+01 : f32
    %150 = vector.broadcast %cst_74 : f32 to vector<16x1xf32>
    %151 = arith.divf %149, %150 : vector<16x1xf32>
    %152 = vector.broadcast %151 : vector<16x1xf32> to vector<16x32xf32>
    %153 = arith.subf %143, %152 : vector<16x32xf32>
    %154 = vector.broadcast %151 : vector<16x1xf32> to vector<16x32xf32>
    %155 = arith.subf %143, %154 : vector<16x32xf32>
    %156 = arith.mulf %153, %155 : vector<16x32xf32>
    %cst_75 = arith.constant dense<0.000000e+00> : vector<16xf32>
    %157 = vector.multi_reduction <add>, %156, %cst_75 [1] : vector<16x32xf32> to vector<16xf32>
    %158 = vector.shape_cast %157 : vector<16xf32> to vector<16x1xf32>
    %cst_76 = arith.constant 3.200000e+01 : f32
    %159 = vector.broadcast %cst_76 : f32 to vector<16x1xf32>
    %160 = arith.divf %158, %159 : vector<16x1xf32>
    %161 = vector.broadcast %151 : vector<16x1xf32> to vector<16x32xf32>
    %162 = arith.subf %143, %161 : vector<16x32xf32>
    %cst_77 = arith.constant 9.99999974E-6 : f32
    %163 = vector.broadcast %cst_77 : f32 to vector<16x1xf32>
    %164 = arith.addf %160, %163 : vector<16x1xf32>
    %165 = math.rsqrt %164 : vector<16x1xf32>
    %166 = vector.broadcast %165 : vector<16x1xf32> to vector<16x32xf32>
    %167 = arith.mulf %162, %166 : vector<16x32xf32>
    %168 = vector.broadcast %145 : vector<1x32xf32> to vector<16x32xf32>
    %169 = arith.mulf %167, %168 : vector<16x32xf32>
    %170 = vector.broadcast %147 : vector<1x32xf32> to vector<16x32xf32>
    %171 = arith.addf %169, %170 : vector<16x32xf32>
    %c1_78 = arith.constant 1 : index
    %c0_79 = arith.constant 0 : index
    %c0_80 = arith.constant 0 : index
    %172 = vector.load %arg3[%c1_78, %c0_79, %c0_80] : memref<2x32x96xf32, #tpu.memory_space<vmem>>, vector<1x32x96xf32>
    %173 = vector.shape_cast %172 : vector<1x32x96xf32> to vector<32x96xf32>
    %cst_81 = arith.constant dense<0.000000e+00> : vector<16x96xf32>
    %174 = tpu.matmul %171, %173, %cst_81 {dimension_numbers = #tpu.dot_dimension_numbers<[1], [0], [0], [1], [0, 0, 1, 1], [], []>} : vector<16x32xf32>, vector<32x96xf32>, vector<16x96xf32> -> vector<16x96xf32>
    %c1_82 = arith.constant 1 : index
    %c0_83 = arith.constant 0 : index
    %c0_84 = arith.constant 0 : index
    %175 = vector.load %arg4[%c1_82, %c0_83, %c0_84] : memref<2x1x96xf32, #tpu.memory_space<vmem>>, vector<1x1x96xf32>
    %176 = vector.shape_cast %175 : vector<1x1x96xf32> to vector<1x96xf32>
    %177 = vector.broadcast %176 : vector<1x96xf32> to vector<16x96xf32>
    %178 = arith.addf %174, %177 : vector<16x96xf32>
    %179 = vector.extract_strided_slice %178 {offsets = [0, 0], sizes = [16, 8], strides = [1, 1]} : vector<16x96xf32> to vector<16x8xf32>
    %180 = vector.extract_strided_slice %178 {offsets = [0, 32], sizes = [16, 8], strides = [1, 1]} : vector<16x96xf32> to vector<16x8xf32>
    %181 = vector.extract_strided_slice %178 {offsets = [0, 64], sizes = [16, 8], strides = [1, 1]} : vector<16x96xf32> to vector<16x8xf32>
    %cst_85 = arith.constant dense<0.000000e+00> : vector<16x16xf32>
    %182 = tpu.matmul %179, %180, %cst_85 {dimension_numbers = #tpu.dot_dimension_numbers<[1], [1], [0], [0], [0, 0, 1, 0], [], []>} : vector<16x8xf32>, vector<16x8xf32>, vector<16x16xf32> -> vector<16x16xf32>
    %cst_86 = arith.constant 0.353553385 : f32
    %183 = vector.broadcast %cst_86 : f32 to vector<16x16xf32>
    %184 = arith.mulf %182, %183 : vector<16x16xf32>
    %cst_87 = arith.constant dense<0xFF800000> : vector<16xf32>
    %185 = vector.multi_reduction <maximumf>, %184, %cst_87 [1] : vector<16x16xf32> to vector<16xf32>
    %186 = vector.shape_cast %185 : vector<16xf32> to vector<16x1xf32>
    %187 = vector.broadcast %186 : vector<16x1xf32> to vector<16x16xf32>
    %188 = arith.subf %184, %187 : vector<16x16xf32>
    %189 = math.exp %188 : vector<16x16xf32>
    %cst_88 = arith.constant dense<0.000000e+00> : vector<16xf32>
    %190 = vector.multi_reduction <add>, %189, %cst_88 [1] : vector<16x16xf32> to vector<16xf32>
    %191 = vector.shape_cast %190 : vector<16xf32> to vector<16x1xf32>
    %192 = tpu.reciprocal %191 {approx = true} : vector<16x1xf32> -> vector<16x1xf32>
    %193 = vector.broadcast %192 : vector<16x1xf32> to vector<16x16xf32>
    %194 = arith.mulf %189, %193 : vector<16x16xf32>
    %cst_89 = arith.constant dense<0.000000e+00> : vector<16x8xf32>
    %195 = tpu.matmul %194, %181, %cst_89 {dimension_numbers = #tpu.dot_dimension_numbers<[1], [0], [0], [1], [0, 0, 1, 1], [], []>} : vector<16x16xf32>, vector<16x8xf32>, vector<16x8xf32> -> vector<16x8xf32>
    %196 = vector.extract_strided_slice %178 {offsets = [0, 8], sizes = [16, 8], strides = [1, 1]} : vector<16x96xf32> to vector<16x8xf32>
    %197 = vector.extract_strided_slice %178 {offsets = [0, 40], sizes = [16, 8], strides = [1, 1]} : vector<16x96xf32> to vector<16x8xf32>
    %198 = vector.extract_strided_slice %178 {offsets = [0, 72], sizes = [16, 8], strides = [1, 1]} : vector<16x96xf32> to vector<16x8xf32>
    %cst_90 = arith.constant dense<0.000000e+00> : vector<16x16xf32>
    %199 = tpu.matmul %196, %197, %cst_90 {dimension_numbers = #tpu.dot_dimension_numbers<[1], [1], [0], [0], [0, 0, 1, 0], [], []>} : vector<16x8xf32>, vector<16x8xf32>, vector<16x16xf32> -> vector<16x16xf32>
    %cst_91 = arith.constant 0.353553385 : f32
    %200 = vector.broadcast %cst_91 : f32 to vector<16x16xf32>
    %201 = arith.mulf %199, %200 : vector<16x16xf32>
    %cst_92 = arith.constant dense<0xFF800000> : vector<16xf32>
    %202 = vector.multi_reduction <maximumf>, %201, %cst_92 [1] : vector<16x16xf32> to vector<16xf32>
    %203 = vector.shape_cast %202 : vector<16xf32> to vector<16x1xf32>
    %204 = vector.broadcast %203 : vector<16x1xf32> to vector<16x16xf32>
    %205 = arith.subf %201, %204 : vector<16x16xf32>
    %206 = math.exp %205 : vector<16x16xf32>
    %cst_93 = arith.constant dense<0.000000e+00> : vector<16xf32>
    %207 = vector.multi_reduction <add>, %206, %cst_93 [1] : vector<16x16xf32> to vector<16xf32>
    %208 = vector.shape_cast %207 : vector<16xf32> to vector<16x1xf32>
    %209 = tpu.reciprocal %208 {approx = true} : vector<16x1xf32> -> vector<16x1xf32>
    %210 = vector.broadcast %209 : vector<16x1xf32> to vector<16x16xf32>
    %211 = arith.mulf %206, %210 : vector<16x16xf32>
    %cst_94 = arith.constant dense<0.000000e+00> : vector<16x8xf32>
    %212 = tpu.matmul %211, %198, %cst_94 {dimension_numbers = #tpu.dot_dimension_numbers<[1], [0], [0], [1], [0, 0, 1, 1], [], []>} : vector<16x16xf32>, vector<16x8xf32>, vector<16x8xf32> -> vector<16x8xf32>
    %213 = vector.extract_strided_slice %178 {offsets = [0, 16], sizes = [16, 8], strides = [1, 1]} : vector<16x96xf32> to vector<16x8xf32>
    %214 = vector.extract_strided_slice %178 {offsets = [0, 48], sizes = [16, 8], strides = [1, 1]} : vector<16x96xf32> to vector<16x8xf32>
    %215 = vector.extract_strided_slice %178 {offsets = [0, 80], sizes = [16, 8], strides = [1, 1]} : vector<16x96xf32> to vector<16x8xf32>
    %cst_95 = arith.constant dense<0.000000e+00> : vector<16x16xf32>
    %216 = tpu.matmul %213, %214, %cst_95 {dimension_numbers = #tpu.dot_dimension_numbers<[1], [1], [0], [0], [0, 0, 1, 0], [], []>} : vector<16x8xf32>, vector<16x8xf32>, vector<16x16xf32> -> vector<16x16xf32>
    %cst_96 = arith.constant 0.353553385 : f32
    %217 = vector.broadcast %cst_96 : f32 to vector<16x16xf32>
    %218 = arith.mulf %216, %217 : vector<16x16xf32>
    %cst_97 = arith.constant dense<0xFF800000> : vector<16xf32>
    %219 = vector.multi_reduction <maximumf>, %218, %cst_97 [1] : vector<16x16xf32> to vector<16xf32>
    %220 = vector.shape_cast %219 : vector<16xf32> to vector<16x1xf32>
    %221 = vector.broadcast %220 : vector<16x1xf32> to vector<16x16xf32>
    %222 = arith.subf %218, %221 : vector<16x16xf32>
    %223 = math.exp %222 : vector<16x16xf32>
    %cst_98 = arith.constant dense<0.000000e+00> : vector<16xf32>
    %224 = vector.multi_reduction <add>, %223, %cst_98 [1] : vector<16x16xf32> to vector<16xf32>
    %225 = vector.shape_cast %224 : vector<16xf32> to vector<16x1xf32>
    %226 = tpu.reciprocal %225 {approx = true} : vector<16x1xf32> -> vector<16x1xf32>
    %227 = vector.broadcast %226 : vector<16x1xf32> to vector<16x16xf32>
    %228 = arith.mulf %223, %227 : vector<16x16xf32>
    %cst_99 = arith.constant dense<0.000000e+00> : vector<16x8xf32>
    %229 = tpu.matmul %228, %215, %cst_99 {dimension_numbers = #tpu.dot_dimension_numbers<[1], [0], [0], [1], [0, 0, 1, 1], [], []>} : vector<16x16xf32>, vector<16x8xf32>, vector<16x8xf32> -> vector<16x8xf32>
    %230 = vector.extract_strided_slice %178 {offsets = [0, 24], sizes = [16, 8], strides = [1, 1]} : vector<16x96xf32> to vector<16x8xf32>
    %231 = vector.extract_strided_slice %178 {offsets = [0, 56], sizes = [16, 8], strides = [1, 1]} : vector<16x96xf32> to vector<16x8xf32>
    %232 = vector.extract_strided_slice %178 {offsets = [0, 88], sizes = [16, 8], strides = [1, 1]} : vector<16x96xf32> to vector<16x8xf32>
    %cst_100 = arith.constant dense<0.000000e+00> : vector<16x16xf32>
    %233 = tpu.matmul %230, %231, %cst_100 {dimension_numbers = #tpu.dot_dimension_numbers<[1], [1], [0], [0], [0, 0, 1, 0], [], []>} : vector<16x8xf32>, vector<16x8xf32>, vector<16x16xf32> -> vector<16x16xf32>
    %cst_101 = arith.constant 0.353553385 : f32
    %234 = vector.broadcast %cst_101 : f32 to vector<16x16xf32>
    %235 = arith.mulf %233, %234 : vector<16x16xf32>
    %cst_102 = arith.constant dense<0xFF800000> : vector<16xf32>
    %236 = vector.multi_reduction <maximumf>, %235, %cst_102 [1] : vector<16x16xf32> to vector<16xf32>
    %237 = vector.shape_cast %236 : vector<16xf32> to vector<16x1xf32>
    %238 = vector.broadcast %237 : vector<16x1xf32> to vector<16x16xf32>
    %239 = arith.subf %235, %238 : vector<16x16xf32>
    %240 = math.exp %239 : vector<16x16xf32>
    %cst_103 = arith.constant dense<0.000000e+00> : vector<16xf32>
    %241 = vector.multi_reduction <add>, %240, %cst_103 [1] : vector<16x16xf32> to vector<16xf32>
    %242 = vector.shape_cast %241 : vector<16xf32> to vector<16x1xf32>
    %243 = tpu.reciprocal %242 {approx = true} : vector<16x1xf32> -> vector<16x1xf32>
    %244 = vector.broadcast %243 : vector<16x1xf32> to vector<16x16xf32>
    %245 = arith.mulf %240, %244 : vector<16x16xf32>
    %cst_104 = arith.constant dense<0.000000e+00> : vector<16x8xf32>
    %246 = tpu.matmul %245, %232, %cst_104 {dimension_numbers = #tpu.dot_dimension_numbers<[1], [0], [0], [1], [0, 0, 1, 1], [], []>} : vector<16x16xf32>, vector<16x8xf32>, vector<16x8xf32> -> vector<16x8xf32>
    %247 = tpu.concatenate %195, %212, %229, %246 in 1 : vector<16x8xf32>, vector<16x8xf32>, vector<16x8xf32>, vector<16x8xf32> -> vector<16x32xf32>
    %c1_105 = arith.constant 1 : index
    %c0_106 = arith.constant 0 : index
    %c0_107 = arith.constant 0 : index
    %248 = vector.load %arg5[%c1_105, %c0_106, %c0_107] : memref<2x32x32xf32, #tpu.memory_space<vmem>>, vector<1x32x32xf32>
    %249 = vector.shape_cast %248 : vector<1x32x32xf32> to vector<32x32xf32>
    %cst_108 = arith.constant dense<0.000000e+00> : vector<16x32xf32>
    %250 = tpu.matmul %247, %249, %cst_108 {dimension_numbers = #tpu.dot_dimension_numbers<[1], [0], [0], [1], [0, 0, 1, 1], [], []>} : vector<16x32xf32>, vector<32x32xf32>, vector<16x32xf32> -> vector<16x32xf32>
    %c1_109 = arith.constant 1 : index
    %c0_110 = arith.constant 0 : index
    %c0_111 = arith.constant 0 : index
    %251 = vector.load %arg6[%c1_109, %c0_110, %c0_111] : memref<2x1x32xf32, #tpu.memory_space<vmem>>, vector<1x1x32xf32>
    %252 = vector.shape_cast %251 : vector<1x1x32xf32> to vector<1x32xf32>
    %253 = vector.broadcast %252 : vector<1x32xf32> to vector<16x32xf32>
    %254 = arith.addf %250, %253 : vector<16x32xf32>
    %255 = arith.addf %171, %254 : vector<16x32xf32>
    %c1_112 = arith.constant 1 : index
    %c0_113 = arith.constant 0 : index
    %c0_114 = arith.constant 0 : index
    %c0_115 = arith.constant 0 : index
    %256 = vector.load %arg7[%c1_112, %c0_113, %c0_114, %c0_115] : memref<2x4x1x32xf32, #tpu.memory_space<vmem>>, vector<1x1x1x32xf32>
    %257 = vector.shape_cast %256 : vector<1x1x1x32xf32> to vector<1x32xf32>
    %c1_116 = arith.constant 1 : index
    %c1_117 = arith.constant 1 : index
    %c0_118 = arith.constant 0 : index
    %c0_119 = arith.constant 0 : index
    %258 = vector.load %arg7[%c1_116, %c1_117, %c0_118, %c0_119] : memref<2x4x1x32xf32, #tpu.memory_space<vmem>>, vector<1x1x1x32xf32>
    %259 = vector.shape_cast %258 : vector<1x1x1x32xf32> to vector<1x32xf32>
    %cst_120 = arith.constant dense<0.000000e+00> : vector<16xf32>
    %260 = vector.multi_reduction <add>, %255, %cst_120 [1] : vector<16x32xf32> to vector<16xf32>
    %261 = vector.shape_cast %260 : vector<16xf32> to vector<16x1xf32>
    %cst_121 = arith.constant 3.200000e+01 : f32
    %262 = vector.broadcast %cst_121 : f32 to vector<16x1xf32>
    %263 = arith.divf %261, %262 : vector<16x1xf32>
    %264 = vector.broadcast %263 : vector<16x1xf32> to vector<16x32xf32>
    %265 = arith.subf %255, %264 : vector<16x32xf32>
    %266 = vector.broadcast %263 : vector<16x1xf32> to vector<16x32xf32>
    %267 = arith.subf %255, %266 : vector<16x32xf32>
    %268 = arith.mulf %265, %267 : vector<16x32xf32>
    %cst_122 = arith.constant dense<0.000000e+00> : vector<16xf32>
    %269 = vector.multi_reduction <add>, %268, %cst_122 [1] : vector<16x32xf32> to vector<16xf32>
    %270 = vector.shape_cast %269 : vector<16xf32> to vector<16x1xf32>
    %cst_123 = arith.constant 3.200000e+01 : f32
    %271 = vector.broadcast %cst_123 : f32 to vector<16x1xf32>
    %272 = arith.divf %270, %271 : vector<16x1xf32>
    %273 = vector.broadcast %263 : vector<16x1xf32> to vector<16x32xf32>
    %274 = arith.subf %255, %273 : vector<16x32xf32>
    %cst_124 = arith.constant 9.99999974E-6 : f32
    %275 = vector.broadcast %cst_124 : f32 to vector<16x1xf32>
    %276 = arith.addf %272, %275 : vector<16x1xf32>
    %277 = math.rsqrt %276 : vector<16x1xf32>
    %278 = vector.broadcast %277 : vector<16x1xf32> to vector<16x32xf32>
    %279 = arith.mulf %274, %278 : vector<16x32xf32>
    %280 = vector.broadcast %257 : vector<1x32xf32> to vector<16x32xf32>
    %281 = arith.mulf %279, %280 : vector<16x32xf32>
    %282 = vector.broadcast %259 : vector<1x32xf32> to vector<16x32xf32>
    %283 = arith.addf %281, %282 : vector<16x32xf32>
    %c1_125 = arith.constant 1 : index
    %c0_126 = arith.constant 0 : index
    %c0_127 = arith.constant 0 : index
    %284 = vector.load %arg8[%c1_125, %c0_126, %c0_127] : memref<2x32x64xf32, #tpu.memory_space<vmem>>, vector<1x32x64xf32>
    %285 = vector.shape_cast %284 : vector<1x32x64xf32> to vector<32x64xf32>
    %cst_128 = arith.constant dense<0.000000e+00> : vector<16x64xf32>
    %286 = tpu.matmul %283, %285, %cst_128 {dimension_numbers = #tpu.dot_dimension_numbers<[1], [0], [0], [1], [0, 0, 1, 1], [], []>} : vector<16x32xf32>, vector<32x64xf32>, vector<16x64xf32> -> vector<16x64xf32>
    %c1_129 = arith.constant 1 : index
    %c0_130 = arith.constant 0 : index
    %c0_131 = arith.constant 0 : index
    %287 = vector.load %arg9[%c1_129, %c0_130, %c0_131] : memref<2x1x64xf32, #tpu.memory_space<vmem>>, vector<1x1x64xf32>
    %288 = vector.shape_cast %287 : vector<1x1x64xf32> to vector<1x64xf32>
    %289 = vector.broadcast %288 : vector<1x64xf32> to vector<16x64xf32>
    %290 = arith.addf %286, %289 : vector<16x64xf32>
    %cst_132 = arith.constant 5.000000e-01 : f32
    %291 = vector.broadcast %cst_132 : f32 to vector<16x64xf32>
    %292 = arith.mulf %291, %290 : vector<16x64xf32>
    %cst_133 = arith.constant 4.471500e-02 : f32
    %293 = vector.broadcast %cst_133 : f32 to vector<16x64xf32>
    %294 = arith.mulf %293, %290 : vector<16x64xf32>
    %295 = arith.mulf %294, %290 : vector<16x64xf32>
    %296 = arith.mulf %295, %290 : vector<16x64xf32>
    %297 = arith.addf %290, %296 : vector<16x64xf32>
    %cst_134 = arith.constant 0.797884583 : f32
    %298 = vector.broadcast %cst_134 : f32 to vector<16x64xf32>
    %299 = arith.mulf %298, %297 : vector<16x64xf32>
    %300 = math.tanh %299 : vector<16x64xf32>
    %cst_135 = arith.constant 1.000000e+00 : f32
    %301 = vector.broadcast %cst_135 : f32 to vector<16x64xf32>
    %302 = arith.addf %301, %300 : vector<16x64xf32>
    %303 = arith.mulf %292, %302 : vector<16x64xf32>
    %c1_136 = arith.constant 1 : index
    %c0_137 = arith.constant 0 : index
    %c0_138 = arith.constant 0 : index
    %304 = vector.load %arg10[%c1_136, %c0_137, %c0_138] : memref<2x64x32xf32, #tpu.memory_space<vmem>>, vector<1x64x32xf32>
    %305 = vector.shape_cast %304 : vector<1x64x32xf32> to vector<64x32xf32>
    %cst_139 = arith.constant dense<0.000000e+00> : vector<16x32xf32>
    %306 = tpu.matmul %303, %305, %cst_139 {dimension_numbers = #tpu.dot_dimension_numbers<[1], [0], [0], [1], [0, 0, 1, 1], [], []>} : vector<16x64xf32>, vector<64x32xf32>, vector<16x32xf32> -> vector<16x32xf32>
    %c1_140 = arith.constant 1 : index
    %c0_141 = arith.constant 0 : index
    %c0_142 = arith.constant 0 : index
    %307 = vector.load %arg11[%c1_140, %c0_141, %c0_142] : memref<2x1x32xf32, #tpu.memory_space<vmem>>, vector<1x1x32xf32>
    %308 = vector.shape_cast %307 : vector<1x1x32xf32> to vector<1x32xf32>
    %309 = vector.broadcast %308 : vector<1x32xf32> to vector<16x32xf32>
    %310 = arith.addf %306, %309 : vector<16x32xf32>
    %311 = arith.addf %283, %310 : vector<16x32xf32>
    %c1_143 = arith.constant 1 : index
    %c2_144 = arith.constant 2 : index
    %c0_145 = arith.constant 0 : index
    %c0_146 = arith.constant 0 : index
    %312 = vector.load %arg7[%c1_143, %c2_144, %c0_145, %c0_146] : memref<2x4x1x32xf32, #tpu.memory_space<vmem>>, vector<1x1x1x32xf32>
    %313 = vector.shape_cast %312 : vector<1x1x1x32xf32> to vector<1x32xf32>
    %c1_147 = arith.constant 1 : index
    %c3_148 = arith.constant 3 : index
    %c0_149 = arith.constant 0 : index
    %c0_150 = arith.constant 0 : index
    %314 = vector.load %arg7[%c1_147, %c3_148, %c0_149, %c0_150] : memref<2x4x1x32xf32, #tpu.memory_space<vmem>>, vector<1x1x1x32xf32>
    %315 = vector.shape_cast %314 : vector<1x1x1x32xf32> to vector<1x32xf32>
    %cst_151 = arith.constant dense<0.000000e+00> : vector<16xf32>
    %316 = vector.multi_reduction <add>, %311, %cst_151 [1] : vector<16x32xf32> to vector<16xf32>
    %317 = vector.shape_cast %316 : vector<16xf32> to vector<16x1xf32>
    %cst_152 = arith.constant 3.200000e+01 : f32
    %318 = vector.broadcast %cst_152 : f32 to vector<16x1xf32>
    %319 = arith.divf %317, %318 : vector<16x1xf32>
    %320 = vector.broadcast %319 : vector<16x1xf32> to vector<16x32xf32>
    %321 = arith.subf %311, %320 : vector<16x32xf32>
    %322 = vector.broadcast %319 : vector<16x1xf32> to vector<16x32xf32>
    %323 = arith.subf %311, %322 : vector<16x32xf32>
    %324 = arith.mulf %321, %323 : vector<16x32xf32>
    %cst_153 = arith.constant dense<0.000000e+00> : vector<16xf32>
    %325 = vector.multi_reduction <add>, %324, %cst_153 [1] : vector<16x32xf32> to vector<16xf32>
    %326 = vector.shape_cast %325 : vector<16xf32> to vector<16x1xf32>
    %cst_154 = arith.constant 3.200000e+01 : f32
    %327 = vector.broadcast %cst_154 : f32 to vector<16x1xf32>
    %328 = arith.divf %326, %327 : vector<16x1xf32>
    %329 = vector.broadcast %319 : vector<16x1xf32> to vector<16x32xf32>
    %330 = arith.subf %311, %329 : vector<16x32xf32>
    %cst_155 = arith.constant 9.99999974E-6 : f32
    %331 = vector.broadcast %cst_155 : f32 to vector<16x1xf32>
    %332 = arith.addf %328, %331 : vector<16x1xf32>
    %333 = math.rsqrt %332 : vector<16x1xf32>
    %334 = vector.broadcast %333 : vector<16x1xf32> to vector<16x32xf32>
    %335 = arith.mulf %330, %334 : vector<16x32xf32>
    %336 = vector.broadcast %313 : vector<1x32xf32> to vector<16x32xf32>
    %337 = arith.mulf %335, %336 : vector<16x32xf32>
    %338 = vector.broadcast %315 : vector<1x32xf32> to vector<16x32xf32>
    %339 = arith.addf %337, %338 : vector<16x32xf32>
    %c0_156 = arith.constant 0 : index
    %c0_157 = arith.constant 0 : index
    %340 = vector.load %arg12[%c0_156, %c0_157] : memref<32x16xf32, #tpu.memory_space<vmem>>, vector<32x16xf32>
    %cst_158 = arith.constant dense<0.000000e+00> : vector<16x16xf32>
    %341 = tpu.matmul %339, %340, %cst_158 {dimension_numbers = #tpu.dot_dimension_numbers<[1], [0], [0], [1], [0, 0, 1, 1], [], []>} : vector<16x32xf32>, vector<32x16xf32>, vector<16x16xf32> -> vector<16x16xf32>
    %c0_159 = arith.constant 0 : index
    %c0_160 = arith.constant 0 : index
    %342 = vector.load %arg13[%c0_159, %c0_160] : memref<1x16xf32, #tpu.memory_space<vmem>>, vector<1x16xf32>
    %343 = vector.broadcast %342 : vector<1x16xf32> to vector<16x16xf32>
    %344 = arith.addf %341, %343 : vector<16x16xf32>
    %c0_161 = arith.constant 0 : index
    %c0_162 = arith.constant 0 : index
    %345 = vector.load %arg14[%c0_161, %c0_162] : memref<16x16xf32, #tpu.memory_space<vmem>>, vector<16x16xf32>
    %cst_163 = arith.constant dense<0.000000e+00> : vector<16x16xf32>
    %346 = tpu.matmul %344, %345, %cst_163 {dimension_numbers = #tpu.dot_dimension_numbers<[1], [0], [0], [1], [0, 0, 1, 1], [], []>} : vector<16x16xf32>, vector<16x16xf32>, vector<16x16xf32> -> vector<16x16xf32>
    %c0_164 = arith.constant 0 : index
    %c0_165 = arith.constant 0 : index
    %347 = vector.load %arg15[%c0_164, %c0_165] : memref<1x16xf32, #tpu.memory_space<vmem>>, vector<1x16xf32>
    %348 = vector.broadcast %347 : vector<1x16xf32> to vector<16x16xf32>
    %349 = arith.addf %346, %348 : vector<16x16xf32>
    %c0_166 = arith.constant 0 : index
    %c0_167 = arith.constant 0 : index
    %c0_168 = arith.constant 0 : index
    %350 = vector.load %arg16[%c0_166, %c0_167, %c0_168] : memref<1x16x16xf32, #tpu.memory_space<vmem>>, vector<1x16x16xf32>
    %351 = vector.shape_cast %350 : vector<1x16x16xf32> to vector<16x16xf32>
    %352 = vector.shape_cast %349 : vector<16x16xf32> to vector<1x16x16xf32>
    tpu.vector_store %arg16[%c0_166, %c0_167, %c0_168], %352 {strides = array<i32>} : memref<1x16x16xf32, #tpu.memory_space<vmem>>, vector<1x16x16xf32>,
    return
  }
  func.func @transform_0(%arg0: i32) -> (i32, i32, i32) {
    %c0_i32 = arith.constant 0 : i32
    %c0_i32_0 = arith.constant 0 : i32
    %c0_i32_1 = arith.constant 0 : i32
    return %arg0, %c0_i32, %c0_i32_0 : i32, i32, i32
  }
  func.func @transform_1(%arg0: i32) -> (i32, i32) {
    %c0_i32 = arith.constant 0 : i32
    %c0_i32_0 = arith.constant 0 : i32
    %c0_i32_1 = arith.constant 0 : i32
    return %c0_i32, %c0_i32_0 : i32, i32
  }
  func.func @transform_2(%arg0: i32) -> (i32, i32, i32) {
    %c0_i32 = arith.constant 0 : i32
    %c0_i32_0 = arith.constant 0 : i32
    %c0_i32_1 = arith.constant 0 : i32
    %c0_i32_2 = arith.constant 0 : i32
    return %c0_i32, %c0_i32_0, %c0_i32_1 : i32, i32, i32
  }
  func.func @transform_3(%arg0: i32) -> (i32, i32, i32) {
    %c0_i32 = arith.constant 0 : i32
    %c0_i32_0 = arith.constant 0 : i32
    %c0_i32_1 = arith.constant 0 : i32
    %c0_i32_2 = arith.constant 0 : i32
    return %c0_i32, %c0_i32_0, %c0_i32_1 : i32, i32, i32
  }
  func.func @transform_4(%arg0: i32) -> (i32, i32, i32) {
    %c0_i32 = arith.constant 0 : i32
    %c0_i32_0 = arith.constant 0 : i32
    %c0_i32_1 = arith.constant 0 : i32
    %c0_i32_2 = arith.constant 0 : i32
    return %c0_i32, %c0_i32_0, %c0_i32_1 : i32, i32, i32
  }
  func.func @transform_5(%arg0: i32) -> (i32, i32, i32) {
    %c0_i32 = arith.constant 0 : i32
    %c0_i32_0 = arith.constant 0 : i32
    %c0_i32_1 = arith.constant 0 : i32
    %c0_i32_2 = arith.constant 0 : i32
    return %c0_i32, %c0_i32_0, %c0_i32_1 : i32, i32, i32
  }
  func.func @transform_6(%arg0: i32) -> (i32, i32, i32, i32) {
    %c0_i32 = arith.constant 0 : i32
    %c0_i32_0 = arith.constant 0 : i32
    %c0_i32_1 = arith.constant 0 : i32
    %c0_i32_2 = arith.constant 0 : i32
    %c0_i32_3 = arith.constant 0 : i32
    return %c0_i32, %c0_i32_0, %c0_i32_1, %c0_i32_2 : i32, i32, i32, i32
  }
  func.func @transform_7(%arg0: i32) -> (i32, i32, i32) {
    %c0_i32 = arith.constant 0 : i32
    %c0_i32_0 = arith.constant 0 : i32
    %c0_i32_1 = arith.constant 0 : i32
    %c0_i32_2 = arith.constant 0 : i32
    return %c0_i32, %c0_i32_0, %c0_i32_1 : i32, i32, i32
  }
  func.func @transform_8(%arg0: i32) -> (i32, i32, i32) {
    %c0_i32 = arith.constant 0 : i32
    %c0_i32_0 = arith.constant 0 : i32
    %c0_i32_1 = arith.constant 0 : i32
    %c0_i32_2 = arith.constant 0 : i32
    return %c0_i32, %c0_i32_0, %c0_i32_1 : i32, i32, i32
  }
  func.func @transform_9(%arg0: i32) -> (i32, i32, i32) {
    %c0_i32 = arith.constant 0 : i32
    %c0_i32_0 = arith.constant 0 : i32
    %c0_i32_1 = arith.constant 0 : i32
    %c0_i32_2 = arith.constant 0 : i32
    return %c0_i32, %c0_i32_0, %c0_i32_1 : i32, i32, i32
  }
  func.func @transform_10(%arg0: i32) -> (i32, i32, i32) {
    %c0_i32 = arith.constant 0 : i32
    %c0_i32_0 = arith.constant 0 : i32
    %c0_i32_1 = arith.constant 0 : i32
    %c0_i32_2 = arith.constant 0 : i32
    return %c0_i32, %c0_i32_0, %c0_i32_1 : i32, i32, i32
  }
  func.func @transform_11(%arg0: i32) -> (i32, i32) {
    %c0_i32 = arith.constant 0 : i32
    %c0_i32_0 = arith.constant 0 : i32
    %c0_i32_1 = arith.constant 0 : i32
    return %c0_i32, %c0_i32_0 : i32, i32
  }
  func.func @transform_12(%arg0: i32) -> (i32, i32) {
    %c0_i32 = arith.constant 0 : i32
    %c0_i32_0 = arith.constant 0 : i32
    %c0_i32_1 = arith.constant 0 : i32
    return %c0_i32, %c0_i32_0 : i32, i32
  }
  func.func @transform_13(%arg0: i32) -> (i32, i32) {
    %c0_i32 = arith.constant 0 : i32
    %c0_i32_0 = arith.constant 0 : i32
    %c0_i32_1 = arith.constant 0 : i32
    return %c0_i32, %c0_i32_0 : i32, i32
  }
  func.func @transform_14(%arg0: i32) -> (i32, i32) {
    %c0_i32 = arith.constant 0 : i32
    %c0_i32_0 = arith.constant 0 : i32
    %c0_i32_1 = arith.constant 0 : i32
    return %c0_i32, %c0_i32_0 : i32, i32
  }
  func.func @transform_15(%arg0: i32) -> (i32, i32, i32) {
    %c0_i32 = arith.constant 0 : i32
    %c0_i32_0 = arith.constant 0 : i32
    %c0_i32_1 = arith.constant 0 : i32
    return %arg0, %c0_i32, %c0_i32_0 : i32, i32, i32
  }
}

</mosaic_0001>

<llo_original>
// kernel: _lambda_.2
$region0: #{_lambda_.2}
  #allocation0 [shape = 'u32[]', space=smem, size = 0x4, offset = 0x4, fixed_abs, tag = 'smem constant byte address 0x4 - core index']
  #allocation1 [shape = 'u32[144,128]{1,0:T(1,128)}', space=vmem, size = 0x12000, scoped, tag = 'internal scratch']
  %s0 = inlined_call_operand.hbm [shape: f32[2,8,16], index: 0, kind: input, shape index: {}]
  %s1 = inlined_call_operand.vmem [shape: f32[48,32], index: 1, kind: input, shape index: {}]
  %s2 = inlined_call_operand.vmem [shape: f32[1,32], index: 2, kind: input, shape index: {}]
  %s3 = inlined_call_operand.hbm [shape: f32[4,96,32], index: 3, kind: input, shape index: {}]
  %s4 = inlined_call_operand.vmem [shape: f32[4,1,32], index: 4, kind: input, shape index: {}]
  %s5 = inlined_call_operand.hbm [shape: f32[96,64], index: 5, kind: input, shape index: {}]
  %s6 = inlined_call_operand.vmem [shape: f32[1,64], index: 6, kind: input, shape index: {}]
  %s7 = inlined_call_operand.vmem [shape: f32[2,8,64], index: 7, kind: output, shape index: {}]
  %s8 = sld [smem:[#allocation0]]
  $region73: #{_lambda_.2} parent=0
    _
  %s10 = ssub.s32 1, %s8
  %s11 = scalar_select 0, %s10, %s8
  $region1: #{_lambda_.2} parent=0
    #allocation2 [shape = 'u8[8192]{0}', space=vmem, size = 0x2000, scoped, tag = 'input window, operand 0']
    #allocation3 [shape = 's32[2]{0}', space=sflag, size = 0x8, scoped, tag = 'scoped memory for _lambda_.2']
    #allocation4 [shape = 'u8[196608]{0}', space=vmem, size = 0x30000, scoped, tag = 'input window, operand 3, single buffered']
    #allocation5 [shape = 's32[1]{0}', space=sflag, size = 0x4, scoped, tag = 'scoped memory for _lambda_.2']
    #allocation6 [shape = 'u8[49152]{0}', space=vmem, size = 0xc000, scoped, tag = 'input window, operand 5, single buffered']
    %12 = vsyncpa [#allocation3], 0
    %s13 = scalar_lea.sflag [#allocation3], 1
    %14 = vsyncpa %s13, 0
    %15 = vsyncpa [#allocation5], 0
    loop: start=0, step=1, limit=4
    $region2: #{_lambda_.2} parent=1 // loop_pre_header
      _
    $region3: #{_lambda_.2} parent=1 // loop_header
      %s17 = sphi 0, %s21
      %p18 = scmp.ge.s32.totalorder %s17, 4
      %s27 = sphi 0, %s29
      %s30 = sphi 0, %s27
      %s31 = sphi 0, %s30
      %s47 = sphi 0, %s31
      %s51 = sphi 0, %s51
      %s53 = sphi 0, %s51
      %s54 = sphi 0, %s53
      %s68 = sphi 0, %s54
      %s72 = sphi 0, %s72
      %s74 = sphi 0, %s72
      %s75 = sphi 0, %s74
      %s89 = sphi 0, %s75
      %s93 = sphi 0, %s93
      %s95 = sphi 0, %s93
      %s96 = sphi 0, %s95
      %s110 = sphi 0, %s96
      %s114 = sphi 0, %s114
      %s116 = sphi 0, %s114
      %s117 = sphi 0, %s116
      %s131 = sphi 0, %s117
      %s135 = sphi 0, %s135
      %s137 = sphi 0, %s135
      %s138 = sphi 0, %s137
      %s152 = sphi 0, %s138
      %s156 = sphi 0, %s156
      %s158 = sphi 0, %s156
      %s159 = sphi 0, %s158
      %s173 = sphi 0, %s159
      %s179 = sphi 0, %s181
      %s182 = sphi 0, %s179
      %s183 = sphi 0, %s182
      %s199 = sphi 0, %s183
    $region4: #{_lambda_.2} parent=1 // loop_header_branch
      %20 = sbr.rel (%p18) target = $region8
    $region5: #{_lambda_.2} parent=1 // loop_body
      %s22 = ssub.s32 %s17, 1
      %s23 = ssub.s32 %s17, 2
      %s24 = sadd.s32 %s17, 1
      %s25 = ssub.s32 %s17, %s24
      %p26 = scmp.eq.s32.totalorder %s25, 0
      %s28 = sadd.s32 %s27, 1
      %s29 = scalar_select %p26, %s27, %s28
      %p32 = pneg %p26
      %p33 = scmp.eq.s32.totalorder %s17, 1
      %p34 = por %p32, %p33
      %p35 = scmp.ne.s32.totalorder %s27, %s30
      %p36 = scmp.eq.s32.totalorder %s17, 0
      %p37 = por %p35, %p36
      %p38 = scmp.ne.s32.totalorder %s27, %s30
      %p39 = scmp.eq.s32.totalorder %s22, 1
      %p40 = por %p38, %p39
      %p41 = scmp.ne.s32.totalorder %s30, %s31
      %p42 = scmp.eq.s32.totalorder %s22, 0
      %p43 = por %p41, %p42
      %p44 = scmp.ne.s32.totalorder %s30, %s31
      %p45 = scmp.eq.s32.totalorder %s23, 1
      %p46 = por %p44, %p45
      %p48 = scmp.ne.s32.totalorder %s31, %s47
      %p49 = scmp.eq.s32.totalorder %s23, 0
      %p50 = por %p48, %p49
      %s52 = sadd.s32 %s51, 1
      %p55 = scmp.eq.s32.totalorder %s17, 1
      %p56 = scmp.ne.s32.totalorder %s51, %s53
      %p57 = scmp.eq.s32.totalorder %s17, 0
      %p58 = por %p56, %p57
      %p59 = scmp.ne.s32.totalorder %s51, %s53
      %p60 = scmp.eq.s32.totalorder %s22, 1
      %p61 = por %p59, %p60
      %p62 = scmp.ne.s32.totalorder %s53, %s54
      %p63 = scmp.eq.s32.totalorder %s22, 0
      %p64 = por %p62, %p63
      %p65 = scmp.ne.s32.totalorder %s53, %s54
      %p66 = scmp.eq.s32.totalorder %s23, 1
      %p67 = por %p65, %p66
      %p69 = scmp.ne.s32.totalorder %s54, %s68
      %p70 = scmp.eq.s32.totalorder %s23, 0
      %p71 = por %p69, %p70
      %s73 = sadd.s32 %s72, 1
      %p76 = scmp.eq.s32.totalorder %s17, 1
      %p77 = scmp.ne.s32.totalorder %s72, %s74
      %p78 = scmp.eq.s32.totalorder %s17, 0
      %p79 = por %p77, %p78
      %p80 = scmp.ne.s32.totalorder %s72, %s74
      %p81 = scmp.eq.s32.totalorder %s22, 1
      %p82 = por %p80, %p81
      %p83 = scmp.ne.s32.totalorder %s74, %s75
      %p84 = scmp.eq.s32.totalorder %s22, 0
      %p85 = por %p83, %p84
      %p86 = scmp.ne.s32.totalorder %s74, %s75
      %p87 = scmp.eq.s32.totalorder %s23, 1
      %p88 = por %p86, %p87
      %p90 = scmp.ne.s32.totalorder %s75, %s89
      %p91 = scmp.eq.s32.totalorder %s23, 0
      %p92 = por %p90, %p91
      %s94 = sadd.s32 %s93, 1
      %p97 = scmp.eq.s32.totalorder %s17, 1
      %p98 = scmp.ne.s32.totalorder %s93, %s95
      %p99 = scmp.eq.s32.totalorder %s17, 0
      %p100 = por %p98, %p99
      %p101 = scmp.ne.s32.totalorder %s93, %s95
      %p102 = scmp.eq.s32.totalorder %s22, 1
      %p103 = por %p101, %p102
      %p104 = scmp.ne.s32.totalorder %s95, %s96
      %p105 = scmp.eq.s32.totalorder %s22, 0
      %p106 = por %p104, %p105
      %p107 = scmp.ne.s32.totalorder %s95, %s96
      %p108 = scmp.eq.s32.totalorder %s23, 1
      %p109 = por %p107, %p108
      %p111 = scmp.ne.s32.totalorder %s96, %s110
      %p112 = scmp.eq.s32.totalorder %s23, 0
      %p113 = por %p111, %p112
      %s115 = sadd.s32 %s114, 1
      %p118 = scmp.eq.s32.totalorder %s17, 1
      %p119 = scmp.ne.s32.totalorder %s114, %s116
      %p120 = scmp.eq.s32.totalorder %s17, 0
      %p121 = por %p119, %p120
      %p122 = scmp.ne.s32.totalorder %s114, %s116
      %p123 = scmp.eq.s32.totalorder %s22, 1
      %p124 = por %p122, %p123
      %p125 = scmp.ne.s32.totalorder %s116, %s117
      %p126 = scmp.eq.s32.totalorder %s22, 0
      %p127 = por %p125, %p126
      %p128 = scmp.ne.s32.totalorder %s116, %s117
      %p129 = scmp.eq.s32.totalorder %s23, 1
      %p130 = por %p128, %p129
      %p132 = scmp.ne.s32.totalorder %s117, %s131
      %p133 = scmp.eq.s32.totalorder %s23, 0
      %p134 = por %p132, %p133
      %s136 = sadd.s32 %s135, 1
      %p139 = scmp.eq.s32.totalorder %s17, 1
      %p140 = scmp.ne.s32.totalorder %s135, %s137
      %p141 = scmp.eq.s32.totalorder %s17, 0
      %p142 = por %p140, %p141
      %p143 = scmp.ne.s32.totalorder %s135, %s137
      %p144 = scmp.eq.s32.totalorder %s22, 1
      %p145 = por %p143, %p144
      %p146 = scmp.ne.s32.totalorder %s137, %s138
      %p147 = scmp.eq.s32.totalorder %s22, 0
      %p148 = por %p146, %p147
      %p149 = scmp.ne.s32.totalorder %s137, %s138
      %p150 = scmp.eq.s32.totalorder %s23, 1
      %p151 = por %p149, %p150
      %p153 = scmp.ne.s32.totalorder %s138, %s152
      %p154 = scmp.eq.s32.totalorder %s23, 0
      %p155 = por %p153, %p154
      %s157 = sadd.s32 %s156, 1
      %p160 = scmp.eq.s32.totalorder %s17, 1
      %p161 = scmp.ne.s32.totalorder %s156, %s158
      %p162 = scmp.eq.s32.totalorder %s17, 0
      %p163 = por %p161, %p162
      %p164 = scmp.ne.s32.totalorder %s156, %s158
      %p165 = scmp.eq.s32.totalorder %s22, 1
      %p166 = por %p164, %p165
      %p167 = scmp.ne.s32.totalorder %s158, %s159
      %p168 = scmp.eq.s32.totalorder %s22, 0
      %p169 = por %p167, %p168
      %p170 = scmp.ne.s32.totalorder %s158, %s159
      %p171 = scmp.eq.s32.totalorder %s23, 1
      %p172 = por %p170, %p171
      %p174 = scmp.ne.s32.totalorder %s159, %s173
      %p175 = scmp.eq.s32.totalorder %s23, 0
      %p176 = por %p174, %p175
      %s177 = ssub.s32 %s17, %s24
      %p178 = scmp.eq.s32.totalorder %s177, 0
      %s180 = sadd.s32 %s179, 1
      %s181 = scalar_select %p178, %s179, %s180
      %p184 = pneg %p178
      %p185 = scmp.eq.s32.totalorder %s17, 1
      %p186 = por %p184, %p185
      %p187 = scmp.ne.s32.totalorder %s179, %s182
      %p188 = scmp.eq.s32.totalorder %s17, 0
      %p189 = por %p187, %p188
      %p190 = scmp.ne.s32.totalorder %s179, %s182
      %p191 = scmp.eq.s32.totalorder %s22, 1
      %p192 = por %p190, %p191
      %p193 = scmp.ne.s32.totalorder %s182, %s183
      %p194 = scmp.eq.s32.totalorder %s22, 0
      %p195 = por %p193, %p194
      %p196 = scmp.ne.s32.totalorder %s182, %s183
      %p197 = scmp.eq.s32.totalorder %s23, 1
      %p198 = por %p196, %p197
      %p200 = scmp.ne.s32.totalorder %s183, %s199
      %p201 = scmp.eq.s32.totalorder %s23, 0
      %p202 = por %p200, %p201
      %p203 = scmp.le.s32.totalorder 1, %s17
      %p204 = scmp.lt.s32.totalorder %s17, 3
      %p205 = pnand %p203, %p204
      %p206 = pneg %p205
      // Predicated region
      $region9: #{_lambda_.2} parent=5 // pred_check
        _
      $region10: #{_lambda_.2} parent=5 // pred_check_branch
        %208 = sbr.rel (%p205) target = $region12
      $region11: #{_lambda_.2} parent=5 // pred_region
        %s209 = ssub.s32 %s17, 1
        // Predicated region
        $region13: #{_lambda_.2} parent=11 // pred_check
          %p210 = pneg %p64
        $region14: #{_lambda_.2} parent=11 // pred_check_branch
          %212 = sbr.rel (%p210) target = $region16
        $region15: #{_lambda_.2} parent=11 // pred_region
          _
        $region16: #{_lambda_.2} parent=11 // pred_fallthru
          _
        // Predicated region
        $region17: #{_lambda_.2} parent=11 // pred_check
          %p213 = pneg %p85
        $region18: #{_lambda_.2} parent=11 // pred_check_branch
          %215 = sbr.rel (%p213) target = $region20
        $region19: #{_lambda_.2} parent=11 // pred_region
          _
        $region20: #{_lambda_.2} parent=11 // pred_fallthru
          _
        // Predicated region
        $region21: #{_lambda_.2} parent=11 // pred_check
          %p216 = pneg %p106
        $region22: #{_lambda_.2} parent=11 // pred_check_branch
          %218 = sbr.rel (%p216) target = $region24
        $region23: #{_lambda_.2} parent=11 // pred_region
          %s220 = ssub.s32 6144, 6144
          %221 = vsyncadd [#allocation5], %s220
          %s222 = sshll.u32 [#allocation4], 4
          %s223 = int_to_ptr.vmem [resolvable:$true] %s222
          %228 = dma.hbm_to_vmem [thread:$0]  %s3, 6144, %s223, [#allocation5], 128, 128, 8
        $region24: #{_lambda_.2} parent=11 // pred_fallthru
          _
        // Predicated region
        $region25: #{_lambda_.2} parent=11 // pred_check
          %p229 = pneg %p127
        $region26: #{_lambda_.2} parent=11 // pred_check_branch
          %231 = sbr.rel (%p229) target = $region28
        $region27: #{_lambda_.2} parent=11 // pred_region
          _
        $region28: #{_lambda_.2} parent=11 // pred_fallthru
          _
        // Predicated region
        $region29: #{_lambda_.2} parent=11 // pred_check
          %p232 = pneg %p148
        $region30: #{_lambda_.2} parent=11 // pred_check_branch
          %234 = sbr.rel (%p232) target = $region32
        $region31: #{_lambda_.2} parent=11 // pred_region
          %s236 = ssub.s32 1536, 1536
          %237 = vsyncadd [#allocation5], %s236
          %s238 = sshll.u32 [#allocation6], 4
          %s239 = int_to_ptr.vmem [resolvable:$true] %s238
          %244 = dma.hbm_to_vmem [thread:$0]  %s5, 1536, %s239, [#allocation5], 128, 128, 8
        $region32: #{_lambda_.2} parent=11 // pred_fallthru
          _
        // Predicated region
        $region33: #{_lambda_.2} parent=11 // pred_check
          %p245 = pneg %p169
        $region34: #{_lambda_.2} parent=11 // pred_check_branch
          %247 = sbr.rel (%p245) target = $region36
        $region35: #{_lambda_.2} parent=11 // pred_region
          _
        $region36: #{_lambda_.2} parent=11 // pred_fallthru
          _
      $region12: #{_lambda_.2} parent=5 // pred_fallthru
        _
      %p248 = scmp.lt.s32.totalorder %s17, 2
      // Predicated region
      $region37: #{_lambda_.2} parent=5 // pred_check
        %p249 = pneg %p248
      $region38: #{_lambda_.2} parent=5 // pred_check_branch
        %251 = sbr.rel (%p249) target = $region40
      $region39: #{_lambda_.2} parent=5 // pred_region
        // Predicated region
        $region41: #{_lambda_.2} parent=39 // pred_check
          %p252 = pneg %p37
        $region42: #{_lambda_.2} parent=39 // pred_check_branch
          %254 = sbr.rel (%p252) target = $region44
        $region43: #{_lambda_.2} parent=39 // pred_region
          %s255 = sand.u32 %s27, 1
          %s256 = scalar_lea.sflag [#allocation3], %s255
          %s257 = sand.u32 %s27, 1
          %s258 = smul.addr %s257, 8
          %s259 = scalar_lea.vmem [#allocation2], %s258
          %s261 = ssub.s32 128, 128
          %262 = vsyncadd %s256, %s261
          %s263 = smul.addr %s17, 128
          %s264 = scalar_lea.hbm %s0, %s263
          %s266 = sshll.u32 %s259, 4
          %s267 = int_to_ptr.vmem [resolvable:$true] %s266
          %269 = dma.hbm_to_vmem [thread:$0]  %s264, 128, %s267, %s256
        $region44: #{_lambda_.2} parent=39 // pred_fallthru
          _
      $region40: #{_lambda_.2} parent=5 // pred_fallthru
        _
      %p270 = scmp.le.s32.totalorder 1, %s17
      %p271 = scmp.lt.s32.totalorder %s17, 3
      %p272 = pnand %p270, %p271
      %p273 = pneg %p272
      // Predicated region
      $region45: #{_lambda_.2} parent=5 // pred_check
        _
      $region46: #{_lambda_.2} parent=5 // pred_check_branch
        %275 = sbr.rel (%p272) target = $region48
      $region47: #{_lambda_.2} parent=5 // pred_region
        %s276 = ssub.s32 %s17, 1
        %s277 = sand.u32 %s30, 1
        %s278 = scalar_lea.sflag [#allocation3], %s277
        %s279 = sand.u32 %s30, 1
        %s280 = smul.addr %s279, 8
        %s281 = scalar_lea.vmem [#allocation2], %s280
        // Predicated region
        $region49: #{_lambda_.2} parent=47 // pred_check
          %p282 = pneg %p43
        $region50: #{_lambda_.2} parent=47 // pred_check_branch
          %284 = sbr.rel (%p282) target = $region52
        $region51: #{_lambda_.2} parent=47 // pred_region
          %285 = dma.done %s278, 128
        $region52: #{_lambda_.2} parent=47 // pred_fallthru
          _
        // Predicated region
        $region53: #{_lambda_.2} parent=47 // pred_check
          %p286 = pneg %p106
        $region54: #{_lambda_.2} parent=47 // pred_check_branch
          %288 = sbr.rel (%p286) target = $region56
        $region55: #{_lambda_.2} parent=47 // pred_region
          %289 = dma.done [#allocation5], 6144
        $region56: #{_lambda_.2} parent=47 // pred_fallthru
          _
        // Predicated region
        $region57: #{_lambda_.2} parent=47 // pred_check
          %p290 = pneg %p148
        $region58: #{_lambda_.2} parent=47 // pred_check_branch
          %292 = sbr.rel (%p290) target = $region60
        $region59: #{_lambda_.2} parent=47 // pred_region
          %293 = dma.done [#allocation5], 1536
        $region60: #{_lambda_.2} parent=47 // pred_fallthru
          _
        %s294 = sand.u32 %s30, 1
        %s295 = scalar_lea.sflag [#allocation3], %s294
        %s296 = sand.u32 %s30, 1
        %s297 = smul.addr %s296, 8
        %s298 = scalar_lea.vmem [#allocation2], %s297
        %p299 = pneg %p43
        %p300 = pneg %p40
        %p301 = pneg %p64
        %p302 = pneg %p61
        %p303 = pneg %p85
        %p304 = pneg %p82
        %p305 = pneg %p106
        %p306 = pneg %p103
        %p307 = pneg %p127
        %p308 = pneg %p124
        %p309 = pneg %p148
        %p310 = pneg %p145
        %p311 = pneg %p169
        %p312 = pneg %p166
        %p313 = pneg %p195
        %p314 = pneg %p192
        %p315 = scmp.lt.s32.totalorder %s22, 1
        %s316 = scalar_select %p315, %s22, 1
        %s317 = smul.addr %s316, 8
        %s318 = scalar_lea.vmem %s7, %s317
        %p319 = scmp.lt.s32.totalorder %s22, 1
        %s320 = scalar_select %p319, %s22, 1
        %s321 = smul.addr %s320, 8
        %s322 = scalar_lea.vmem %s7, %s321
        %v323 = vld [vmem:[%s281] sm:$0xff]
        %v324 = vld [vmem:[%s1] sm:$0xff]
        %v325 = vld [vmem:[%s1 + $0x8] sm:$0xff]
        %v326 = vld [vmem:[%s1 + $0x10] sm:$0xff]
        %v327 = vld [vmem:[%s1 + $0x18] sm:$0xff]
        %v328 = vld [vmem:[%s1 + $0x20] sm:$0xff]
        %v329 = vld [vmem:[%s1 + $0x28] sm:$0xff]
        %v330 = vld [vmem:[%s2] sm:$0x1]
        %v331 = vlaneseq
        %v332 = vshrl.u32 %v331, 7
        %vm333 = vcmp.eq.s32.totalorder %v332, 0
        %v334 = vrot.slane %v323, 7
        %v335 = vsel %vm333, 0.0, %v334
        %vm336 = vcmp.eq.s32.totalorder %v332, 7
        %v337 = vrot.slane %v323, 1
        %v338 = vsel %vm336, 0.0, %v337
        %340 = vrot.lane.b32.xlu0 %v323, 16
        %v341 = vpop.permute.xlu0 %340
        %344 = vrot.lane.b32.xlu0 %v338, 32
        %v345 = vpop.permute.xlu0 %344
        %vm347 = vcmask 130048
        %v348 = vsel %vm347, %v335, %v341
        %vm349 = vcmask 261120
        %v350 = vsel %vm349, %v348, %v345
        %v352 = vlaneseq
        %v353 = vshrl.u32 %v352, 7
        %v354 = vsub.s32 0, %v353
        %v355 = vrot.slane %v330, %v354
        %vm357 = vcmask 392192
        %v359 = vsel %vm357, %v350, 0
        %361 = vmatprep.subr.mxu0 0.0
        %362 = vmatpush1.msra.mxu0 %v324
        %363 = vmatprep.subr.mxu0 0.0
        %364 = vmatpush1.msra.mxu0 %v325
        %365 = vmatprep.subr.mxu0 0.0
        %366 = vmatpush1.msra.mxu0 %v326
        %367 = vmatprep.subr.mxu0 0.0
        %368 = vmatpush1.msra.mxu0 %v327
        %369 = vmatprep.subr.mxu0 0.0
        %370 = vmatpush1.msra.mxu0 %v328
        %371 = vmatprep.subr.mxu0 0.0
        %372 = vmatpush1.msra.mxu0 %v329
        %373 = vmatprep.subr.mxu0 0.0
        %374 = vmatpush1.msra.mxu0 0.0
        %375 = vmatprep.subr.mxu0 0.0
        %376 = vmatpush1.msra.mxu0 0.0
        %377 = vmatprep.subr.mxu0 0.0
        %378 = vmatpush1.msra.mxu0 0.0
        %379 = vmatprep.subr.mxu0 0.0
        %380 = vmatpush1.msra.mxu0 0.0
        %381 = vmatprep.subr.mxu0 0.0
        %382 = vmatpush1.msra.mxu0 0.0
        %383 = vmatprep.subr.mxu0 0.0
        %384 = vmatpush1.msra.mxu0 0.0
        %385 = vmatprep.subr.mxu0 0.0
        %386 = vmatpush1.msra.mxu0 0.0
        %387 = vmatprep.subr.mxu0 0.0
        %388 = vmatpush1.msra.mxu0 0.0
        %389 = vmatprep.subr.mxu0 0.0
        %390 = vmatpush1.msra.mxu0 0.0
        %391 = vmatprep.subr.mxu0 0.0
        %392 = vmatpush1.msra.mxu0 0.0
        %393 = vmatprep.subr.mxu0 0.0
        %394 = vmatpush1.msra.mxu0 0.0
        %395 = vmatprep.subr.mxu0 0.0
        %396 = vmatpush1.msra.mxu0 0.0
        %397 = vmatprep.subr.mxu0 0.0
        %398 = vmatpush1.msra.mxu0 0.0
        %399 = vmatprep.subr.mxu0 0.0
        %400 = vmatpush1.msra.mxu0 0.0
        %401 = vmatprep.subr.mxu0 0.0
        %402 = vmatpush1.msra.mxu0 0.0
        %403 = vmatprep.subr.mxu0 0.0
        %404 = vmatpush1.msra.mxu0 0.0
        %405 = vmatprep.subr.mxu0 0.0
        %406 = vmatpush1.msra.mxu0 0.0
        %407 = vmatprep.subr.mxu0 0.0
        %408 = vmatpush1.msra.mxu0 0.0
        %409 = vmatprep.subr.mxu0 0.0
        %410 = vmatpush1.msra.mxu0 0.0
        %411 = vmatprep.subr.mxu0 0.0
        %412 = vmatpush1.msra.mxu0 0.0
        %413 = vmatprep.subr.mxu0 0.0
        %414 = vmatpush1.msra.mxu0 0.0
        %415 = vmatprep.subr.mxu0 0.0
        %416 = vmatpush1.msra.mxu0 0.0
        %417 = vmatprep.subr.mxu0 0.0
        %418 = vmatpush1.msra.mxu0 0.0
        %419 = vmatprep.subr.mxu0 0.0
        %420 = vmatpush1.msra.mxu0 0.0
        %421 = vmatprep.subr.mxu0 0.0
        %422 = vmatpush1.msra.mxu0 0.0
        %423 = vmatprep.subr.mxu0 0.0
        %424 = vmatpush1.msra.mxu0 0.0
        %425 = vmatprep.mubr.f32.mxu0 0.0
        %426 = vmatmul.mubr.f32.gmra.mrb[0].mxu0 %v359
        %v427 = vpop.f32.mrb[0].mxu0
        %v428 = vadd.f32 %v355, %v427
        %v429 = vpop.f32.mrb[0].mxu0
        %430 = vdwg.mxu0
        %v431 = vld [vmem:[#allocation4] sm:$0xff]
        %v432 = vld [vmem:[#allocation4 + $0x8] sm:$0xff]
        %v433 = vld [vmem:[#allocation4 + $0x10] sm:$0xff]
        %v434 = vld [vmem:[#allocation4 + $0x18] sm:$0xff]
        %v435 = vld [vmem:[#allocation4 + $0x20] sm:$0xff]
        %v436 = vld [vmem:[#allocation4 + $0x28] sm:$0xff]
        %v437 = vld [vmem:[#allocation4 + $0x30] sm:$0xff]
        %v438 = vld [vmem:[#allocation4 + $0x38] sm:$0xff]
        %v439 = vld [vmem:[#allocation4 + $0x40] sm:$0xff]
        %v440 = vld [vmem:[#allocation4 + $0x48] sm:$0xff]
        %v441 = vld [vmem:[#allocation4 + $0x50] sm:$0xff]
        %v442 = vld [vmem:[#allocation4 + $0x58] sm:$0xff]
        %v443 = vld [vmem:[%s4] sm:$0x1]
        %v444 = vrot.slane %v428, 7
        %v445 = vsel %vm333, 0.0, %v444
        %v446 = vrot.slane %v428, 1
        %v447 = vsel %vm336, 0.0, %v446
        %449 = vrot.lane.b32.xlu0 %v428, 32
        %v450 = vpop.permute.xlu0 %449
        %453 = vrot.lane.b32.xlu0 %v447, 64
        %v454 = vpop.permute.xlu0 %453
        %v456 = vsel %vm349, %v445, %v450
        %vm457 = vcmask 523264
        %v458 = vsel %vm457, %v456, %v454
        %v460 = vlaneseq
        %v461 = vshrl.u32 %v460, 7
        %v462 = vsub.s32 0, %v461
        %v463 = vrot.slane %v443, %v462
        %vm465 = vcmask 785408
        %v467 = vsel %vm465, %v458, 0
        %469 = vmatprep.subr.mxu0 0.0
        %470 = vmatpush1.msra.mxu0 %v431
        %471 = vmatprep.subr.mxu0 0.0
        %472 = vmatpush1.msra.mxu0 %v432
        %473 = vmatprep.subr.mxu0 0.0
        %474 = vmatpush1.msra.mxu0 %v433
        %475 = vmatprep.subr.mxu0 0.0
        %476 = vmatpush1.msra.mxu0 %v434
        %477 = vmatprep.subr.mxu0 0.0
        %478 = vmatpush1.msra.mxu0 %v435
        %479 = vmatprep.subr.mxu0 0.0
        %480 = vmatpush1.msra.mxu0 %v436
        %481 = vmatprep.subr.mxu0 0.0
        %482 = vmatpush1.msra.mxu0 %v437
        %483 = vmatprep.subr.mxu0 0.0
        %484 = vmatpush1.msra.mxu0 %v438
        %485 = vmatprep.subr.mxu0 0.0
        %486 = vmatpush1.msra.mxu0 %v439
        %487 = vmatprep.subr.mxu0 0.0
        %488 = vmatpush1.msra.mxu0 %v440
        %489 = vmatprep.subr.mxu0 0.0
        %490 = vmatpush1.msra.mxu0 %v441
        %491 = vmatprep.subr.mxu0 0.0
        %492 = vmatpush1.msra.mxu0 %v442
        %493 = vmatprep.subr.mxu0 0.0
        %494 = vmatpush1.msra.mxu0 0.0
        %495 = vmatprep.subr.mxu0 0.0
        %496 = vmatpush1.msra.mxu0 0.0
        %497 = vmatprep.subr.mxu0 0.0
        %498 = vmatpush1.msra.mxu0 0.0
        %499 = vmatprep.subr.mxu0 0.0
        %500 = vmatpush1.msra.mxu0 0.0
        %501 = vmatprep.subr.mxu0 0.0
        %502 = vmatpush1.msra.mxu0 0.0
        %503 = vmatprep.subr.mxu0 0.0
        %504 = vmatpush1.msra.mxu0 0.0
        %505 = vmatprep.subr.mxu0 0.0
        %506 = vmatpush1.msra.mxu0 0.0
        %507 = vmatprep.subr.mxu0 0.0
        %508 = vmatpush1.msra.mxu0 0.0
        %509 = vmatprep.subr.mxu0 0.0
        %510 = vmatpush1.msra.mxu0 0.0
        %511 = vmatprep.subr.mxu0 0.0
        %512 = vmatpush1.msra.mxu0 0.0
        %513 = vmatprep.subr.mxu0 0.0
        %514 = vmatpush1.msra.mxu0 0.0
        %515 = vmatprep.subr.mxu0 0.0
        %516 = vmatpush1.msra.mxu0 0.0
        %517 = vmatprep.subr.mxu0 0.0
        %518 = vmatpush1.msra.mxu0 0.0
        %519 = vmatprep.subr.mxu0 0.0
        %520 = vmatpush1.msra.mxu0 0.0
        %521 = vmatprep.subr.mxu0 0.0
        %522 = vmatpush1.msra.mxu0 0.0
        %523 = vmatprep.subr.mxu0 0.0
        %524 = vmatpush1.msra.mxu0 0.0
        %525 = vmatprep.subr.mxu0 0.0
        %526 = vmatpush1.msra.mxu0 0.0
        %527 = vmatprep.subr.mxu0 0.0
        %528 = vmatpush1.msra.mxu0 0.0
        %529 = vmatprep.subr.mxu0 0.0
        %530 = vmatpush1.msra.mxu0 0.0
        %531 = vmatprep.subr.mxu0 0.0
        %532 = vmatpush1.msra.mxu0 0.0
        %533 = vmatprep.mubr.f32.mxu0 0.0
        %534 = vmatmul.mubr.f32.gmra.mrb[0].mxu0 %v467
        %v535 = vpop.f32.mrb[0].mxu0
        %v536 = vadd.f32 %v463, %v535
        %v537 = vpop.f32.mrb[0].mxu0
        %538 = vdwg.mxu0
        %vm539 = vcmp.gt.f32.partialorder %v536, 0.0
        %v540 = vmul.f32 %v536, 0.2
        %v541 = vsel %vm539, %v536, %v540
        %s542 = scalar_lea.vmem [#allocation4], 96
        %v543 = vld [vmem:[%s542] sm:$0xff]
        %v544 = vld [vmem:[%s542 + $0x8] sm:$0xff]
        %v545 = vld [vmem:[%s542 + $0x10] sm:$0xff]
        %v546 = vld [vmem:[%s542 + $0x18] sm:$0xff]
        %v547 = vld [vmem:[%s542 + $0x20] sm:$0xff]
        %v548 = vld [vmem:[%s542 + $0x28] sm:$0xff]
        %v549 = vld [vmem:[%s542 + $0x30] sm:$0xff]
        %v550 = vld [vmem:[%s542 + $0x38] sm:$0xff]
        %v551 = vld [vmem:[%s542 + $0x40] sm:$0xff]
        %v552 = vld [vmem:[%s542 + $0x48] sm:$0xff]
        %v553 = vld [vmem:[%s542 + $0x50] sm:$0xff]
        %v554 = vld [vmem:[%s542 + $0x58] sm:$0xff]
        %s555 = scalar_lea.vmem %s4, 1
        %v556 = vld [vmem:[%s555] sm:$0x1]
        %v557 = vrot.slane %v541, 7
        %v558 = vsel %vm333, 0.0, %v557
        %v559 = vrot.slane %v541, 1
        %v560 = vsel %vm336, 0.0, %v559
        %562 = vrot.lane.b32.xlu0 %v541, 32
        %v563 = vpop.permute.xlu0 %562
        %566 = vrot.lane.b32.xlu0 %v560, 64
        %v567 = vpop.permute.xlu0 %566
        %v569 = vsel %vm349, %v558, %v563
        %v570 = vsel %vm457, %v569, %v567
        %v572 = vlaneseq
        %v573 = vshrl.u32 %v572, 7
        %v574 = vsub.s32 0, %v573
        %v575 = vrot.slane %v556, %v574
        %v578 = vsel %vm465, %v570, 0
        %580 = vmatprep.subr.mxu0 0.0
        %581 = vmatpush1.msra.mxu0 %v543
        %582 = vmatprep.subr.mxu0 0.0
        %583 = vmatpush1.msra.mxu0 %v544
        %584 = vmatprep.subr.mxu0 0.0
        %585 = vmatpush1.msra.mxu0 %v545
        %586 = vmatprep.subr.mxu0 0.0
        %587 = vmatpush1.msra.mxu0 %v546
        %588 = vmatprep.subr.mxu0 0.0
        %589 = vmatpush1.msra.mxu0 %v547
        %590 = vmatprep.subr.mxu0 0.0
        %591 = vmatpush1.msra.mxu0 %v548
        %592 = vmatprep.subr.mxu0 0.0
        %593 = vmatpush1.msra.mxu0 %v549
        %594 = vmatprep.subr.mxu0 0.0
        %595 = vmatpush1.msra.mxu0 %v550
        %596 = vmatprep.subr.mxu0 0.0
        %597 = vmatpush1.msra.mxu0 %v551
        %598 = vmatprep.subr.mxu0 0.0
        %599 = vmatpush1.msra.mxu0 %v552
        %600 = vmatprep.subr.mxu0 0.0
        %601 = vmatpush1.msra.mxu0 %v553
        %602 = vmatprep.subr.mxu0 0.0
        %603 = vmatpush1.msra.mxu0 %v554
        %604 = vmatprep.subr.mxu0 0.0
        %605 = vmatpush1.msra.mxu0 0.0
        %606 = vmatprep.subr.mxu0 0.0
        %607 = vmatpush1.msra.mxu0 0.0
        %608 = vmatprep.subr.mxu0 0.0
        %609 = vmatpush1.msra.mxu0 0.0
        %610 = vmatprep.subr.mxu0 0.0
        %611 = vmatpush1.msra.mxu0 0.0
        %612 = vmatprep.subr.mxu0 0.0
        %613 = vmatpush1.msra.mxu0 0.0
        %614 = vmatprep.subr.mxu0 0.0
        %615 = vmatpush1.msra.mxu0 0.0
        %616 = vmatprep.subr.mxu0 0.0
        %617 = vmatpush1.msra.mxu0 0.0
        %618 = vmatprep.subr.mxu0 0.0
        %619 = vmatpush1.msra.mxu0 0.0
        %620 = vmatprep.subr.mxu0 0.0
        %621 = vmatpush1.msra.mxu0 0.0
        %622 = vmatprep.subr.mxu0 0.0
        %623 = vmatpush1.msra.mxu0 0.0
        %624 = vmatprep.subr.mxu0 0.0
        %625 = vmatpush1.msra.mxu0 0.0
        %626 = vmatprep.subr.mxu0 0.0
        %627 = vmatpush1.msra.mxu0 0.0
        %628 = vmatprep.subr.mxu0 0.0
        %629 = vmatpush1.msra.mxu0 0.0
        %630 = vmatprep.subr.mxu0 0.0
        %631 = vmatpush1.msra.mxu0 0.0
        %632 = vmatprep.subr.mxu0 0.0
        %633 = vmatpush1.msra.mxu0 0.0
        %634 = vmatprep.subr.mxu0 0.0
        %635 = vmatpush1.msra.mxu0 0.0
        %636 = vmatprep.subr.mxu0 0.0
        %637 = vmatpush1.msra.mxu0 0.0
        %638 = vmatprep.subr.mxu0 0.0
        %639 = vmatpush1.msra.mxu0 0.0
        %640 = vmatprep.subr.mxu0 0.0
        %641 = vmatpush1.msra.mxu0 0.0
        %642 = vmatprep.subr.mxu0 0.0
        %643 = vmatpush1.msra.mxu0 0.0
        %644 = vmatprep.mubr.f32.mxu0 0.0
        %645 = vmatmul.mubr.f32.gmra.mrb[0].mxu0 %v578
        %v646 = vpop.f32.mrb[0].mxu0
        %v647 = vadd.f32 %v575, %v646
        %v648 = vpop.f32.mrb[0].mxu0
        %649 = vdwg.mxu0
        %v650 = vadd.f32 %v428, %v647
        %s651 = scalar_lea.vmem [#allocation4], 192
        %v652 = vld [vmem:[%s651] sm:$0xff]
        %v653 = vld [vmem:[%s651 + $0x8] sm:$0xff]
        %v654 = vld [vmem:[%s651 + $0x10] sm:$0xff]
        %v655 = vld [vmem:[%s651 + $0x18] sm:$0xff]
        %v656 = vld [vmem:[%s651 + $0x20] sm:$0xff]
        %v657 = vld [vmem:[%s651 + $0x28] sm:$0xff]
        %v658 = vld [vmem:[%s651 + $0x30] sm:$0xff]
        %v659 = vld [vmem:[%s651 + $0x38] sm:$0xff]
        %v660 = vld [vmem:[%s651 + $0x40] sm:$0xff]
        %v661 = vld [vmem:[%s651 + $0x48] sm:$0xff]
        %v662 = vld [vmem:[%s651 + $0x50] sm:$0xff]
        %v663 = vld [vmem:[%s651 + $0x58] sm:$0xff]
        %s664 = scalar_lea.vmem %s4, 2
        %v665 = vld [vmem:[%s664] sm:$0x1]
        %v666 = vrot.slane %v650, 7
        %v667 = vsel %vm333, 0.0, %v666
        %v668 = vrot.slane %v650, 1
        %v669 = vsel %vm336, 0.0, %v668
        %671 = vrot.lane.b32.xlu0 %v650, 32
        %v672 = vpop.permute.xlu0 %671
        %675 = vrot.lane.b32.xlu0 %v669, 64
        %v676 = vpop.permute.xlu0 %675
        %v678 = vsel %vm349, %v667, %v672
        %v679 = vsel %vm457, %v678, %v676
        %v681 = vlaneseq
        %v682 = vshrl.u32 %v681, 7
        %v683 = vsub.s32 0, %v682
        %v684 = vrot.slane %v665, %v683
        %v687 = vsel %vm465, %v679, 0
        %689 = vmatprep.subr.mxu0 0.0
        %690 = vmatpush1.msra.mxu0 %v652
        %691 = vmatprep.subr.mxu0 0.0
        %692 = vmatpush1.msra.mxu0 %v653
        %693 = vmatprep.subr.mxu0 0.0
        %694 = vmatpush1.msra.mxu0 %v654
        %695 = vmatprep.subr.mxu0 0.0
        %696 = vmatpush1.msra.mxu0 %v655
        %697 = vmatprep.subr.mxu0 0.0
        %698 = vmatpush1.msra.mxu0 %v656
        %699 = vmatprep.subr.mxu0 0.0
        %700 = vmatpush1.msra.mxu0 %v657
        %701 = vmatprep.subr.mxu0 0.0
        %702 = vmatpush1.msra.mxu0 %v658
        %703 = vmatprep.subr.mxu0 0.0
        %704 = vmatpush1.msra.mxu0 %v659
        %705 = vmatprep.subr.mxu0 0.0
        %706 = vmatpush1.msra.mxu0 %v660
        %707 = vmatprep.subr.mxu0 0.0
        %708 = vmatpush1.msra.mxu0 %v661
        %709 = vmatprep.subr.mxu0 0.0
        %710 = vmatpush1.msra.mxu0 %v662
        %711 = vmatprep.subr.mxu0 0.0
        %712 = vmatpush1.msra.mxu0 %v663
        %713 = vmatprep.subr.mxu0 0.0
        %714 = vmatpush1.msra.mxu0 0.0
        %715 = vmatprep.subr.mxu0 0.0
        %716 = vmatpush1.msra.mxu0 0.0
        %717 = vmatprep.subr.mxu0 0.0
        %718 = vmatpush1.msra.mxu0 0.0
        %719 = vmatprep.subr.mxu0 0.0
        %720 = vmatpush1.msra.mxu0 0.0
        %721 = vmatprep.subr.mxu0 0.0
        %722 = vmatpush1.msra.mxu0 0.0
        %723 = vmatprep.subr.mxu0 0.0
        %724 = vmatpush1.msra.mxu0 0.0
        %725 = vmatprep.subr.mxu0 0.0
        %726 = vmatpush1.msra.mxu0 0.0
        %727 = vmatprep.subr.mxu0 0.0
        %728 = vmatpush1.msra.mxu0 0.0
        %729 = vmatprep.subr.mxu0 0.0
        %730 = vmatpush1.msra.mxu0 0.0
        %731 = vmatprep.subr.mxu0 0.0
        %732 = vmatpush1.msra.mxu0 0.0
        %733 = vmatprep.subr.mxu0 0.0
        %734 = vmatpush1.msra.mxu0 0.0
        %735 = vmatprep.subr.mxu0 0.0
        %736 = vmatpush1.msra.mxu0 0.0
        %737 = vmatprep.subr.mxu0 0.0
        %738 = vmatpush1.msra.mxu0 0.0
        %739 = vmatprep.subr.mxu0 0.0
        %740 = vmatpush1.msra.mxu0 0.0
        %741 = vmatprep.subr.mxu0 0.0
        %742 = vmatpush1.msra.mxu0 0.0
        %743 = vmatprep.subr.mxu0 0.0
        %744 = vmatpush1.msra.mxu0 0.0
        %745 = vmatprep.subr.mxu0 0.0
        %746 = vmatpush1.msra.mxu0 0.0
        %747 = vmatprep.subr.mxu0 0.0
        %748 = vmatpush1.msra.mxu0 0.0
        %749 = vmatprep.subr.mxu0 0.0
        %750 = vmatpush1.msra.mxu0 0.0
        %751 = vmatprep.subr.mxu0 0.0
        %752 = vmatpush1.msra.mxu0 0.0
        %753 = vmatprep.mubr.f32.mxu0 0.0
        %754 = vmatmul.mubr.f32.gmra.mrb[0].mxu0 %v687
        %v755 = vpop.f32.mrb[0].mxu0
        %v756 = vadd.f32 %v684, %v755
        %v757 = vpop.f32.mrb[0].mxu0
        %758 = vdwg.mxu0
        %vm759 = vcmp.gt.f32.partialorder %v756, 0.0
        %v760 = vmul.f32 %v756, 0.2
        %v761 = vsel %vm759, %v756, %v760
        %s762 = scalar_lea.vmem [#allocation4], 288
        %v763 = vld [vmem:[%s762] sm:$0xff]
        %v764 = vld [vmem:[%s762 + $0x8] sm:$0xff]
        %v765 = vld [vmem:[%s762 + $0x10] sm:$0xff]
        %v766 = vld [vmem:[%s762 + $0x18] sm:$0xff]
        %v767 = vld [vmem:[%s762 + $0x20] sm:$0xff]
        %v768 = vld [vmem:[%s762 + $0x28] sm:$0xff]
        %v769 = vld [vmem:[%s762 + $0x30] sm:$0xff]
        %v770 = vld [vmem:[%s762 + $0x38] sm:$0xff]
        %v771 = vld [vmem:[%s762 + $0x40] sm:$0xff]
        %v772 = vld [vmem:[%s762 + $0x48] sm:$0xff]
        %v773 = vld [vmem:[%s762 + $0x50] sm:$0xff]
        %v774 = vld [vmem:[%s762 + $0x58] sm:$0xff]
        %s775 = scalar_lea.vmem %s4, 3
        %v776 = vld [vmem:[%s775] sm:$0x1]
        %v777 = vrot.slane %v761, 7
        %v778 = vsel %vm333, 0.0, %v777
        %v779 = vrot.slane %v761, 1
        %v780 = vsel %vm336, 0.0, %v779
        %782 = vrot.lane.b32.xlu0 %v761, 32
        %v783 = vpop.permute.xlu0 %782
        %786 = vrot.lane.b32.xlu0 %v780, 64
        %v787 = vpop.permute.xlu0 %786
        %v789 = vsel %vm349, %v778, %v783
        %v790 = vsel %vm457, %v789, %v787
        %v792 = vlaneseq
        %v793 = vshrl.u32 %v792, 7
        %v794 = vsub.s32 0, %v793
        %v795 = vrot.slane %v776, %v794
        %v798 = vsel %vm465, %v790, 0
        %800 = vmatprep.subr.mxu0 0.0
        %801 = vmatpush1.msra.mxu0 %v763
        %802 = vmatprep.subr.mxu0 0.0
        %803 = vmatpush1.msra.mxu0 %v764
        %804 = vmatprep.subr.mxu0 0.0
        %805 = vmatpush1.msra.mxu0 %v765
        %806 = vmatprep.subr.mxu0 0.0
        %807 = vmatpush1.msra.mxu0 %v766
        %808 = vmatprep.subr.mxu0 0.0
        %809 = vmatpush1.msra.mxu0 %v767
        %810 = vmatprep.subr.mxu0 0.0
        %811 = vmatpush1.msra.mxu0 %v768
        %812 = vmatprep.subr.mxu0 0.0
        %813 = vmatpush1.msra.mxu0 %v769
        %814 = vmatprep.subr.mxu0 0.0
        %815 = vmatpush1.msra.mxu0 %v770
        %816 = vmatprep.subr.mxu0 0.0
        %817 = vmatpush1.msra.mxu0 %v771
        %818 = vmatprep.subr.mxu0 0.0
        %819 = vmatpush1.msra.mxu0 %v772
        %820 = vmatprep.subr.mxu0 0.0
        %821 = vmatpush1.msra.mxu0 %v773
        %822 = vmatprep.subr.mxu0 0.0
        %823 = vmatpush1.msra.mxu0 %v774
        %824 = vmatprep.subr.mxu0 0.0
        %825 = vmatpush1.msra.mxu0 0.0
        %826 = vmatprep.subr.mxu0 0.0
        %827 = vmatpush1.msra.mxu0 0.0
        %828 = vmatprep.subr.mxu0 0.0
        %829 = vmatpush1.msra.mxu0 0.0
        %830 = vmatprep.subr.mxu0 0.0
        %831 = vmatpush1.msra.mxu0 0.0
        %832 = vmatprep.subr.mxu0 0.0
        %833 = vmatpush1.msra.mxu0 0.0
        %834 = vmatprep.subr.mxu0 0.0
        %835 = vmatpush1.msra.mxu0 0.0
        %836 = vmatprep.subr.mxu0 0.0
        %837 = vmatpush1.msra.mxu0 0.0
        %838 = vmatprep.subr.mxu0 0.0
        %839 = vmatpush1.msra.mxu0 0.0
        %840 = vmatprep.subr.mxu0 0.0
        %841 = vmatpush1.msra.mxu0 0.0
        %842 = vmatprep.subr.mxu0 0.0
        %843 = vmatpush1.msra.mxu0 0.0
        %844 = vmatprep.subr.mxu0 0.0
        %845 = vmatpush1.msra.mxu0 0.0
        %846 = vmatprep.subr.mxu0 0.0
        %847 = vmatpush1.msra.mxu0 0.0
        %848 = vmatprep.subr.mxu0 0.0
        %849 = vmatpush1.msra.mxu0 0.0
        %850 = vmatprep.subr.mxu0 0.0
        %851 = vmatpush1.msra.mxu0 0.0
        %852 = vmatprep.subr.mxu0 0.0
        %853 = vmatpush1.msra.mxu0 0.0
        %854 = vmatprep.subr.mxu0 0.0
        %855 = vmatpush1.msra.mxu0 0.0
        %856 = vmatprep.subr.mxu0 0.0
        %857 = vmatpush1.msra.mxu0 0.0
        %858 = vmatprep.subr.mxu0 0.0
        %859 = vmatpush1.msra.mxu0 0.0
        %860 = vmatprep.subr.mxu0 0.0
        %861 = vmatpush1.msra.mxu0 0.0
        %862 = vmatprep.subr.mxu0 0.0
        %863 = vmatpush1.msra.mxu0 0.0
        %864 = vmatprep.mubr.f32.mxu0 0.0
        %865 = vmatmul.mubr.f32.gmra.mrb[0].mxu0 %v798
        %v866 = vpop.f32.mrb[0].mxu0
        %v867 = vadd.f32 %v795, %v866
        %v868 = vpop.f32.mrb[0].mxu0
        %869 = vdwg.mxu0
        %v870 = vadd.f32 %v650, %v867
        %v871 = vrot.slane %v870, 7
        %v872 = vsel %vm333, 0.0, %v871
        %v873 = vrot.slane %v870, 1
        %v874 = vsel %vm336, 0.0, %v873
        %876 = vrot.lane.b32.xlu0 %v870, 32
        %v877 = vpop.permute.xlu0 %876
        %880 = vrot.lane.b32.xlu0 %v874, 64
        %v881 = vpop.permute.xlu0 %880
        %v883 = vsel %vm349, %v872, %v877
        %v884 = vsel %vm457, %v883, %v881
        %v885 = vld [vmem:[#allocation6] sm:$0xff]
        %v886 = vld [vmem:[#allocation6 + $0x8] sm:$0xff]
        %v887 = vld [vmem:[#allocation6 + $0x10] sm:$0xff]
        %v888 = vld [vmem:[#allocation6 + $0x18] sm:$0xff]
        %v889 = vld [vmem:[#allocation6 + $0x20] sm:$0xff]
        %v890 = vld [vmem:[#allocation6 + $0x28] sm:$0xff]
        %v891 = vld [vmem:[#allocation6 + $0x30] sm:$0xff]
        %v892 = vld [vmem:[#allocation6 + $0x38] sm:$0xff]
        %v893 = vld [vmem:[#allocation6 + $0x40] sm:$0xff]
        %v894 = vld [vmem:[#allocation6 + $0x48] sm:$0xff]
        %v895 = vld [vmem:[#allocation6 + $0x50] sm:$0xff]
        %v896 = vld [vmem:[#allocation6 + $0x58] sm:$0xff]
        %v897 = vld [vmem:[%s6] sm:$0x1]
        %v899 = vlaneseq
        %v900 = vshrl.u32 %v899, 7
        %v901 = vsub.s32 0, %v900
        %v902 = vrot.slane %v897, %v901
        %v905 = vsel %vm465, %v884, 0
        %907 = vmatprep.subr.mxu0 0.0
        %908 = vmatpush1.msra.mxu0 %v885
        %909 = vmatprep.subr.mxu0 0.0
        %910 = vmatpush1.msra.mxu0 %v886
        %911 = vmatprep.subr.mxu0 0.0
        %912 = vmatpush1.msra.mxu0 %v887
        %913 = vmatprep.subr.mxu0 0.0
        %914 = vmatpush1.msra.mxu0 %v888
        %915 = vmatprep.subr.mxu0 0.0
        %916 = vmatpush1.msra.mxu0 %v889
        %917 = vmatprep.subr.mxu0 0.0
        %918 = vmatpush1.msra.mxu0 %v890
        %919 = vmatprep.subr.mxu0 0.0
        %920 = vmatpush1.msra.mxu0 %v891
        %921 = vmatprep.subr.mxu0 0.0
        %922 = vmatpush1.msra.mxu0 %v892
        %923 = vmatprep.subr.mxu0 0.0
        %924 = vmatpush1.msra.mxu0 %v893
        %925 = vmatprep.subr.mxu0 0.0
        %926 = vmatpush1.msra.mxu0 %v894
        %927 = vmatprep.subr.mxu0 0.0
        %928 = vmatpush1.msra.mxu0 %v895
        %929 = vmatprep.subr.mxu0 0.0
        %930 = vmatpush1.msra.mxu0 %v896
        %931 = vmatprep.subr.mxu0 0.0
        %932 = vmatpush1.msra.mxu0 0.0
        %933 = vmatprep.subr.mxu0 0.0
        %934 = vmatpush1.msra.mxu0 0.0
        %935 = vmatprep.subr.mxu0 0.0
        %936 = vmatpush1.msra.mxu0 0.0
        %937 = vmatprep.subr.mxu0 0.0
        %938 = vmatpush1.msra.mxu0 0.0
        %939 = vmatprep.subr.mxu0 0.0
        %940 = vmatpush1.msra.mxu0 0.0
        %941 = vmatprep.subr.mxu0 0.0
        %942 = vmatpush1.msra.mxu0 0.0
        %943 = vmatprep.subr.mxu0 0.0
        %944 = vmatpush1.msra.mxu0 0.0
        %945 = vmatprep.subr.mxu0 0.0
        %946 = vmatpush1.msra.mxu0 0.0
        %947 = vmatprep.subr.mxu0 0.0
        %948 = vmatpush1.msra.mxu0 0.0
        %949 = vmatprep.subr.mxu0 0.0
        %950 = vmatpush1.msra.mxu0 0.0
        %951 = vmatprep.subr.mxu0 0.0
        %952 = vmatpush1.msra.mxu0 0.0
        %953 = vmatprep.subr.mxu0 0.0
        %954 = vmatpush1.msra.mxu0 0.0
        %955 = vmatprep.subr.mxu0 0.0
        %956 = vmatpush1.msra.mxu0 0.0
        %957 = vmatprep.subr.mxu0 0.0
        %958 = vmatpush1.msra.mxu0 0.0
        %959 = vmatprep.subr.mxu0 0.0
        %960 = vmatpush1.msra.mxu0 0.0
        %961 = vmatprep.subr.mxu0 0.0
        %962 = vmatpush1.msra.mxu0 0.0
        %963 = vmatprep.subr.mxu0 0.0
        %964 = vmatpush1.msra.mxu0 0.0
        %965 = vmatprep.subr.mxu0 0.0
        %966 = vmatpush1.msra.mxu0 0.0
        %967 = vmatprep.subr.mxu0 0.0
        %968 = vmatpush1.msra.mxu0 0.0
        %969 = vmatprep.subr.mxu0 0.0
        %970 = vmatpush1.msra.mxu0 0.0
        %971 = vmatprep.mubr.f32.mxu0 0.0
        %972 = vmatmul.mubr.f32.gmra.mrb[0].mxu0 %v905
        %v973 = vpop.f32.mrb[0].mxu0
        %v974 = vadd.f32 %v902, %v973
        %v975 = vpop.f32.mrb[0].mxu0
        %976 = vdwg.mxu0
        %vm977 = vcmp.gt.f32.partialorder %v974, 0.0
        %v978 = vmul.f32 %v974, 0.2
        %v979 = vsel %vm977, %v974, %v978
        %980 = vst.msk [vmem:[%s322] sm:$0xff] %vm457, %v979
        %p981 = scmp.lt.s32.totalorder %s22, 1
        %s982 = scalar_select %p981, %s22, 1
        %s983 = smul.addr %s982, 8
        %s984 = scalar_lea.vmem %s7, %s983
        // Predicated region
        $region61: #{_lambda_.2} parent=47 // pred_check
          %p985 = pneg %p192
        $region62: #{_lambda_.2} parent=47 // pred_check_branch
          %987 = sbr.rel (%p985) target = $region64
        $region63: #{_lambda_.2} parent=47 // pred_region
          _
        $region64: #{_lambda_.2} parent=47 // pred_fallthru
          _
      $region48: #{_lambda_.2} parent=5 // pred_fallthru
        _
      %p988 = scmp.le.s32.totalorder 2, %s17
      // Predicated region
      $region65: #{_lambda_.2} parent=5 // pred_check
        %p989 = pneg %p988
      $region66: #{_lambda_.2} parent=5 // pred_check_branch
        %991 = sbr.rel (%p989) target = $region68
      $region67: #{_lambda_.2} parent=5 // pred_region
        %s992 = ssub.s32 %s17, 2
        // Predicated region
        $region69: #{_lambda_.2} parent=67 // pred_check
          %p993 = pneg %p198
        $region70: #{_lambda_.2} parent=67 // pred_check_branch
          %995 = sbr.rel (%p993) target = $region72
        $region71: #{_lambda_.2} parent=67 // pred_region
          %p996 = scmp.lt.s32.totalorder %s23, 1
          %s997 = scalar_select %p996, %s23, 1
          %s998 = smul.addr %s997, 8
          %s999 = scalar_lea.vmem %s7, %s998
        $region72: #{_lambda_.2} parent=67 // pred_fallthru
          _
      $region68: #{_lambda_.2} parent=5 // pred_fallthru
        _
    $region6: #{_lambda_.2} parent=1 // loop_footer
      %s21 = sadd.s32 1, %s17
    $region7: #{_lambda_.2} parent=1 // loop_footer_branch
      %16 = sbr.rel target = $region3
    $region8: #{_lambda_.2} parent=1 // loop_exit
      _
    %1000 = vsyncpa [#allocation3], 1
    %s1001 = scalar_lea.sflag [#allocation3], 1
    %1002 = vsyncpa %s1001, 1
    %1003 = vsyncpa [#allocation5], 1

// kernel: _lambda_.3
$region0: #{_lambda_.3}
  #allocation0 [shape = 'u32[]', space=smem, size = 0x4, offset = 0x4, fixed_abs, tag = 'smem constant byte address 0x4 - core index']
  #allocation1 [shape = 'u32[144,128]{1,0:T(1,128)}', space=vmem, size = 0x12000, scoped, tag = 'internal scratch']
  %s0 = inlined_call_operand.vmem [shape: f32[2,16,32], index: 0, kind: input, shape index: {}]
  %s1 = inlined_call_operand.vmem [shape: f32[16,32], index: 1, kind: input, shape index: {}]
  %s2 = inlined_call_operand.vmem [shape: f32[2,32,96], index: 2, kind: input, shape index: {}]
  %s3 = inlined_call_operand.vmem [shape: f32[2,1,96], index: 3, kind: input, shape index: {}]
  %s4 = inlined_call_operand.vmem [shape: f32[2,32,32], index: 4, kind: input, shape index: {}]
  %s5 = inlined_call_operand.vmem [shape: f32[2,1,32], index: 5, kind: input, shape index: {}, may-alias: {5,10}]
  %s6 = inlined_call_operand.vmem [shape: f32[2,4,1,32], index: 6, kind: input, shape index: {}]
  %s7 = inlined_call_operand.vmem [shape: f32[2,32,64], index: 7, kind: input, shape index: {}]
  %s8 = inlined_call_operand.vmem [shape: f32[2,1,64], index: 8, kind: input, shape index: {}]
  %s9 = inlined_call_operand.vmem [shape: f32[2,64,32], index: 9, kind: input, shape index: {}]
  %s10 = inlined_call_operand.vmem [shape: f32[2,1,32], index: 10, kind: input, shape index: {}, may-alias: {5,10}]
  %s11 = inlined_call_operand.vmem [shape: f32[32,16], index: 11, kind: input, shape index: {}]
  %s12 = inlined_call_operand.vmem [shape: f32[1,16], index: 12, kind: input, shape index: {}, may-alias: {12,14}]
  %s13 = inlined_call_operand.vmem [shape: f32[16,16], index: 13, kind: input, shape index: {}]
  %s14 = inlined_call_operand.vmem [shape: f32[1,16], index: 14, kind: input, shape index: {}, may-alias: {12,14}]
  %s15 = inlined_call_operand.hbm [shape: f32[2,16,16], index: 15, kind: output, shape index: {}]
  %s16 = sld [smem:[#allocation0]]
  $region93: #{_lambda_.3} parent=0
    _
  %s18 = ssub.s32 1, %s16
  %s19 = scalar_select 0, %s18, %s16
  $region1: #{_lambda_.3} parent=0
    #allocation2 [shape = 'u8[16384]{0}', space=vmem, size = 0x4000, scoped, tag = 'output window, operand 0']
    #allocation3 [shape = 's32[2]{0}', space=sflag, size = 0x8, scoped, tag = 'scoped memory for _lambda_.3']
    %20 = vsyncpa [#allocation3], 0
    %s21 = scalar_lea.sflag [#allocation3], 1
    %22 = vsyncpa %s21, 0
    loop: start=0, step=1, limit=4
    $region2: #{_lambda_.3} parent=1 // loop_pre_header
      _
    $region3: #{_lambda_.3} parent=1 // loop_header
      %s24 = sphi 0, %s28
      %p25 = scmp.ge.s32.totalorder %s24, 4
      %s34 = sphi 0, %s36
      %s37 = sphi 0, %s34
      %s38 = sphi 0, %s37
      %s54 = sphi 0, %s38
      %s58 = sphi 0, %s58
      %s60 = sphi 0, %s58
      %s61 = sphi 0, %s60
      %s75 = sphi 0, %s61
      %s79 = sphi 0, %s79
      %s81 = sphi 0, %s79
      %s82 = sphi 0, %s81
      %s96 = sphi 0, %s82
      %s100 = sphi 0, %s100
      %s102 = sphi 0, %s100
      %s103 = sphi 0, %s102
      %s117 = sphi 0, %s103
      %s121 = sphi 0, %s121
      %s123 = sphi 0, %s121
      %s124 = sphi 0, %s123
      %s138 = sphi 0, %s124
      %s142 = sphi 0, %s142
      %s144 = sphi 0, %s142
      %s145 = sphi 0, %s144
      %s159 = sphi 0, %s145
      %s163 = sphi 0, %s163
      %s165 = sphi 0, %s163
      %s166 = sphi 0, %s165
      %s180 = sphi 0, %s166
      %s184 = sphi 0, %s184
      %s186 = sphi 0, %s184
      %s187 = sphi 0, %s186
      %s201 = sphi 0, %s187
      %s205 = sphi 0, %s205
      %s207 = sphi 0, %s205
      %s208 = sphi 0, %s207
      %s222 = sphi 0, %s208
      %s226 = sphi 0, %s226
      %s228 = sphi 0, %s226
      %s229 = sphi 0, %s228
      %s243 = sphi 0, %s229
      %s247 = sphi 0, %s247
      %s249 = sphi 0, %s247
      %s250 = sphi 0, %s249
      %s264 = sphi 0, %s250
      %s268 = sphi 0, %s268
      %s270 = sphi 0, %s268
      %s271 = sphi 0, %s270
      %s285 = sphi 0, %s271
      %s289 = sphi 0, %s289
      %s291 = sphi 0, %s289
      %s292 = sphi 0, %s291
      %s306 = sphi 0, %s292
      %s310 = sphi 0, %s310
      %s312 = sphi 0, %s310
      %s313 = sphi 0, %s312
      %s327 = sphi 0, %s313
      %s331 = sphi 0, %s331
      %s333 = sphi 0, %s331
      %s334 = sphi 0, %s333
      %s348 = sphi 0, %s334
      %s354 = sphi 0, %s356
      %s357 = sphi 0, %s354
      %s358 = sphi 0, %s357
      %s374 = sphi 0, %s358
    $region4: #{_lambda_.3} parent=1 // loop_header_branch
      %27 = sbr.rel (%p25) target = $region8
    $region5: #{_lambda_.3} parent=1 // loop_body
      %s29 = ssub.s32 %s24, 1
      %s30 = ssub.s32 %s24, 2
      %s31 = sadd.s32 %s24, 1
      %s32 = ssub.s32 %s24, %s31
      %p33 = scmp.eq.s32.totalorder %s32, 0
      %s35 = sadd.s32 %s34, 1
      %s36 = scalar_select %p33, %s34, %s35
      %p39 = pneg %p33
      %p40 = scmp.eq.s32.totalorder %s24, 1
      %p41 = por %p39, %p40
      %p42 = scmp.ne.s32.totalorder %s34, %s37
      %p43 = scmp.eq.s32.totalorder %s24, 0
      %p44 = por %p42, %p43
      %p45 = scmp.ne.s32.totalorder %s34, %s37
      %p46 = scmp.eq.s32.totalorder %s29, 1
      %p47 = por %p45, %p46
      %p48 = scmp.ne.s32.totalorder %s37, %s38
      %p49 = scmp.eq.s32.totalorder %s29, 0
      %p50 = por %p48, %p49
      %p51 = scmp.ne.s32.totalorder %s37, %s38
      %p52 = scmp.eq.s32.totalorder %s30, 1
      %p53 = por %p51, %p52
      %p55 = scmp.ne.s32.totalorder %s38, %s54
      %p56 = scmp.eq.s32.totalorder %s30, 0
      %p57 = por %p55, %p56
      %s59 = sadd.s32 %s58, 1
      %p62 = scmp.eq.s32.totalorder %s24, 1
      %p63 = scmp.ne.s32.totalorder %s58, %s60
      %p64 = scmp.eq.s32.totalorder %s24, 0
      %p65 = por %p63, %p64
      %p66 = scmp.ne.s32.totalorder %s58, %s60
      %p67 = scmp.eq.s32.totalorder %s29, 1
      %p68 = por %p66, %p67
      %p69 = scmp.ne.s32.totalorder %s60, %s61
      %p70 = scmp.eq.s32.totalorder %s29, 0
      %p71 = por %p69, %p70
      %p72 = scmp.ne.s32.totalorder %s60, %s61
      %p73 = scmp.eq.s32.totalorder %s30, 1
      %p74 = por %p72, %p73
      %p76 = scmp.ne.s32.totalorder %s61, %s75
      %p77 = scmp.eq.s32.totalorder %s30, 0
      %p78 = por %p76, %p77
      %s80 = sadd.s32 %s79, 1
      %p83 = scmp.eq.s32.totalorder %s24, 1
      %p84 = scmp.ne.s32.totalorder %s79, %s81
      %p85 = scmp.eq.s32.totalorder %s24, 0
      %p86 = por %p84, %p85
      %p87 = scmp.ne.s32.totalorder %s79, %s81
      %p88 = scmp.eq.s32.totalorder %s29, 1
      %p89 = por %p87, %p88
      %p90 = scmp.ne.s32.totalorder %s81, %s82
      %p91 = scmp.eq.s32.totalorder %s29, 0
      %p92 = por %p90, %p91
      %p93 = scmp.ne.s32.totalorder %s81, %s82
      %p94 = scmp.eq.s32.totalorder %s30, 1
      %p95 = por %p93, %p94
      %p97 = scmp.ne.s32.totalorder %s82, %s96
      %p98 = scmp.eq.s32.totalorder %s30, 0
      %p99 = por %p97, %p98
      %s101 = sadd.s32 %s100, 1
      %p104 = scmp.eq.s32.totalorder %s24, 1
      %p105 = scmp.ne.s32.totalorder %s100, %s102
      %p106 = scmp.eq.s32.totalorder %s24, 0
      %p107 = por %p105, %p106
      %p108 = scmp.ne.s32.totalorder %s100, %s102
      %p109 = scmp.eq.s32.totalorder %s29, 1
      %p110 = por %p108, %p109
      %p111 = scmp.ne.s32.totalorder %s102, %s103
      %p112 = scmp.eq.s32.totalorder %s29, 0
      %p113 = por %p111, %p112
      %p114 = scmp.ne.s32.totalorder %s102, %s103
      %p115 = scmp.eq.s32.totalorder %s30, 1
      %p116 = por %p114, %p115
      %p118 = scmp.ne.s32.totalorder %s103, %s117
      %p119 = scmp.eq.s32.totalorder %s30, 0
      %p120 = por %p118, %p119
      %s122 = sadd.s32 %s121, 1
      %p125 = scmp.eq.s32.totalorder %s24, 1
      %p126 = scmp.ne.s32.totalorder %s121, %s123
      %p127 = scmp.eq.s32.totalorder %s24, 0
      %p128 = por %p126, %p127
      %p129 = scmp.ne.s32.totalorder %s121, %s123
      %p130 = scmp.eq.s32.totalorder %s29, 1
      %p131 = por %p129, %p130
      %p132 = scmp.ne.s32.totalorder %s123, %s124
      %p133 = scmp.eq.s32.totalorder %s29, 0
      %p134 = por %p132, %p133
      %p135 = scmp.ne.s32.totalorder %s123, %s124
      %p136 = scmp.eq.s32.totalorder %s30, 1
      %p137 = por %p135, %p136
      %p139 = scmp.ne.s32.totalorder %s124, %s138
      %p140 = scmp.eq.s32.totalorder %s30, 0
      %p141 = por %p139, %p140
      %s143 = sadd.s32 %s142, 1
      %p146 = scmp.eq.s32.totalorder %s24, 1
      %p147 = scmp.ne.s32.totalorder %s142, %s144
      %p148 = scmp.eq.s32.totalorder %s24, 0
      %p149 = por %p147, %p148
      %p150 = scmp.ne.s32.totalorder %s142, %s144
      %p151 = scmp.eq.s32.totalorder %s29, 1
      %p152 = por %p150, %p151
      %p153 = scmp.ne.s32.totalorder %s144, %s145
      %p154 = scmp.eq.s32.totalorder %s29, 0
      %p155 = por %p153, %p154
      %p156 = scmp.ne.s32.totalorder %s144, %s145
      %p157 = scmp.eq.s32.totalorder %s30, 1
      %p158 = por %p156, %p157
      %p160 = scmp.ne.s32.totalorder %s145, %s159
      %p161 = scmp.eq.s32.totalorder %s30, 0
      %p162 = por %p160, %p161
      %s164 = sadd.s32 %s163, 1
      %p167 = scmp.eq.s32.totalorder %s24, 1
      %p168 = scmp.ne.s32.totalorder %s163, %s165
      %p169 = scmp.eq.s32.totalorder %s24, 0
      %p170 = por %p168, %p169
      %p171 = scmp.ne.s32.totalorder %s163, %s165
      %p172 = scmp.eq.s32.totalorder %s29, 1
      %p173 = por %p171, %p172
      %p174 = scmp.ne.s32.totalorder %s165, %s166
      %p175 = scmp.eq.s32.totalorder %s29, 0
      %p176 = por %p174, %p175
      %p177 = scmp.ne.s32.totalorder %s165, %s166
      %p178 = scmp.eq.s32.totalorder %s30, 1
      %p179 = por %p177, %p178
      %p181 = scmp.ne.s32.totalorder %s166, %s180
      %p182 = scmp.eq.s32.totalorder %s30, 0
      %p183 = por %p181, %p182
      %s185 = sadd.s32 %s184, 1
      %p188 = scmp.eq.s32.totalorder %s24, 1
      %p189 = scmp.ne.s32.totalorder %s184, %s186
      %p190 = scmp.eq.s32.totalorder %s24, 0
      %p191 = por %p189, %p190
      %p192 = scmp.ne.s32.totalorder %s184, %s186
      %p193 = scmp.eq.s32.totalorder %s29, 1
      %p194 = por %p192, %p193
      %p195 = scmp.ne.s32.totalorder %s186, %s187
      %p196 = scmp.eq.s32.totalorder %s29, 0
      %p197 = por %p195, %p196
      %p198 = scmp.ne.s32.totalorder %s186, %s187
      %p199 = scmp.eq.s32.totalorder %s30, 1
      %p200 = por %p198, %p199
      %p202 = scmp.ne.s32.totalorder %s187, %s201
      %p203 = scmp.eq.s32.totalorder %s30, 0
      %p204 = por %p202, %p203
      %s206 = sadd.s32 %s205, 1
      %p209 = scmp.eq.s32.totalorder %s24, 1
      %p210 = scmp.ne.s32.totalorder %s205, %s207
      %p211 = scmp.eq.s32.totalorder %s24, 0
      %p212 = por %p210, %p211
      %p213 = scmp.ne.s32.totalorder %s205, %s207
      %p214 = scmp.eq.s32.totalorder %s29, 1
      %p215 = por %p213, %p214
      %p216 = scmp.ne.s32.totalorder %s207, %s208
      %p217 = scmp.eq.s32.totalorder %s29, 0
      %p218 = por %p216, %p217
      %p219 = scmp.ne.s32.totalorder %s207, %s208
      %p220 = scmp.eq.s32.totalorder %s30, 1
      %p221 = por %p219, %p220
      %p223 = scmp.ne.s32.totalorder %s208, %s222
      %p224 = scmp.eq.s32.totalorder %s30, 0
      %p225 = por %p223, %p224
      %s227 = sadd.s32 %s226, 1
      %p230 = scmp.eq.s32.totalorder %s24, 1
      %p231 = scmp.ne.s32.totalorder %s226, %s228
      %p232 = scmp.eq.s32.totalorder %s24, 0
      %p233 = por %p231, %p232
      %p234 = scmp.ne.s32.totalorder %s226, %s228
      %p235 = scmp.eq.s32.totalorder %s29, 1
      %p236 = por %p234, %p235
      %p237 = scmp.ne.s32.totalorder %s228, %s229
      %p238 = scmp.eq.s32.totalorder %s29, 0
      %p239 = por %p237, %p238
      %p240 = scmp.ne.s32.totalorder %s228, %s229
      %p241 = scmp.eq.s32.totalorder %s30, 1
      %p242 = por %p240, %p241
      %p244 = scmp.ne.s32.totalorder %s229, %s243
      %p245 = scmp.eq.s32.totalorder %s30, 0
      %p246 = por %p244, %p245
      %s248 = sadd.s32 %s247, 1
      %p251 = scmp.eq.s32.totalorder %s24, 1
      %p252 = scmp.ne.s32.totalorder %s247, %s249
      %p253 = scmp.eq.s32.totalorder %s24, 0
      %p254 = por %p252, %p253
      %p255 = scmp.ne.s32.totalorder %s247, %s249
      %p256 = scmp.eq.s32.totalorder %s29, 1
      %p257 = por %p255, %p256
      %p258 = scmp.ne.s32.totalorder %s249, %s250
      %p259 = scmp.eq.s32.totalorder %s29, 0
      %p260 = por %p258, %p259
      %p261 = scmp.ne.s32.totalorder %s249, %s250
      %p262 = scmp.eq.s32.totalorder %s30, 1
      %p263 = por %p261, %p262
      %p265 = scmp.ne.s32.totalorder %s250, %s264
      %p266 = scmp.eq.s32.totalorder %s30, 0
      %p267 = por %p265, %p266
      %s269 = sadd.s32 %s268, 1
      %p272 = scmp.eq.s32.totalorder %s24, 1
      %p273 = scmp.ne.s32.totalorder %s268, %s270
      %p274 = scmp.eq.s32.totalorder %s24, 0
      %p275 = por %p273, %p274
      %p276 = scmp.ne.s32.totalorder %s268, %s270
      %p277 = scmp.eq.s32.totalorder %s29, 1
      %p278 = por %p276, %p277
      %p279 = scmp.ne.s32.totalorder %s270, %s271
      %p280 = scmp.eq.s32.totalorder %s29, 0
      %p281 = por %p279, %p280
      %p282 = scmp.ne.s32.totalorder %s270, %s271
      %p283 = scmp.eq.s32.totalorder %s30, 1
      %p284 = por %p282, %p283
      %p286 = scmp.ne.s32.totalorder %s271, %s285
      %p287 = scmp.eq.s32.totalorder %s30, 0
      %p288 = por %p286, %p287
      %s290 = sadd.s32 %s289, 1
      %p293 = scmp.eq.s32.totalorder %s24, 1
      %p294 = scmp.ne.s32.totalorder %s289, %s291
      %p295 = scmp.eq.s32.totalorder %s24, 0
      %p296 = por %p294, %p295
      %p297 = scmp.ne.s32.totalorder %s289, %s291
      %p298 = scmp.eq.s32.totalorder %s29, 1
      %p299 = por %p297, %p298
      %p300 = scmp.ne.s32.totalorder %s291, %s292
      %p301 = scmp.eq.s32.totalorder %s29, 0
      %p302 = por %p300, %p301
      %p303 = scmp.ne.s32.totalorder %s291, %s292
      %p304 = scmp.eq.s32.totalorder %s30, 1
      %p305 = por %p303, %p304
      %p307 = scmp.ne.s32.totalorder %s292, %s306
      %p308 = scmp.eq.s32.totalorder %s30, 0
      %p309 = por %p307, %p308
      %s311 = sadd.s32 %s310, 1
      %p314 = scmp.eq.s32.totalorder %s24, 1
      %p315 = scmp.ne.s32.totalorder %s310, %s312
      %p316 = scmp.eq.s32.totalorder %s24, 0
      %p317 = por %p315, %p316
      %p318 = scmp.ne.s32.totalorder %s310, %s312
      %p319 = scmp.eq.s32.totalorder %s29, 1
      %p320 = por %p318, %p319
      %p321 = scmp.ne.s32.totalorder %s312, %s313
      %p322 = scmp.eq.s32.totalorder %s29, 0
      %p323 = por %p321, %p322
      %p324 = scmp.ne.s32.totalorder %s312, %s313
      %p325 = scmp.eq.s32.totalorder %s30, 1
      %p326 = por %p324, %p325
      %p328 = scmp.ne.s32.totalorder %s313, %s327
      %p329 = scmp.eq.s32.totalorder %s30, 0
      %p330 = por %p328, %p329
      %s332 = sadd.s32 %s331, 1
      %p335 = scmp.eq.s32.totalorder %s24, 1
      %p336 = scmp.ne.s32.totalorder %s331, %s333
      %p337 = scmp.eq.s32.totalorder %s24, 0
      %p338 = por %p336, %p337
      %p339 = scmp.ne.s32.totalorder %s331, %s333
      %p340 = scmp.eq.s32.totalorder %s29, 1
      %p341 = por %p339, %p340
      %p342 = scmp.ne.s32.totalorder %s333, %s334
      %p343 = scmp.eq.s32.totalorder %s29, 0
      %p344 = por %p342, %p343
      %p345 = scmp.ne.s32.totalorder %s333, %s334
      %p346 = scmp.eq.s32.totalorder %s30, 1
      %p347 = por %p345, %p346
      %p349 = scmp.ne.s32.totalorder %s334, %s348
      %p350 = scmp.eq.s32.totalorder %s30, 0
      %p351 = por %p349, %p350
      %s352 = ssub.s32 %s24, %s31
      %p353 = scmp.eq.s32.totalorder %s352, 0
      %s355 = sadd.s32 %s354, 1
      %s356 = scalar_select %p353, %s354, %s355
      %p359 = pneg %p353
      %p360 = scmp.eq.s32.totalorder %s24, 1
      %p361 = por %p359, %p360
      %p362 = scmp.ne.s32.totalorder %s354, %s357
      %p363 = scmp.eq.s32.totalorder %s24, 0
      %p364 = por %p362, %p363
      %p365 = scmp.ne.s32.totalorder %s354, %s357
      %p366 = scmp.eq.s32.totalorder %s29, 1
      %p367 = por %p365, %p366
      %p368 = scmp.ne.s32.totalorder %s357, %s358
      %p369 = scmp.eq.s32.totalorder %s29, 0
      %p370 = por %p368, %p369
      %p371 = scmp.ne.s32.totalorder %s357, %s358
      %p372 = scmp.eq.s32.totalorder %s30, 1
      %p373 = por %p371, %p372
      %p375 = scmp.ne.s32.totalorder %s358, %s374
      %p376 = scmp.eq.s32.totalorder %s30, 0
      %p377 = por %p375, %p376
      %p378 = scmp.le.s32.totalorder 1, %s24
      %p379 = scmp.lt.s32.totalorder %s24, 3
      %p380 = pnand %p378, %p379
      %p381 = pneg %p380
      // Predicated region
      $region9: #{_lambda_.3} parent=5 // pred_check
        _
      $region10: #{_lambda_.3} parent=5 // pred_check_branch
        %383 = sbr.rel (%p380) target = $region12
      $region11: #{_lambda_.3} parent=5 // pred_region
        %s384 = ssub.s32 %s24, 1
        // Predicated region
        $region13: #{_lambda_.3} parent=11 // pred_check
          %p385 = pneg %p71
        $region14: #{_lambda_.3} parent=11 // pred_check_branch
          %387 = sbr.rel (%p385) target = $region16
        $region15: #{_lambda_.3} parent=11 // pred_region
          _
        $region16: #{_lambda_.3} parent=11 // pred_fallthru
          _
        // Predicated region
        $region17: #{_lambda_.3} parent=11 // pred_check
          %p388 = pneg %p92
        $region18: #{_lambda_.3} parent=11 // pred_check_branch
          %390 = sbr.rel (%p388) target = $region20
        $region19: #{_lambda_.3} parent=11 // pred_region
          _
        $region20: #{_lambda_.3} parent=11 // pred_fallthru
          _
        // Predicated region
        $region21: #{_lambda_.3} parent=11 // pred_check
          %p391 = pneg %p113
        $region22: #{_lambda_.3} parent=11 // pred_check_branch
          %393 = sbr.rel (%p391) target = $region24
        $region23: #{_lambda_.3} parent=11 // pred_region
          _
        $region24: #{_lambda_.3} parent=11 // pred_fallthru
          _
        // Predicated region
        $region25: #{_lambda_.3} parent=11 // pred_check
          %p394 = pneg %p134
        $region26: #{_lambda_.3} parent=11 // pred_check_branch
          %396 = sbr.rel (%p394) target = $region28
        $region27: #{_lambda_.3} parent=11 // pred_region
          _
        $region28: #{_lambda_.3} parent=11 // pred_fallthru
          _
        // Predicated region
        $region29: #{_lambda_.3} parent=11 // pred_check
          %p397 = pneg %p155
        $region30: #{_lambda_.3} parent=11 // pred_check_branch
          %399 = sbr.rel (%p397) target = $region32
        $region31: #{_lambda_.3} parent=11 // pred_region
          _
        $region32: #{_lambda_.3} parent=11 // pred_fallthru
          _
        // Predicated region
        $region33: #{_lambda_.3} parent=11 // pred_check
          %p400 = pneg %p176
        $region34: #{_lambda_.3} parent=11 // pred_check_branch
          %402 = sbr.rel (%p400) target = $region36
        $region35: #{_lambda_.3} parent=11 // pred_region
          _
        $region36: #{_lambda_.3} parent=11 // pred_fallthru
          _
        // Predicated region
        $region37: #{_lambda_.3} parent=11 // pred_check
          %p403 = pneg %p197
        $region38: #{_lambda_.3} parent=11 // pred_check_branch
          %405 = sbr.rel (%p403) target = $region40
        $region39: #{_lambda_.3} parent=11 // pred_region
          _
        $region40: #{_lambda_.3} parent=11 // pred_fallthru
          _
        // Predicated region
        $region41: #{_lambda_.3} parent=11 // pred_check
          %p406 = pneg %p218
        $region42: #{_lambda_.3} parent=11 // pred_check_branch
          %408 = sbr.rel (%p406) target = $region44
        $region43: #{_lambda_.3} parent=11 // pred_region
          _
        $region44: #{_lambda_.3} parent=11 // pred_fallthru
          _
        // Predicated region
        $region45: #{_lambda_.3} parent=11 // pred_check
          %p409 = pneg %p239
        $region46: #{_lambda_.3} parent=11 // pred_check_branch
          %411 = sbr.rel (%p409) target = $region48
        $region47: #{_lambda_.3} parent=11 // pred_region
          _
        $region48: #{_lambda_.3} parent=11 // pred_fallthru
          _
        // Predicated region
        $region49: #{_lambda_.3} parent=11 // pred_check
          %p412 = pneg %p260
        $region50: #{_lambda_.3} parent=11 // pred_check_branch
          %414 = sbr.rel (%p412) target = $region52
        $region51: #{_lambda_.3} parent=11 // pred_region
          _
        $region52: #{_lambda_.3} parent=11 // pred_fallthru
          _
        // Predicated region
        $region53: #{_lambda_.3} parent=11 // pred_check
          %p415 = pneg %p281
        $region54: #{_lambda_.3} parent=11 // pred_check_branch
          %417 = sbr.rel (%p415) target = $region56
        $region55: #{_lambda_.3} parent=11 // pred_region
          _
        $region56: #{_lambda_.3} parent=11 // pred_fallthru
          _
        // Predicated region
        $region57: #{_lambda_.3} parent=11 // pred_check
          %p418 = pneg %p302
        $region58: #{_lambda_.3} parent=11 // pred_check_branch
          %420 = sbr.rel (%p418) target = $region60
        $region59: #{_lambda_.3} parent=11 // pred_region
          _
        $region60: #{_lambda_.3} parent=11 // pred_fallthru
          _
        // Predicated region
        $region61: #{_lambda_.3} parent=11 // pred_check
          %p421 = pneg %p323
        $region62: #{_lambda_.3} parent=11 // pred_check_branch
          %423 = sbr.rel (%p421) target = $region64
        $region63: #{_lambda_.3} parent=11 // pred_region
          _
        $region64: #{_lambda_.3} parent=11 // pred_fallthru
          _
        // Predicated region
        $region65: #{_lambda_.3} parent=11 // pred_check
          %p424 = pneg %p344
        $region66: #{_lambda_.3} parent=11 // pred_check_branch
          %426 = sbr.rel (%p424) target = $region68
        $region67: #{_lambda_.3} parent=11 // pred_region
          _
        $region68: #{_lambda_.3} parent=11 // pred_fallthru
          _
      $region12: #{_lambda_.3} parent=5 // pred_fallthru
        _
      %p427 = scmp.lt.s32.totalorder %s24, 2
      // Predicated region
      $region69: #{_lambda_.3} parent=5 // pred_check
        %p428 = pneg %p427
      $region70: #{_lambda_.3} parent=5 // pred_check_branch
        %430 = sbr.rel (%p428) target = $region72
      $region71: #{_lambda_.3} parent=5 // pred_region
        // Predicated region
        $region73: #{_lambda_.3} parent=71 // pred_check
          %p431 = pneg %p44
        $region74: #{_lambda_.3} parent=71 // pred_check_branch
          %433 = sbr.rel (%p431) target = $region76
        $region75: #{_lambda_.3} parent=71 // pred_region
          %p434 = scmp.lt.s32.totalorder %s24, 1
          %s435 = scalar_select %p434, %s24, 1
          %s436 = smul.addr %s435, 2
          %s437 = smul.addr %s436, 8
          %s438 = scalar_lea.vmem %s0, %s437
        $region76: #{_lambda_.3} parent=71 // pred_fallthru
          _
      $region72: #{_lambda_.3} parent=5 // pred_fallthru
        _
      %p439 = scmp.le.s32.totalorder 1, %s24
      %p440 = scmp.lt.s32.totalorder %s24, 3
      %p441 = pnand %p439, %p440
      %p442 = pneg %p441
      // Predicated region
      $region77: #{_lambda_.3} parent=5 // pred_check
        _
      $region78: #{_lambda_.3} parent=5 // pred_check_branch
        %444 = sbr.rel (%p441) target = $region80
      $region79: #{_lambda_.3} parent=5 // pred_region
        %s445 = ssub.s32 %s24, 1
        %p446 = scmp.lt.s32.totalorder %s29, 1
        %s447 = scalar_select %p446, %s29, 1
        %s448 = smul.addr %s447, 2
        %s449 = smul.addr %s448, 8
        %s450 = scalar_lea.vmem %s0, %s449
        %p451 = pneg %p50
        %p452 = pneg %p47
        %p453 = pneg %p71
        %p454 = pneg %p68
        %p455 = pneg %p92
        %p456 = pneg %p89
        %p457 = pneg %p113
        %p458 = pneg %p110
        %p459 = pneg %p134
        %p460 = pneg %p131
        %p461 = pneg %p155
        %p462 = pneg %p152
        %p463 = pneg %p176
        %p464 = pneg %p173
        %p465 = pneg %p197
        %p466 = pneg %p194
        %p467 = pneg %p218
        %p468 = pneg %p215
        %p469 = pneg %p239
        %p470 = pneg %p236
        %p471 = pneg %p260
        %p472 = pneg %p257
        %p473 = pneg %p281
        %p474 = pneg %p278
        %p475 = pneg %p302
        %p476 = pneg %p299
        %p477 = pneg %p323
        %p478 = pneg %p320
        %p479 = pneg %p344
        %p480 = pneg %p341
        %p481 = pneg %p370
        %p482 = pneg %p367
        %s483 = sand.u32 %s357, 1
        %s484 = scalar_lea.sflag [#allocation3], %s483
        %s485 = sand.u32 %s357, 1
        %s486 = smul.addr %s485, 16
        %s487 = scalar_lea.vmem [#allocation2], %s486
        %p488 = scmp.lt.s32.totalorder %s29, 1
        %s489 = scalar_select %p488, %s29, 1
        %s490 = smul.addr %s489, 2
        %s491 = smul.addr %s490, 8
        %s492 = scalar_lea.vmem %s0, %s491
        %v493 = vld [vmem:[%s492] sm:$0xff]
        %v494 = vld [vmem:[%s492 + $0x8] sm:$0xff]
        %v495 = vld [vmem:[%s1] sm:$0xff]
        %v496 = vld [vmem:[%s1 + $0x8] sm:$0xff]
        %v497 = vadd.f32 %v493, %v495
        %v498 = vadd.f32 %v494, %v496
        %v499 = vld [vmem:[%s2] sm:$0xff]
        %v500 = vld [vmem:[%s2 + $0x8] sm:$0xff]
        %v501 = vld [vmem:[%s2 + $0x10] sm:$0xff]
        %v502 = vld [vmem:[%s2 + $0x18] sm:$0xff]
        %v503 = vld [vmem:[%s3] sm:$0x1]
        %v505 = vlaneseq
        %v506 = vshrl.u32 %v505, 7
        %v507 = vsub.s32 0, %v506
        %v508 = vrot.slane %v503, %v507
        %vm510 = vcmask 261120
        %v512 = vsel %vm510, %v497, 0
        %v515 = vsel %vm510, %v498, 0
        %517 = vmatprep.subr.mxu0 0.0
        %518 = vmatpush1.msra.mxu0 %v499
        %519 = vmatprep.subr.mxu0 0.0
        %520 = vmatpush1.msra.mxu0 %v500
        %521 = vmatprep.subr.mxu0 0.0
        %522 = vmatpush1.msra.mxu0 %v501
        %523 = vmatprep.subr.mxu0 0.0
        %524 = vmatpush1.msra.mxu0 %v502
        %525 = vmatprep.subr.mxu0 0.0
        %526 = vmatpush1.msra.mxu0 0.0
        %527 = vmatprep.subr.mxu0 0.0
        %528 = vmatpush1.msra.mxu0 0.0
        %529 = vmatprep.subr.mxu0 0.0
        %530 = vmatpush1.msra.mxu0 0.0
        %531 = vmatprep.subr.mxu0 0.0
        %532 = vmatpush1.msra.mxu0 0.0
        %533 = vmatprep.subr.mxu0 0.0
        %534 = vmatpush1.msra.mxu0 0.0
        %535 = vmatprep.subr.mxu0 0.0
        %536 = vmatpush1.msra.mxu0 0.0
        %537 = vmatprep.subr.mxu0 0.0
        %538 = vmatpush1.msra.mxu0 0.0
        %539 = vmatprep.subr.mxu0 0.0
        %540 = vmatpush1.msra.mxu0 0.0
        %541 = vmatprep.subr.mxu0 0.0
        %542 = vmatpush1.msra.mxu0 0.0
        %543 = vmatprep.subr.mxu0 0.0
        %544 = vmatpush1.msra.mxu0 0.0
        %545 = vmatprep.subr.mxu0 0.0
        %546 = vmatpush1.msra.mxu0 0.0
        %547 = vmatprep.subr.mxu0 0.0
        %548 = vmatpush1.msra.mxu0 0.0
        %549 = vmatprep.subr.mxu0 0.0
        %550 = vmatpush1.msra.mxu0 0.0
        %551 = vmatprep.subr.mxu0 0.0
        %552 = vmatpush1.msra.mxu0 0.0
        %553 = vmatprep.subr.mxu0 0.0
        %554 = vmatpush1.msra.mxu0 0.0
        %555 = vmatprep.subr.mxu0 0.0
        %556 = vmatpush1.msra.mxu0 0.0
        %557 = vmatprep.subr.mxu0 0.0
        %558 = vmatpush1.msra.mxu0 0.0
        %559 = vmatprep.subr.mxu0 0.0
        %560 = vmatpush1.msra.mxu0 0.0
        %561 = vmatprep.subr.mxu0 0.0
        %562 = vmatpush1.msra.mxu0 0.0
        %563 = vmatprep.subr.mxu0 0.0
        %564 = vmatpush1.msra.mxu0 0.0
        %565 = vmatprep.subr.mxu0 0.0
        %566 = vmatpush1.msra.mxu0 0.0
        %567 = vmatprep.subr.mxu0 0.0
        %568 = vmatpush1.msra.mxu0 0.0
        %569 = vmatprep.subr.mxu0 0.0
        %570 = vmatpush1.msra.mxu0 0.0
        %571 = vmatprep.subr.mxu0 0.0
        %572 = vmatpush1.msra.mxu0 0.0
        %573 = vmatprep.subr.mxu0 0.0
        %574 = vmatpush1.msra.mxu0 0.0
        %575 = vmatprep.subr.mxu0 0.0
        %576 = vmatpush1.msra.mxu0 0.0
        %577 = vmatprep.subr.mxu0 0.0
        %578 = vmatpush1.msra.mxu0 0.0
        %579 = vmatprep.subr.mxu0 0.0
        %580 = vmatpush1.msra.mxu0 0.0
        %581 = vmatprep.mubr.f32.mxu0 0.0
        %582 = vmatmul.mubr.f32.gmra.mrb[0].mxu0 %v512
        %v583 = vpop.f32.mrb[0].mxu0
        %v584 = vadd.f32 %v508, %v583
        %v585 = vpop.f32.mrb[0].mxu0
        %586 = vmatprep.mubr.f32.mxu0 0.0
        %587 = vmatmul.mubr.f32.gmra.mrb[0].mxu0 %v515
        %v588 = vpop.f32.mrb[0].mxu0
        %v589 = vadd.f32 %v508, %v588
        %v590 = vpop.f32.mrb[0].mxu0
        %591 = vdwg.mxu0
        %594 = vrot.lane.b32.xlu0 %v584, 96
        %v595 = vpop.permute.xlu0 %594
        %596 = vrot.lane.b32.xlu0 %v589, 96
        %v597 = vpop.permute.xlu0 %596
        %vm598 = vcmask 64512
        %v599 = vsel %vm598, %v584, 0
        %v601 = vsel %vm598, %v589, 0
        %v603 = vsel %vm598, %v595, 0
        %v605 = vsel %vm598, %v597, 0
        %607 = vmatprep.subr.mxu0 0.0
        %608 = vmatpush1.xpose.msra.mxu0 %v603
        %609 = vmatprep.subr.mxu0 0.0
        %610 = vmatpush1.xpose.msra.mxu0 %v605
        %611 = vmatprep.subr.mxu0 0.0
        %612 = vmatpush1.xpose.msra.mxu0 0.0
        %613 = vmatprep.subr.mxu0 0.0
        %614 = vmatpush1.xpose.msra.mxu0 0.0
        %615 = vmatprep.subr.mxu0 0.0
        %616 = vmatpush1.xpose.msra.mxu0 0.0
        %617 = vmatprep.subr.mxu0 0.0
        %618 = vmatpush1.xpose.msra.mxu0 0.0
        %619 = vmatprep.subr.mxu0 0.0
        %620 = vmatpush1.xpose.msra.mxu0 0.0
        %621 = vmatprep.subr.mxu0 0.0
        %622 = vmatpush1.xpose.msra.mxu0 0.0
        %623 = vmatprep.subr.mxu0 0.0
        %624 = vmatpush1.xpose.msra.mxu0 0.0
        %625 = vmatprep.subr.mxu0 0.0
        %626 = vmatpush1.xpose.msra.mxu0 0.0
        %627 = vmatprep.subr.mxu0 0.0
        %628 = vmatpush1.xpose.msra.mxu0 0.0
        %629 = vmatprep.subr.mxu0 0.0
        %630 = vmatpush1.xpose.msra.mxu0 0.0
        %631 = vmatprep.subr.mxu0 0.0
        %632 = vmatpush1.xpose.msra.mxu0 0.0
        %633 = vmatprep.subr.mxu0 0.0
        %634 = vmatpush1.xpose.msra.mxu0 0.0
        %635 = vmatprep.subr.mxu0 0.0
        %636 = vmatpush1.xpose.msra.mxu0 0.0
        %637 = vmatprep.subr.mxu0 0.0
        %638 = vmatpush1.xpose.msra.mxu0 0.0
        %639 = vmatprep.subr.mxu0 0.0
        %640 = vmatpush1.xpose.msra.mxu0 0.0
        %641 = vmatprep.subr.mxu0 0.0
        %642 = vmatpush1.xpose.msra.mxu0 0.0
        %643 = vmatprep.subr.mxu0 0.0
        %644 = vmatpush1.xpose.msra.mxu0 0.0
        %645 = vmatprep.subr.mxu0 0.0
        %646 = vmatpush1.xpose.msra.mxu0 0.0
        %647 = vmatprep.subr.mxu0 0.0
        %648 = vmatpush1.xpose.msra.mxu0 0.0
        %649 = vmatprep.subr.mxu0 0.0
        %650 = vmatpush1.xpose.msra.mxu0 0.0
        %651 = vmatprep.subr.mxu0 0.0
        %652 = vmatpush1.xpose.msra.mxu0 0.0
        %653 = vmatprep.subr.mxu0 0.0
        %654 = vmatpush1.xpose.msra.mxu0 0.0
        %655 = vmatprep.subr.mxu0 0.0
        %656 = vmatpush1.xpose.msra.mxu0 0.0
        %657 = vmatprep.subr.mxu0 0.0
        %658 = vmatpush1.xpose.msra.mxu0 0.0
        %659 = vmatprep.subr.mxu0 0.0
        %660 = vmatpush1.xpose.msra.mxu0 0.0
        %661 = vmatprep.subr.mxu0 0.0
        %662 = vmatpush1.xpose.msra.mxu0 0.0
        %663 = vmatprep.subr.mxu0 0.0
        %664 = vmatpush1.xpose.msra.mxu0 0.0
        %665 = vmatprep.subr.mxu0 0.0
        %666 = vmatpush1.xpose.msra.mxu0 0.0
        %667 = vmatprep.subr.mxu0 0.0
        %668 = vmatpush1.xpose.msra.mxu0 0.0
        %669 = vmatprep.subr.mxu0 0.0
        %670 = vmatpush1.xpose.msra.mxu0 0.0
        %671 = vmatprep.mubr.f32.mxu0 0.0
        %672 = vmatmul.mubr.f32.gmra.mrb[0].mxu0 %v599
        %v673 = vpop.f32.mrb[0].mxu0
        %v674 = vadd.f32 0.0, %v673
        %v675 = vpop.f32.mrb[0].mxu0
        %676 = vmatprep.mubr.f32.mxu0 0.0
        %677 = vmatmul.mubr.f32.gmra.mrb[0].mxu0 %v601
        %v678 = vpop.f32.mrb[0].mxu0
        %v679 = vadd.f32 0.0, %v678
        %v680 = vpop.f32.mrb[0].mxu0
        %681 = vdwg.mxu0
        %v682 = vmul.f32 %v674, 0.35355338
        %v683 = vmul.f32 %v679, 0.35355338
        %vm684 = vcmask 130048
        %v685 = vsel %vm684, %v682, -inf
        %686 = vmax.xlane.f32.xlu0 %v685
        %v687 = vpop.xlane.xlu0 %686
        %v688 = vsel %vm684, %v683, -inf
        %689 = vmax.xlane.f32.xlu0 %v688
        %v690 = vpop.xlane.xlu0 %689
        %v691 = vsub.f32 %v682, %v687
        %v692 = vsub.f32 %v683, %v690
        %v693 = vmul.f32 %v691, 1.442695
        %v694 = vpow.pop %v693
        %v695 = vmul.f32 %v692, 1.442695
        %v696 = vpow.pop %v695
        %v697 = vsel %vm684, %v694, 0.0
        %698 = vadd.xlane.f32.xlu0 %v697
        %v699 = vpop.xlane.xlu0 %698
        %v700 = vsel %vm684, %v696, 0.0
        %701 = vadd.xlane.f32.xlu0 %v700
        %v702 = vpop.xlane.xlu0 %701
        %v703 = vrcp.pop %v699
        %v704 = vrcp.pop %v702
        %v705 = vmul.f32 %v694, %v703
        %v706 = vmul.f32 %v696, %v704
        %707 = vrot.lane.b32.xlu0 %v584, 64
        %v708 = vpop.permute.xlu0 %707
        %709 = vrot.lane.b32.xlu0 %v589, 64
        %v710 = vpop.permute.xlu0 %709
        %v714 = vsel %vm684, %v705, 0
        %v717 = vsel %vm684, %v706, 0
        %719 = vmatprep.subr.mxu0 0.0
        %720 = vmatpush1.msra.mxu0 %v708
        %721 = vmatprep.subr.mxu0 0.0
        %722 = vmatpush1.msra.mxu0 %v710
        %723 = vmatprep.subr.mxu0 0.0
        %724 = vmatpush1.msra.mxu0 0.0
        %725 = vmatprep.subr.mxu0 0.0
        %726 = vmatpush1.msra.mxu0 0.0
        %727 = vmatprep.subr.mxu0 0.0
        %728 = vmatpush1.msra.mxu0 0.0
        %729 = vmatprep.subr.mxu0 0.0
        %730 = vmatpush1.msra.mxu0 0.0
        %731 = vmatprep.subr.mxu0 0.0
        %732 = vmatpush1.msra.mxu0 0.0
        %733 = vmatprep.subr.mxu0 0.0
        %734 = vmatpush1.msra.mxu0 0.0
        %735 = vmatprep.subr.mxu0 0.0
        %736 = vmatpush1.msra.mxu0 0.0
        %737 = vmatprep.subr.mxu0 0.0
        %738 = vmatpush1.msra.mxu0 0.0
        %739 = vmatprep.subr.mxu0 0.0
        %740 = vmatpush1.msra.mxu0 0.0
        %741 = vmatprep.subr.mxu0 0.0
        %742 = vmatpush1.msra.mxu0 0.0
        %743 = vmatprep.subr.mxu0 0.0
        %744 = vmatpush1.msra.mxu0 0.0
        %745 = vmatprep.subr.mxu0 0.0
        %746 = vmatpush1.msra.mxu0 0.0
        %747 = vmatprep.subr.mxu0 0.0
        %748 = vmatpush1.msra.mxu0 0.0
        %749 = vmatprep.subr.mxu0 0.0
        %750 = vmatpush1.msra.mxu0 0.0
        %751 = vmatprep.subr.mxu0 0.0
        %752 = vmatpush1.msra.mxu0 0.0
        %753 = vmatprep.subr.mxu0 0.0
        %754 = vmatpush1.msra.mxu0 0.0
        %755 = vmatprep.subr.mxu0 0.0
        %756 = vmatpush1.msra.mxu0 0.0
        %757 = vmatprep.subr.mxu0 0.0
        %758 = vmatpush1.msra.mxu0 0.0
        %759 = vmatprep.subr.mxu0 0.0
        %760 = vmatpush1.msra.mxu0 0.0
        %761 = vmatprep.subr.mxu0 0.0
        %762 = vmatpush1.msra.mxu0 0.0
        %763 = vmatprep.subr.mxu0 0.0
        %764 = vmatpush1.msra.mxu0 0.0
        %765 = vmatprep.subr.mxu0 0.0
        %766 = vmatpush1.msra.mxu0 0.0
        %767 = vmatprep.subr.mxu0 0.0
        %768 = vmatpush1.msra.mxu0 0.0
        %769 = vmatprep.subr.mxu0 0.0
        %770 = vmatpush1.msra.mxu0 0.0
        %771 = vmatprep.subr.mxu0 0.0
        %772 = vmatpush1.msra.mxu0 0.0
        %773 = vmatprep.subr.mxu0 0.0
        %774 = vmatpush1.msra.mxu0 0.0
        %775 = vmatprep.subr.mxu0 0.0
        %776 = vmatpush1.msra.mxu0 0.0
        %777 = vmatprep.subr.mxu0 0.0
        %778 = vmatpush1.msra.mxu0 0.0
        %779 = vmatprep.subr.mxu0 0.0
        %780 = vmatpush1.msra.mxu0 0.0
        %781 = vmatprep.subr.mxu0 0.0
        %782 = vmatpush1.msra.mxu0 0.0
        %783 = vmatprep.mubr.f32.mxu0 0.0
        %784 = vmatmul.mubr.f32.gmra.mrb[0].mxu0 %v714
        %v785 = vpop.f32.mrb[0].mxu0
        %v786 = vadd.f32 0.0, %v785
        %v787 = vpop.f32.mrb[0].mxu0
        %788 = vmatprep.mubr.f32.mxu0 0.0
        %789 = vmatmul.mubr.f32.gmra.mrb[0].mxu0 %v717
        %v790 = vpop.f32.mrb[0].mxu0
        %v791 = vadd.f32 0.0, %v790
        %v792 = vpop.f32.mrb[0].mxu0
        %793 = vdwg.mxu0
        %794 = vrot.lane.b32.xlu0 %v584, 120
        %v795 = vpop.permute.xlu0 %794
        %796 = vrot.lane.b32.xlu0 %v589, 120
        %v797 = vpop.permute.xlu0 %796
        %798 = vrot.lane.b32.xlu0 %v584, 88
        %v799 = vpop.permute.xlu0 %798
        %800 = vrot.lane.b32.xlu0 %v589, 88
        %v801 = vpop.permute.xlu0 %800
        %v802 = vsel %vm598, %v795, 0
        %v804 = vsel %vm598, %v797, 0
        %v806 = vsel %vm598, %v799, 0
        %v808 = vsel %vm598, %v801, 0
        %810 = vmatprep.subr.mxu0 0.0
        %811 = vmatpush1.xpose.msra.mxu0 %v806
        %812 = vmatprep.subr.mxu0 0.0
        %813 = vmatpush1.xpose.msra.mxu0 %v808
        %814 = vmatprep.subr.mxu0 0.0
        %815 = vmatpush1.xpose.msra.mxu0 0.0
        %816 = vmatprep.subr.mxu0 0.0
        %817 = vmatpush1.xpose.msra.mxu0 0.0
        %818 = vmatprep.subr.mxu0 0.0
        %819 = vmatpush1.xpose.msra.mxu0 0.0
        %820 = vmatprep.subr.mxu0 0.0
        %821 = vmatpush1.xpose.msra.mxu0 0.0
        %822 = vmatprep.subr.mxu0 0.0
        %823 = vmatpush1.xpose.msra.mxu0 0.0
        %824 = vmatprep.subr.mxu0 0.0
        %825 = vmatpush1.xpose.msra.mxu0 0.0
        %826 = vmatprep.subr.mxu0 0.0
        %827 = vmatpush1.xpose.msra.mxu0 0.0
        %828 = vmatprep.subr.mxu0 0.0
        %829 = vmatpush1.xpose.msra.mxu0 0.0
        %830 = vmatprep.subr.mxu0 0.0
        %831 = vmatpush1.xpose.msra.mxu0 0.0
        %832 = vmatprep.subr.mxu0 0.0
        %833 = vmatpush1.xpose.msra.mxu0 0.0
        %834 = vmatprep.subr.mxu0 0.0
        %835 = vmatpush1.xpose.msra.mxu0 0.0
        %836 = vmatprep.subr.mxu0 0.0
        %837 = vmatpush1.xpose.msra.mxu0 0.0
        %838 = vmatprep.subr.mxu0 0.0
        %839 = vmatpush1.xpose.msra.mxu0 0.0
        %840 = vmatprep.subr.mxu0 0.0
        %841 = vmatpush1.xpose.msra.mxu0 0.0
        %842 = vmatprep.subr.mxu0 0.0
        %843 = vmatpush1.xpose.msra.mxu0 0.0
        %844 = vmatprep.subr.mxu0 0.0
        %845 = vmatpush1.xpose.msra.mxu0 0.0
        %846 = vmatprep.subr.mxu0 0.0
        %847 = vmatpush1.xpose.msra.mxu0 0.0
        %848 = vmatprep.subr.mxu0 0.0
        %849 = vmatpush1.xpose.msra.mxu0 0.0
        %850 = vmatprep.subr.mxu0 0.0
        %851 = vmatpush1.xpose.msra.mxu0 0.0
        %852 = vmatprep.subr.mxu0 0.0
        %853 = vmatpush1.xpose.msra.mxu0 0.0
        %854 = vmatprep.subr.mxu0 0.0
        %855 = vmatpush1.xpose.msra.mxu0 0.0
        %856 = vmatprep.subr.mxu0 0.0
        %857 = vmatpush1.xpose.msra.mxu0 0.0
        %858 = vmatprep.subr.mxu0 0.0
        %859 = vmatpush1.xpose.msra.mxu0 0.0
        %860 = vmatprep.subr.mxu0 0.0
        %861 = vmatpush1.xpose.msra.mxu0 0.0
        %862 = vmatprep.subr.mxu0 0.0
        %863 = vmatpush1.xpose.msra.mxu0 0.0
        %864 = vmatprep.subr.mxu0 0.0
        %865 = vmatpush1.xpose.msra.mxu0 0.0
        %866 = vmatprep.subr.mxu0 0.0
        %867 = vmatpush1.xpose.msra.mxu0 0.0
        %868 = vmatprep.subr.mxu0 0.0
        %869 = vmatpush1.xpose.msra.mxu0 0.0
        %870 = vmatprep.subr.mxu0 0.0
        %871 = vmatpush1.xpose.msra.mxu0 0.0
        %872 = vmatprep.subr.mxu0 0.0
        %873 = vmatpush1.xpose.msra.mxu0 0.0
        %874 = vmatprep.mubr.f32.mxu0 0.0
        %875 = vmatmul.mubr.f32.gmra.mrb[0].mxu0 %v802
        %v876 = vpop.f32.mrb[0].mxu0
        %v877 = vadd.f32 0.0, %v876
        %v878 = vpop.f32.mrb[0].mxu0
        %879 = vmatprep.mubr.f32.mxu0 0.0
        %880 = vmatmul.mubr.f32.gmra.mrb[0].mxu0 %v804
        %v881 = vpop.f32.mrb[0].mxu0
        %v882 = vadd.f32 0.0, %v881
        %v883 = vpop.f32.mrb[0].mxu0
        %884 = vdwg.mxu0
        %v885 = vmul.f32 %v877, 0.35355338
        %v886 = vmul.f32 %v882, 0.35355338
        %v887 = vsel %vm684, %v885, -inf
        %888 = vmax.xlane.f32.xlu0 %v887
        %v889 = vpop.xlane.xlu0 %888
        %v890 = vsel %vm684, %v886, -inf
        %891 = vmax.xlane.f32.xlu0 %v890
        %v892 = vpop.xlane.xlu0 %891
        %v893 = vsub.f32 %v885, %v889
        %v894 = vsub.f32 %v886, %v892
        %v895 = vmul.f32 %v893, 1.442695
        %v896 = vpow.pop %v895
        %v897 = vmul.f32 %v894, 1.442695
        %v898 = vpow.pop %v897
        %v899 = vsel %vm684, %v896, 0.0
        %900 = vadd.xlane.f32.xlu0 %v899
        %v901 = vpop.xlane.xlu0 %900
        %v902 = vsel %vm684, %v898, 0.0
        %903 = vadd.xlane.f32.xlu0 %v902
        %v904 = vpop.xlane.xlu0 %903
        %v905 = vrcp.pop %v901
        %v906 = vrcp.pop %v904
        %v907 = vmul.f32 %v896, %v905
        %v908 = vmul.f32 %v898, %v906
        %909 = vrot.lane.b32.xlu0 %v584, 56
        %v910 = vpop.permute.xlu0 %909
        %911 = vrot.lane.b32.xlu0 %v589, 56
        %v912 = vpop.permute.xlu0 %911
        %v916 = vsel %vm684, %v907, 0
        %v919 = vsel %vm684, %v908, 0
        %921 = vmatprep.subr.mxu0 0.0
        %922 = vmatpush1.msra.mxu0 %v910
        %923 = vmatprep.subr.mxu0 0.0
        %924 = vmatpush1.msra.mxu0 %v912
        %925 = vmatprep.subr.mxu0 0.0
        %926 = vmatpush1.msra.mxu0 0.0
        %927 = vmatprep.subr.mxu0 0.0
        %928 = vmatpush1.msra.mxu0 0.0
        %929 = vmatprep.subr.mxu0 0.0
        %930 = vmatpush1.msra.mxu0 0.0
        %931 = vmatprep.subr.mxu0 0.0
        %932 = vmatpush1.msra.mxu0 0.0
        %933 = vmatprep.subr.mxu0 0.0
        %934 = vmatpush1.msra.mxu0 0.0
        %935 = vmatprep.subr.mxu0 0.0
        %936 = vmatpush1.msra.mxu0 0.0
        %937 = vmatprep.subr.mxu0 0.0
        %938 = vmatpush1.msra.mxu0 0.0
        %939 = vmatprep.subr.mxu0 0.0
        %940 = vmatpush1.msra.mxu0 0.0
        %941 = vmatprep.subr.mxu0 0.0
        %942 = vmatpush1.msra.mxu0 0.0
        %943 = vmatprep.subr.mxu0 0.0
        %944 = vmatpush1.msra.mxu0 0.0
        %945 = vmatprep.subr.mxu0 0.0
        %946 = vmatpush1.msra.mxu0 0.0
        %947 = vmatprep.subr.mxu0 0.0
        %948 = vmatpush1.msra.mxu0 0.0
        %949 = vmatprep.subr.mxu0 0.0
        %950 = vmatpush1.msra.mxu0 0.0
        %951 = vmatprep.subr.mxu0 0.0
        %952 = vmatpush1.msra.mxu0 0.0
        %953 = vmatprep.subr.mxu0 0.0
        %954 = vmatpush1.msra.mxu0 0.0
        %955 = vmatprep.subr.mxu0 0.0
        %956 = vmatpush1.msra.mxu0 0.0
        %957 = vmatprep.subr.mxu0 0.0
        %958 = vmatpush1.msra.mxu0 0.0
        %959 = vmatprep.subr.mxu0 0.0
        %960 = vmatpush1.msra.mxu0 0.0
        %961 = vmatprep.subr.mxu0 0.0
        %962 = vmatpush1.msra.mxu0 0.0
        %963 = vmatprep.subr.mxu0 0.0
        %964 = vmatpush1.msra.mxu0 0.0
        %965 = vmatprep.subr.mxu0 0.0
        %966 = vmatpush1.msra.mxu0 0.0
        %967 = vmatprep.subr.mxu0 0.0
        %968 = vmatpush1.msra.mxu0 0.0
        %969 = vmatprep.subr.mxu0 0.0
        %970 = vmatpush1.msra.mxu0 0.0
        %971 = vmatprep.subr.mxu0 0.0
        %972 = vmatpush1.msra.mxu0 0.0
        %973 = vmatprep.subr.mxu0 0.0
        %974 = vmatpush1.msra.mxu0 0.0
        %975 = vmatprep.subr.mxu0 0.0
        %976 = vmatpush1.msra.mxu0 0.0
        %977 = vmatprep.subr.mxu0 0.0
        %978 = vmatpush1.msra.mxu0 0.0
        %979 = vmatprep.subr.mxu0 0.0
        %980 = vmatpush1.msra.mxu0 0.0
        %981 = vmatprep.subr.mxu0 0.0
        %982 = vmatpush1.msra.mxu0 0.0
        %983 = vmatprep.subr.mxu0 0.0
        %984 = vmatpush1.msra.mxu0 0.0
        %985 = vmatprep.mubr.f32.mxu0 0.0
        %986 = vmatmul.mubr.f32.gmra.mrb[0].mxu0 %v916
        %v987 = vpop.f32.mrb[0].mxu0
        %v988 = vadd.f32 0.0, %v987
        %v989 = vpop.f32.mrb[0].mxu0
        %990 = vmatprep.mubr.f32.mxu0 0.0
        %991 = vmatmul.mubr.f32.gmra.mrb[0].mxu0 %v919
        %v992 = vpop.f32.mrb[0].mxu0
        %v993 = vadd.f32 0.0, %v992
        %v994 = vpop.f32.mrb[0].mxu0
        %995 = vdwg.mxu0
        %996 = vrot.lane.b32.xlu0 %v584, 112
        %v997 = vpop.permute.xlu0 %996
        %998 = vrot.lane.b32.xlu0 %v589, 112
        %v999 = vpop.permute.xlu0 %998
        %1000 = vrot.lane.b32.xlu0 %v584, 80
        %v1001 = vpop.permute.xlu0 %1000
        %1002 = vrot.lane.b32.xlu0 %v589, 80
        %v1003 = vpop.permute.xlu0 %1002
        %v1004 = vsel %vm598, %v997, 0
        %v1006 = vsel %vm598, %v999, 0
        %v1008 = vsel %vm598, %v1001, 0
        %v1010 = vsel %vm598, %v1003, 0
        %1012 = vmatprep.subr.mxu0 0.0
        %1013 = vmatpush1.xpose.msra.mxu0 %v1008
        %1014 = vmatprep.subr.mxu0 0.0
        %1015 = vmatpush1.xpose.msra.mxu0 %v1010
        %1016 = vmatprep.subr.mxu0 0.0
        %1017 = vmatpush1.xpose.msra.mxu0 0.0
        %1018 = vmatprep.subr.mxu0 0.0
        %1019 = vmatpush1.xpose.msra.mxu0 0.0
        %1020 = vmatprep.subr.mxu0 0.0
        %1021 = vmatpush1.xpose.msra.mxu0 0.0
        %1022 = vmatprep.subr.mxu0 0.0
        %1023 = vmatpush1.xpose.msra.mxu0 0.0
        %1024 = vmatprep.subr.mxu0 0.0
        %1025 = vmatpush1.xpose.msra.mxu0 0.0
        %1026 = vmatprep.subr.mxu0 0.0
        %1027 = vmatpush1.xpose.msra.mxu0 0.0
        %1028 = vmatprep.subr.mxu0 0.0
        %1029 = vmatpush1.xpose.msra.mxu0 0.0
        %1030 = vmatprep.subr.mxu0 0.0
        %1031 = vmatpush1.xpose.msra.mxu0 0.0
        %1032 = vmatprep.subr.mxu0 0.0
        %1033 = vmatpush1.xpose.msra.mxu0 0.0
        %1034 = vmatprep.subr.mxu0 0.0
        %1035 = vmatpush1.xpose.msra.mxu0 0.0
        %1036 = vmatprep.subr.mxu0 0.0
        %1037 = vmatpush1.xpose.msra.mxu0 0.0
        %1038 = vmatprep.subr.mxu0 0.0
        %1039 = vmatpush1.xpose.msra.mxu0 0.0
        %1040 = vmatprep.subr.mxu0 0.0
        %1041 = vmatpush1.xpose.msra.mxu0 0.0
        %1042 = vmatprep.subr.mxu0 0.0
        %1043 = vmatpush1.xpose.msra.mxu0 0.0
        %1044 = vmatprep.subr.mxu0 0.0
        %1045 = vmatpush1.xpose.msra.mxu0 0.0
        %1046 = vmatprep.subr.mxu0 0.0
        %1047 = vmatpush1.xpose.msra.mxu0 0.0
        %1048 = vmatprep.subr.mxu0 0.0
        %1049 = vmatpush1.xpose.msra.mxu0 0.0
        %1050 = vmatprep.subr.mxu0 0.0
        %1051 = vmatpush1.xpose.msra.mxu0 0.0
        %1052 = vmatprep.subr.mxu0 0.0
        %1053 = vmatpush1.xpose.msra.mxu0 0.0
        %1054 = vmatprep.subr.mxu0 0.0
        %1055 = vmatpush1.xpose.msra.mxu0 0.0
        %1056 = vmatprep.subr.mxu0 0.0
        %1057 = vmatpush1.xpose.msra.mxu0 0.0
        %1058 = vmatprep.subr.mxu0 0.0
        %1059 = vmatpush1.xpose.msra.mxu0 0.0
        %1060 = vmatprep.subr.mxu0 0.0
        %1061 = vmatpush1.xpose.msra.mxu0 0.0
        %1062 = vmatprep.subr.mxu0 0.0
        %1063 = vmatpush1.xpose.msra.mxu0 0.0
        %1064 = vmatprep.subr.mxu0 0.0
        %1065 = vmatpush1.xpose.msra.mxu0 0.0
        %1066 = vmatprep.subr.mxu0 0.0
        %1067 = vmatpush1.xpose.msra.mxu0 0.0
        %1068 = vmatprep.subr.mxu0 0.0
        %1069 = vmatpush1.xpose.msra.mxu0 0.0
        %1070 = vmatprep.subr.mxu0 0.0
        %1071 = vmatpush1.xpose.msra.mxu0 0.0
        %1072 = vmatprep.subr.mxu0 0.0
        %1073 = vmatpush1.xpose.msra.mxu0 0.0
        %1074 = vmatprep.subr.mxu0 0.0
        %1075 = vmatpush1.xpose.msra.mxu0 0.0
        %1076 = vmatprep.mubr.f32.mxu0 0.0
        %1077 = vmatmul.mubr.f32.gmra.mrb[0].mxu0 %v1004
        %v1078 = vpop.f32.mrb[0].mxu0
        %v1079 = vadd.f32 0.0, %v1078
        %v1080 = vpop.f32.mrb[0].mxu0
        %1081 = vmatprep.mubr.f32.mxu0 0.0
        %1082 = vmatmul.mubr.f32.gmra.mrb[0].mxu0 %v1006
        %v1083 = vpop.f32.mrb[0].mxu0
        %v1084 = vadd.f32 0.0, %v1083
        %v1085 = vpop.f32.mrb[0].mxu0
        %1086 = vdwg.mxu0
        %v1087 = vmul.f32 %v1079, 0.35355338
        %v1088 = vmul.f32 %v1084, 0.35355338
        %v1089 = vsel %vm684, %v1087, -inf
        %1090 = vmax.xlane.f32.xlu0 %v1089
        %v1091 = vpop.xlane.xlu0 %1090
        %v1092 = vsel %vm684, %v1088, -inf
        %1093 = vmax.xlane.f32.xlu0 %v1092
        %v1094 = vpop.xlane.xlu0 %1093
        %v1095 = vsub.f32 %v1087, %v1091
        %v1096 = vsub.f32 %v1088, %v1094
        %v1097 = vmul.f32 %v1095, 1.442695
        %v1098 = vpow.pop %v1097
        %v1099 = vmul.f32 %v1096, 1.442695
        %v1100 = vpow.pop %v1099
        %v1101 = vsel %vm684, %v1098, 0.0
        %1102 = vadd.xlane.f32.xlu0 %v1101
        %v1103 = vpop.xlane.xlu0 %1102
        %v1104 = vsel %vm684, %v1100, 0.0
        %1105 = vadd.xlane.f32.xlu0 %v1104
        %v1106 = vpop.xlane.xlu0 %1105
        %v1107 = vrcp.pop %v1103
        %v1108 = vrcp.pop %v1106
        %v1109 = vmul.f32 %v1098, %v1107
        %v1110 = vmul.f32 %v1100, %v1108
        %1111 = vrot.lane.b32.xlu0 %v584, 48
        %v1112 = vpop.permute.xlu0 %1111
        %1113 = vrot.lane.b32.xlu0 %v589, 48
        %v1114 = vpop.permute.xlu0 %1113
        %v1118 = vsel %vm684, %v1109, 0
        %v1121 = vsel %vm684, %v1110, 0
        %1123 = vmatprep.subr.mxu0 0.0
        %1124 = vmatpush1.msra.mxu0 %v1112
        %1125 = vmatprep.subr.mxu0 0.0
        %1126 = vmatpush1.msra.mxu0 %v1114
        %1127 = vmatprep.subr.mxu0 0.0
        %1128 = vmatpush1.msra.mxu0 0.0
        %1129 = vmatprep.subr.mxu0 0.0
        %1130 = vmatpush1.msra.mxu0 0.0
        %1131 = vmatprep.subr.mxu0 0.0
        %1132 = vmatpush1.msra.mxu0 0.0
        %1133 = vmatprep.subr.mxu0 0.0
        %1134 = vmatpush1.msra.mxu0 0.0
        %1135 = vmatprep.subr.mxu0 0.0
        %1136 = vmatpush1.msra.mxu0 0.0
        %1137 = vmatprep.subr.mxu0 0.0
        %1138 = vmatpush1.msra.mxu0 0.0
        %1139 = vmatprep.subr.mxu0 0.0
        %1140 = vmatpush1.msra.mxu0 0.0
        %1141 = vmatprep.subr.mxu0 0.0
        %1142 = vmatpush1.msra.mxu0 0.0
        %1143 = vmatprep.subr.mxu0 0.0
        %1144 = vmatpush1.msra.mxu0 0.0
        %1145 = vmatprep.subr.mxu0 0.0
        %1146 = vmatpush1.msra.mxu0 0.0
        %1147 = vmatprep.subr.mxu0 0.0
        %1148 = vmatpush1.msra.mxu0 0.0
        %1149 = vmatprep.subr.mxu0 0.0
        %1150 = vmatpush1.msra.mxu0 0.0
        %1151 = vmatprep.subr.mxu0 0.0
        %1152 = vmatpush1.msra.mxu0 0.0
        %1153 = vmatprep.subr.mxu0 0.0
        %1154 = vmatpush1.msra.mxu0 0.0
        %1155 = vmatprep.subr.mxu0 0.0
        %1156 = vmatpush1.msra.mxu0 0.0
        %1157 = vmatprep.subr.mxu0 0.0
        %1158 = vmatpush1.msra.mxu0 0.0
        %1159 = vmatprep.subr.mxu0 0.0
        %1160 = vmatpush1.msra.mxu0 0.0
        %1161 = vmatprep.subr.mxu0 0.0
        %1162 = vmatpush1.msra.mxu0 0.0
        %1163 = vmatprep.subr.mxu0 0.0
        %1164 = vmatpush1.msra.mxu0 0.0
        %1165 = vmatprep.subr.mxu0 0.0
        %1166 = vmatpush1.msra.mxu0 0.0
        %1167 = vmatprep.subr.mxu0 0.0
        %1168 = vmatpush1.msra.mxu0 0.0
        %1169 = vmatprep.subr.mxu0 0.0
        %1170 = vmatpush1.msra.mxu0 0.0
        %1171 = vmatprep.subr.mxu0 0.0
        %1172 = vmatpush1.msra.mxu0 0.0
        %1173 = vmatprep.subr.mxu0 0.0
        %1174 = vmatpush1.msra.mxu0 0.0
        %1175 = vmatprep.subr.mxu0 0.0
        %1176 = vmatpush1.msra.mxu0 0.0
        %1177 = vmatprep.subr.mxu0 0.0
        %1178 = vmatpush1.msra.mxu0 0.0
        %1179 = vmatprep.subr.mxu0 0.0
        %1180 = vmatpush1.msra.mxu0 0.0
        %1181 = vmatprep.subr.mxu0 0.0
        %1182 = vmatpush1.msra.mxu0 0.0
        %1183 = vmatprep.subr.mxu0 0.0
        %1184 = vmatpush1.msra.mxu0 0.0
        %1185 = vmatprep.subr.mxu0 0.0
        %1186 = vmatpush1.msra.mxu0 0.0
        %1187 = vmatprep.mubr.f32.mxu0 0.0
        %1188 = vmatmul.mubr.f32.gmra.mrb[0].mxu0 %v1118
        %v1189 = vpop.f32.mrb[0].mxu0
        %v1190 = vadd.f32 0.0, %v1189
        %v1191 = vpop.f32.mrb[0].mxu0
        %1192 = vmatprep.mubr.f32.mxu0 0.0
        %1193 = vmatmul.mubr.f32.gmra.mrb[0].mxu0 %v1121
        %v1194 = vpop.f32.mrb[0].mxu0
        %v1195 = vadd.f32 0.0, %v1194
        %v1196 = vpop.f32.mrb[0].mxu0
        %1197 = vdwg.mxu0
        %1198 = vrot.lane.b32.xlu0 %v584, 104
        %v1199 = vpop.permute.xlu0 %1198
        %1200 = vrot.lane.b32.xlu0 %v589, 104
        %v1201 = vpop.permute.xlu0 %1200
        %1202 = vrot.lane.b32.xlu0 %v584, 72
        %v1203 = vpop.permute.xlu0 %1202
        %1204 = vrot.lane.b32.xlu0 %v589, 72
        %v1205 = vpop.permute.xlu0 %1204
        %v1206 = vsel %vm598, %v1199, 0
        %v1208 = vsel %vm598, %v1201, 0
        %v1210 = vsel %vm598, %v1203, 0
        %v1212 = vsel %vm598, %v1205, 0
        %1214 = vmatprep.subr.mxu0 0.0
        %1215 = vmatpush1.xpose.msra.mxu0 %v1210
        %1216 = vmatprep.subr.mxu0 0.0
        %1217 = vmatpush1.xpose.msra.mxu0 %v1212
        %1218 = vmatprep.subr.mxu0 0.0
        %1219 = vmatpush1.xpose.msra.mxu0 0.0
        %1220 = vmatprep.subr.mxu0 0.0
        %1221 = vmatpush1.xpose.msra.mxu0 0.0
        %1222 = vmatprep.subr.mxu0 0.0
        %1223 = vmatpush1.xpose.msra.mxu0 0.0
        %1224 = vmatprep.subr.mxu0 0.0
        %1225 = vmatpush1.xpose.msra.mxu0 0.0
        %1226 = vmatprep.subr.mxu0 0.0
        %1227 = vmatpush1.xpose.msra.mxu0 0.0
        %1228 = vmatprep.subr.mxu0 0.0
        %1229 = vmatpush1.xpose.msra.mxu0 0.0
        %1230 = vmatprep.subr.mxu0 0.0
        %1231 = vmatpush1.xpose.msra.mxu0 0.0
        %1232 = vmatprep.subr.mxu0 0.0
        %1233 = vmatpush1.xpose.msra.mxu0 0.0
        %1234 = vmatprep.subr.mxu0 0.0
        %1235 = vmatpush1.xpose.msra.mxu0 0.0
        %1236 = vmatprep.subr.mxu0 0.0
        %1237 = vmatpush1.xpose.msra.mxu0 0.0
        %1238 = vmatprep.subr.mxu0 0.0
        %1239 = vmatpush1.xpose.msra.mxu0 0.0
        %1240 = vmatprep.subr.mxu0 0.0
        %1241 = vmatpush1.xpose.msra.mxu0 0.0
        %1242 = vmatprep.subr.mxu0 0.0
        %1243 = vmatpush1.xpose.msra.mxu0 0.0
        %1244 = vmatprep.subr.mxu0 0.0
        %1245 = vmatpush1.xpose.msra.mxu0 0.0
        %1246 = vmatprep.subr.mxu0 0.0
        %1247 = vmatpush1.xpose.msra.mxu0 0.0
        %1248 = vmatprep.subr.mxu0 0.0
        %1249 = vmatpush1.xpose.msra.mxu0 0.0
        %1250 = vmatprep.subr.mxu0 0.0
        %1251 = vmatpush1.xpose.msra.mxu0 0.0
        %1252 = vmatprep.subr.mxu0 0.0
        %1253 = vmatpush1.xpose.msra.mxu0 0.0
        %1254 = vmatprep.subr.mxu0 0.0
        %1255 = vmatpush1.xpose.msra.mxu0 0.0
        %1256 = vmatprep.subr.mxu0 0.0
        %1257 = vmatpush1.xpose.msra.mxu0 0.0
        %1258 = vmatprep.subr.mxu0 0.0
        %1259 = vmatpush1.xpose.msra.mxu0 0.0
        %1260 = vmatprep.subr.mxu0 0.0
        %1261 = vmatpush1.xpose.msra.mxu0 0.0
        %1262 = vmatprep.subr.mxu0 0.0
        %1263 = vmatpush1.xpose.msra.mxu0 0.0
        %1264 = vmatprep.subr.mxu0 0.0
        %1265 = vmatpush1.xpose.msra.mxu0 0.0
        %1266 = vmatprep.subr.mxu0 0.0
        %1267 = vmatpush1.xpose.msra.mxu0 0.0
        %1268 = vmatprep.subr.mxu0 0.0
        %1269 = vmatpush1.xpose.msra.mxu0 0.0
        %1270 = vmatprep.subr.mxu0 0.0
        %1271 = vmatpush1.xpose.msra.mxu0 0.0
        %1272 = vmatprep.subr.mxu0 0.0
        %1273 = vmatpush1.xpose.msra.mxu0 0.0
        %1274 = vmatprep.subr.mxu0 0.0
        %1275 = vmatpush1.xpose.msra.mxu0 0.0
        %1276 = vmatprep.subr.mxu0 0.0
        %1277 = vmatpush1.xpose.msra.mxu0 0.0
        %1278 = vmatprep.mubr.f32.mxu0 0.0
        %1279 = vmatmul.mubr.f32.gmra.mrb[0].mxu0 %v1206
        %v1280 = vpop.f32.mrb[0].mxu0
        %v1281 = vadd.f32 0.0, %v1280
        %v1282 = vpop.f32.mrb[0].mxu0
        %1283 = vmatprep.mubr.f32.mxu0 0.0
        %1284 = vmatmul.mubr.f32.gmra.mrb[0].mxu0 %v1208
        %v1285 = vpop.f32.mrb[0].mxu0
        %v1286 = vadd.f32 0.0, %v1285
        %v1287 = vpop.f32.mrb[0].mxu0
        %1288 = vdwg.mxu0
        %v1289 = vmul.f32 %v1281, 0.35355338
        %v1290 = vmul.f32 %v1286, 0.35355338
        %v1291 = vsel %vm684, %v1289, -inf
        %1292 = vmax.xlane.f32.xlu0 %v1291
        %v1293 = vpop.xlane.xlu0 %1292
        %v1294 = vsel %vm684, %v1290, -inf
        %1295 = vmax.xlane.f32.xlu0 %v1294
        %v1296 = vpop.xlane.xlu0 %1295
        %v1297 = vsub.f32 %v1289, %v1293
        %v1298 = vsub.f32 %v1290, %v1296
        %v1299 = vmul.f32 %v1297, 1.442695
        %v1300 = vpow.pop %v1299
        %v1301 = vmul.f32 %v1298, 1.442695
        %v1302 = vpow.pop %v1301
        %v1303 = vsel %vm684, %v1300, 0.0
        %1304 = vadd.xlane.f32.xlu0 %v1303
        %v1305 = vpop.xlane.xlu0 %1304
        %v1306 = vsel %vm684, %v1302, 0.0
        %1307 = vadd.xlane.f32.xlu0 %v1306
        %v1308 = vpop.xlane.xlu0 %1307
        %v1309 = vrcp.pop %v1305
        %v1310 = vrcp.pop %v1308
        %v1311 = vmul.f32 %v1300, %v1309
        %v1312 = vmul.f32 %v1302, %v1310
        %1313 = vrot.lane.b32.xlu0 %v584, 40
        %v1314 = vpop.permute.xlu0 %1313
        %1315 = vrot.lane.b32.xlu0 %v589, 40
        %v1316 = vpop.permute.xlu0 %1315
        %v1320 = vsel %vm684, %v1311, 0
        %v1323 = vsel %vm684, %v1312, 0
        %1325 = vmatprep.subr.mxu0 0.0
        %1326 = vmatpush1.msra.mxu0 %v1314
        %1327 = vmatprep.subr.mxu0 0.0
        %1328 = vmatpush1.msra.mxu0 %v1316
        %1329 = vmatprep.subr.mxu0 0.0
        %1330 = vmatpush1.msra.mxu0 0.0
        %1331 = vmatprep.subr.mxu0 0.0
        %1332 = vmatpush1.msra.mxu0 0.0
        %1333 = vmatprep.subr.mxu0 0.0
        %1334 = vmatpush1.msra.mxu0 0.0
        %1335 = vmatprep.subr.mxu0 0.0
        %1336 = vmatpush1.msra.mxu0 0.0
        %1337 = vmatprep.subr.mxu0 0.0
        %1338 = vmatpush1.msra.mxu0 0.0
        %1339 = vmatprep.subr.mxu0 0.0
        %1340 = vmatpush1.msra.mxu0 0.0
        %1341 = vmatprep.subr.mxu0 0.0
        %1342 = vmatpush1.msra.mxu0 0.0
        %1343 = vmatprep.subr.mxu0 0.0
        %1344 = vmatpush1.msra.mxu0 0.0
        %1345 = vmatprep.subr.mxu0 0.0
        %1346 = vmatpush1.msra.mxu0 0.0
        %1347 = vmatprep.subr.mxu0 0.0
        %1348 = vmatpush1.msra.mxu0 0.0
        %1349 = vmatprep.subr.mxu0 0.0
        %1350 = vmatpush1.msra.mxu0 0.0
        %1351 = vmatprep.subr.mxu0 0.0
        %1352 = vmatpush1.msra.mxu0 0.0
        %1353 = vmatprep.subr.mxu0 0.0
        %1354 = vmatpush1.msra.mxu0 0.0
        %1355 = vmatprep.subr.mxu0 0.0
        %1356 = vmatpush1.msra.mxu0 0.0
        %1357 = vmatprep.subr.mxu0 0.0
        %1358 = vmatpush1.msra.mxu0 0.0
        %1359 = vmatprep.subr.mxu0 0.0
        %1360 = vmatpush1.msra.mxu0 0.0
        %1361 = vmatprep.subr.mxu0 0.0
        %1362 = vmatpush1.msra.mxu0 0.0
        %1363 = vmatprep.subr.mxu0 0.0
        %1364 = vmatpush1.msra.mxu0 0.0
        %1365 = vmatprep.subr.mxu0 0.0
        %1366 = vmatpush1.msra.mxu0 0.0
        %1367 = vmatprep.subr.mxu0 0.0
        %1368 = vmatpush1.msra.mxu0 0.0
        %1369 = vmatprep.subr.mxu0 0.0
        %1370 = vmatpush1.msra.mxu0 0.0
        %1371 = vmatprep.subr.mxu0 0.0
        %1372 = vmatpush1.msra.mxu0 0.0
        %1373 = vmatprep.subr.mxu0 0.0
        %1374 = vmatpush1.msra.mxu0 0.0
        %1375 = vmatprep.subr.mxu0 0.0
        %1376 = vmatpush1.msra.mxu0 0.0
        %1377 = vmatprep.subr.mxu0 0.0
        %1378 = vmatpush1.msra.mxu0 0.0
        %1379 = vmatprep.subr.mxu0 0.0
        %1380 = vmatpush1.msra.mxu0 0.0
        %1381 = vmatprep.subr.mxu0 0.0
        %1382 = vmatpush1.msra.mxu0 0.0
        %1383 = vmatprep.subr.mxu0 0.0
        %1384 = vmatpush1.msra.mxu0 0.0
        %1385 = vmatprep.subr.mxu0 0.0
        %1386 = vmatpush1.msra.mxu0 0.0
        %1387 = vmatprep.subr.mxu0 0.0
        %1388 = vmatpush1.msra.mxu0 0.0
        %1389 = vmatprep.mubr.f32.mxu0 0.0
        %1390 = vmatmul.mubr.f32.gmra.mrb[0].mxu0 %v1320
        %v1391 = vpop.f32.mrb[0].mxu0
        %v1392 = vadd.f32 0.0, %v1391
        %v1393 = vpop.f32.mrb[0].mxu0
        %1394 = vmatprep.mubr.f32.mxu0 0.0
        %1395 = vmatmul.mubr.f32.gmra.mrb[0].mxu0 %v1323
        %v1396 = vpop.f32.mrb[0].mxu0
        %v1397 = vadd.f32 0.0, %v1396
        %v1398 = vpop.f32.mrb[0].mxu0
        %1399 = vdwg.mxu0
        %1402 = vrot.lane.b32.xlu0 %v988, 8
        %v1403 = vpop.permute.xlu0 %1402
        %1404 = vrot.lane.b32.xlu0 %v993, 8
        %v1405 = vpop.permute.xlu0 %1404
        %1410 = vrot.lane.b32.xlu0 %v1190, 16
        %v1411 = vpop.permute.xlu0 %1410
        %1412 = vrot.lane.b32.xlu0 %v1195, 16
        %v1413 = vpop.permute.xlu0 %1412
        %1418 = vrot.lane.b32.xlu0 %v1392, 24
        %v1419 = vpop.permute.xlu0 %1418
        %1420 = vrot.lane.b32.xlu0 %v1397, 24
        %v1421 = vpop.permute.xlu0 %1420
        %v1424 = vsel %vm598, %v786, %v1403
        %v1425 = vsel %vm598, %v791, %v1405
        %v1426 = vsel %vm684, %v1424, %v1411
        %v1427 = vsel %vm684, %v1425, %v1413
        %vm1428 = vcmask 195584
        %v1429 = vsel %vm1428, %v1426, %v1419
        %v1430 = vsel %vm1428, %v1427, %v1421
        %v1431 = vld [vmem:[%s4] sm:$0xff]
        %v1432 = vld [vmem:[%s4 + $0x8] sm:$0xff]
        %v1433 = vld [vmem:[%s4 + $0x10] sm:$0xff]
        %v1434 = vld [vmem:[%s4 + $0x18] sm:$0xff]
        %v1435 = vld [vmem:[%s5] sm:$0x1]
        %v1437 = vlaneseq
        %v1438 = vshrl.u32 %v1437, 7
        %v1439 = vsub.s32 0, %v1438
        %v1440 = vrot.slane %v1435, %v1439
        %v1443 = vsel %vm510, %v1429, 0
        %v1446 = vsel %vm510, %v1430, 0
        %1448 = vmatprep.subr.mxu0 0.0
        %1449 = vmatpush1.msra.mxu0 %v1431
        %1450 = vmatprep.subr.mxu0 0.0
        %1451 = vmatpush1.msra.mxu0 %v1432
        %1452 = vmatprep.subr.mxu0 0.0
        %1453 = vmatpush1.msra.mxu0 %v1433
        %1454 = vmatprep.subr.mxu0 0.0
        %1455 = vmatpush1.msra.mxu0 %v1434
        %1456 = vmatprep.subr.mxu0 0.0
        %1457 = vmatpush1.msra.mxu0 0.0
        %1458 = vmatprep.subr.mxu0 0.0
        %1459 = vmatpush1.msra.mxu0 0.0
        %1460 = vmatprep.subr.mxu0 0.0
        %1461 = vmatpush1.msra.mxu0 0.0
        %1462 = vmatprep.subr.mxu0 0.0
        %1463 = vmatpush1.msra.mxu0 0.0
        %1464 = vmatprep.subr.mxu0 0.0
        %1465 = vmatpush1.msra.mxu0 0.0
        %1466 = vmatprep.subr.mxu0 0.0
        %1467 = vmatpush1.msra.mxu0 0.0
        %1468 = vmatprep.subr.mxu0 0.0
        %1469 = vmatpush1.msra.mxu0 0.0
        %1470 = vmatprep.subr.mxu0 0.0
        %1471 = vmatpush1.msra.mxu0 0.0
        %1472 = vmatprep.subr.mxu0 0.0
        %1473 = vmatpush1.msra.mxu0 0.0
        %1474 = vmatprep.subr.mxu0 0.0
        %1475 = vmatpush1.msra.mxu0 0.0
        %1476 = vmatprep.subr.mxu0 0.0
        %1477 = vmatpush1.msra.mxu0 0.0
        %1478 = vmatprep.subr.mxu0 0.0
        %1479 = vmatpush1.msra.mxu0 0.0
        %1480 = vmatprep.subr.mxu0 0.0
        %1481 = vmatpush1.msra.mxu0 0.0
        %1482 = vmatprep.subr.mxu0 0.0
        %1483 = vmatpush1.msra.mxu0 0.0
        %1484 = vmatprep.subr.mxu0 0.0
        %1485 = vmatpush1.msra.mxu0 0.0
        %1486 = vmatprep.subr.mxu0 0.0
        %1487 = vmatpush1.msra.mxu0 0.0
        %1488 = vmatprep.subr.mxu0 0.0
        %1489 = vmatpush1.msra.mxu0 0.0
        %1490 = vmatprep.subr.mxu0 0.0
        %1491 = vmatpush1.msra.mxu0 0.0
        %1492 = vmatprep.subr.mxu0 0.0
        %1493 = vmatpush1.msra.mxu0 0.0
        %1494 = vmatprep.subr.mxu0 0.0
        %1495 = vmatpush1.msra.mxu0 0.0
        %1496 = vmatprep.subr.mxu0 0.0
        %1497 = vmatpush1.msra.mxu0 0.0
        %1498 = vmatprep.subr.mxu0 0.0
        %1499 = vmatpush1.msra.mxu0 0.0
        %1500 = vmatprep.subr.mxu0 0.0
        %1501 = vmatpush1.msra.mxu0 0.0
        %1502 = vmatprep.subr.mxu0 0.0
        %1503 = vmatpush1.msra.mxu0 0.0
        %1504 = vmatprep.subr.mxu0 0.0
        %1505 = vmatpush1.msra.mxu0 0.0
        %1506 = vmatprep.subr.mxu0 0.0
        %1507 = vmatpush1.msra.mxu0 0.0
        %1508 = vmatprep.subr.mxu0 0.0
        %1509 = vmatpush1.msra.mxu0 0.0
        %1510 = vmatprep.subr.mxu0 0.0
        %1511 = vmatpush1.msra.mxu0 0.0
        %1512 = vmatprep.mubr.f32.mxu0 0.0
        %1513 = vmatmul.mubr.f32.gmra.mrb[0].mxu0 %v1443
        %v1514 = vpop.f32.mrb[0].mxu0
        %v1515 = vadd.f32 %v1440, %v1514
        %v1516 = vpop.f32.mrb[0].mxu0
        %1517 = vmatprep.mubr.f32.mxu0 0.0
        %1518 = vmatmul.mubr.f32.gmra.mrb[0].mxu0 %v1446
        %v1519 = vpop.f32.mrb[0].mxu0
        %v1520 = vadd.f32 %v1440, %v1519
        %v1521 = vpop.f32.mrb[0].mxu0
        %1522 = vdwg.mxu0
        %v1523 = vadd.f32 %v497, %v1515
        %v1524 = vadd.f32 %v498, %v1520
        %v1525 = vld [vmem:[%s6] sm:$0x1]
        %s1526 = scalar_lea.vmem %s6, 1
        %v1527 = vld [vmem:[%s1526] sm:$0x1]
        %v1528 = vsel %vm510, %v1523, 0.0
        %1529 = vadd.xlane.f32.xlu0 %v1528
        %v1530 = vpop.xlane.xlu0 %1529
        %v1531 = vsel %vm510, %v1524, 0.0
        %1532 = vadd.xlane.f32.xlu0 %v1531
        %v1533 = vpop.xlane.xlu0 %1532
        %v1534 = vrcp.pop 32.0
        %v1535 = vmul.f32 %v1530, %v1534
        %v1536 = vmul.f32 %v1533, %v1534
        %v1537 = vsub.f32 %v1523, %v1535
        %v1538 = vsub.f32 %v1524, %v1536
        %v1539 = vmul.f32 %v1537, %v1537
        %v1540 = vmul.f32 %v1538, %v1538
        %v1541 = vsel %vm510, %v1539, 0.0
        %1542 = vadd.xlane.f32.xlu0 %v1541
        %v1543 = vpop.xlane.xlu0 %1542
        %v1544 = vsel %vm510, %v1540, 0.0
        %1545 = vadd.xlane.f32.xlu0 %v1544
        %v1546 = vpop.xlane.xlu0 %1545
        %v1547 = vmul.f32 %v1543, %v1534
        %v1548 = vmul.f32 %v1546, %v1534
        %v1549 = vadd.f32 %v1547, 1e-05
        %v1550 = vadd.f32 %v1548, 1e-05
        %v1551 = vrsqrt.pop %v1549
        %v1552 = vrsqrt.pop %v1550
        %v1553 = vmul.f32 %v1537, %v1551
        %v1554 = vmul.f32 %v1538, %v1552
        %v1556 = vlaneseq
        %v1557 = vshrl.u32 %v1556, 7
        %v1558 = vsub.s32 0, %v1557
        %v1559 = vrot.slane %v1525, %v1558
        %v1561 = vmul.f32 %v1553, %v1559
        %v1562 = vmul.f32 %v1554, %v1559
        %v1564 = vlaneseq
        %v1565 = vshrl.u32 %v1564, 7
        %v1566 = vsub.s32 0, %v1565
        %v1567 = vrot.slane %v1527, %v1566
        %v1569 = vadd.f32 %v1561, %v1567
        %v1570 = vadd.f32 %v1562, %v1567
        %v1571 = vld [vmem:[%s7] sm:$0xff]
        %v1572 = vld [vmem:[%s7 + $0x8] sm:$0xff]
        %v1573 = vld [vmem:[%s7 + $0x10] sm:$0xff]
        %v1574 = vld [vmem:[%s7 + $0x18] sm:$0xff]
        %v1575 = vld [vmem:[%s8] sm:$0x1]
        %v1577 = vlaneseq
        %v1578 = vshrl.u32 %v1577, 7
        %v1579 = vsub.s32 0, %v1578
        %v1580 = vrot.slane %v1575, %v1579
        %v1583 = vsel %vm510, %v1569, 0
        %v1586 = vsel %vm510, %v1570, 0
        %1588 = vmatprep.subr.mxu0 0.0
        %1589 = vmatpush1.msra.mxu0 %v1571
        %1590 = vmatprep.subr.mxu0 0.0
        %1591 = vmatpush1.msra.mxu0 %v1572
        %1592 = vmatprep.subr.mxu0 0.0
        %1593 = vmatpush1.msra.mxu0 %v1573
        %1594 = vmatprep.subr.mxu0 0.0
        %1595 = vmatpush1.msra.mxu0 %v1574
        %1596 = vmatprep.subr.mxu0 0.0
        %1597 = vmatpush1.msra.mxu0 0.0
        %1598 = vmatprep.subr.mxu0 0.0
        %1599 = vmatpush1.msra.mxu0 0.0
        %1600 = vmatprep.subr.mxu0 0.0
        %1601 = vmatpush1.msra.mxu0 0.0
        %1602 = vmatprep.subr.mxu0 0.0
        %1603 = vmatpush1.msra.mxu0 0.0
        %1604 = vmatprep.subr.mxu0 0.0
        %1605 = vmatpush1.msra.mxu0 0.0
        %1606 = vmatprep.subr.mxu0 0.0
        %1607 = vmatpush1.msra.mxu0 0.0
        %1608 = vmatprep.subr.mxu0 0.0
        %1609 = vmatpush1.msra.mxu0 0.0
        %1610 = vmatprep.subr.mxu0 0.0
        %1611 = vmatpush1.msra.mxu0 0.0
        %1612 = vmatprep.subr.mxu0 0.0
        %1613 = vmatpush1.msra.mxu0 0.0
        %1614 = vmatprep.subr.mxu0 0.0
        %1615 = vmatpush1.msra.mxu0 0.0
        %1616 = vmatprep.subr.mxu0 0.0
        %1617 = vmatpush1.msra.mxu0 0.0
        %1618 = vmatprep.subr.mxu0 0.0
        %1619 = vmatpush1.msra.mxu0 0.0
        %1620 = vmatprep.subr.mxu0 0.0
        %1621 = vmatpush1.msra.mxu0 0.0
        %1622 = vmatprep.subr.mxu0 0.0
        %1623 = vmatpush1.msra.mxu0 0.0
        %1624 = vmatprep.subr.mxu0 0.0
        %1625 = vmatpush1.msra.mxu0 0.0
        %1626 = vmatprep.subr.mxu0 0.0
        %1627 = vmatpush1.msra.mxu0 0.0
        %1628 = vmatprep.subr.mxu0 0.0
        %1629 = vmatpush1.msra.mxu0 0.0
        %1630 = vmatprep.subr.mxu0 0.0
        %1631 = vmatpush1.msra.mxu0 0.0
        %1632 = vmatprep.subr.mxu0 0.0
        %1633 = vmatpush1.msra.mxu0 0.0
        %1634 = vmatprep.subr.mxu0 0.0
        %1635 = vmatpush1.msra.mxu0 0.0
        %1636 = vmatprep.subr.mxu0 0.0
        %1637 = vmatpush1.msra.mxu0 0.0
        %1638 = vmatprep.subr.mxu0 0.0
        %1639 = vmatpush1.msra.mxu0 0.0
        %1640 = vmatprep.subr.mxu0 0.0
        %1641 = vmatpush1.msra.mxu0 0.0
        %1642 = vmatprep.subr.mxu0 0.0
        %1643 = vmatpush1.msra.mxu0 0.0
        %1644 = vmatprep.subr.mxu0 0.0
        %1645 = vmatpush1.msra.mxu0 0.0
        %1646 = vmatprep.subr.mxu0 0.0
        %1647 = vmatpush1.msra.mxu0 0.0
        %1648 = vmatprep.subr.mxu0 0.0
        %1649 = vmatpush1.msra.mxu0 0.0
        %1650 = vmatprep.subr.mxu0 0.0
        %1651 = vmatpush1.msra.mxu0 0.0
        %1652 = vmatprep.mubr.f32.mxu0 0.0
        %1653 = vmatmul.mubr.f32.gmra.mrb[0].mxu0 %v1583
        %v1654 = vpop.f32.mrb[0].mxu0
        %v1655 = vadd.f32 %v1580, %v1654
        %v1656 = vpop.f32.mrb[0].mxu0
        %1657 = vmatprep.mubr.f32.mxu0 0.0
        %1658 = vmatmul.mubr.f32.gmra.mrb[0].mxu0 %v1586
        %v1659 = vpop.f32.mrb[0].mxu0
        %v1660 = vadd.f32 %v1580, %v1659
        %v1661 = vpop.f32.mrb[0].mxu0
        %1662 = vdwg.mxu0
        %v1663 = vmul.f32 %v1655, 0.5
        %v1664 = vmul.f32 %v1660, 0.5
        %v1665 = vmul.f32 %v1655, 0.044715
        %v1666 = vmul.f32 %v1660, 0.044715
        %v1667 = vmul.f32 %v1665, %v1655
        %v1668 = vmul.f32 %v1666, %v1660
        %v1669 = vmul.f32 %v1667, %v1655
        %v1670 = vmul.f32 %v1668, %v1660
        %v1671 = vadd.f32 %v1655, %v1669
        %v1672 = vadd.f32 %v1660, %v1670
        %v1673 = vmul.f32 %v1671, 0.7978846
        %v1674 = vmul.f32 %v1672, 0.7978846
        %v1675 = vtanh.pop %v1673
        %v1676 = vtanh.pop %v1674
        %v1677 = vadd.f32 %v1675, 1.0
        %v1678 = vadd.f32 %v1676, 1.0
        %v1679 = vmul.f32 %v1663, %v1677
        %v1680 = vmul.f32 %v1664, %v1678
        %v1681 = vld [vmem:[%s9] sm:$0xff]
        %v1682 = vld [vmem:[%s9 + $0x8] sm:$0xff]
        %v1683 = vld [vmem:[%s9 + $0x10] sm:$0xff]
        %v1684 = vld [vmem:[%s9 + $0x18] sm:$0xff]
        %v1685 = vld [vmem:[%s9 + $0x20] sm:$0xff]
        %v1686 = vld [vmem:[%s9 + $0x28] sm:$0xff]
        %v1687 = vld [vmem:[%s9 + $0x30] sm:$0xff]
        %v1688 = vld [vmem:[%s9 + $0x38] sm:$0xff]
        %v1689 = vld [vmem:[%s10] sm:$0x1]
        %v1691 = vlaneseq
        %v1692 = vshrl.u32 %v1691, 7
        %v1693 = vsub.s32 0, %v1692
        %v1694 = vrot.slane %v1689, %v1693
        %vm1696 = vcmask 523264
        %v1698 = vsel %vm1696, %v1679, 0
        %v1701 = vsel %vm1696, %v1680, 0
        %1703 = vmatprep.subr.mxu0 0.0
        %1704 = vmatpush1.msra.mxu0 %v1681
        %1705 = vmatprep.subr.mxu0 0.0
        %1706 = vmatpush1.msra.mxu0 %v1682
        %1707 = vmatprep.subr.mxu0 0.0
        %1708 = vmatpush1.msra.mxu0 %v1683
        %1709 = vmatprep.subr.mxu0 0.0
        %1710 = vmatpush1.msra.mxu0 %v1684
        %1711 = vmatprep.subr.mxu0 0.0
        %1712 = vmatpush1.msra.mxu0 %v1685
        %1713 = vmatprep.subr.mxu0 0.0
        %1714 = vmatpush1.msra.mxu0 %v1686
        %1715 = vmatprep.subr.mxu0 0.0
        %1716 = vmatpush1.msra.mxu0 %v1687
        %1717 = vmatprep.subr.mxu0 0.0
        %1718 = vmatpush1.msra.mxu0 %v1688
        %1719 = vmatprep.subr.mxu0 0.0
        %1720 = vmatpush1.msra.mxu0 0.0
        %1721 = vmatprep.subr.mxu0 0.0
        %1722 = vmatpush1.msra.mxu0 0.0
        %1723 = vmatprep.subr.mxu0 0.0
        %1724 = vmatpush1.msra.mxu0 0.0
        %1725 = vmatprep.subr.mxu0 0.0
        %1726 = vmatpush1.msra.mxu0 0.0
        %1727 = vmatprep.subr.mxu0 0.0
        %1728 = vmatpush1.msra.mxu0 0.0
        %1729 = vmatprep.subr.mxu0 0.0
        %1730 = vmatpush1.msra.mxu0 0.0
        %1731 = vmatprep.subr.mxu0 0.0
        %1732 = vmatpush1.msra.mxu0 0.0
        %1733 = vmatprep.subr.mxu0 0.0
        %1734 = vmatpush1.msra.mxu0 0.0
        %1735 = vmatprep.subr.mxu0 0.0
        %1736 = vmatpush1.msra.mxu0 0.0
        %1737 = vmatprep.subr.mxu0 0.0
        %1738 = vmatpush1.msra.mxu0 0.0
        %1739 = vmatprep.subr.mxu0 0.0
        %1740 = vmatpush1.msra.mxu0 0.0
        %1741 = vmatprep.subr.mxu0 0.0
        %1742 = vmatpush1.msra.mxu0 0.0
        %1743 = vmatprep.subr.mxu0 0.0
        %1744 = vmatpush1.msra.mxu0 0.0
        %1745 = vmatprep.subr.mxu0 0.0
        %1746 = vmatpush1.msra.mxu0 0.0
        %1747 = vmatprep.subr.mxu0 0.0
        %1748 = vmatpush1.msra.mxu0 0.0
        %1749 = vmatprep.subr.mxu0 0.0
        %1750 = vmatpush1.msra.mxu0 0.0
        %1751 = vmatprep.subr.mxu0 0.0
        %1752 = vmatpush1.msra.mxu0 0.0
        %1753 = vmatprep.subr.mxu0 0.0
        %1754 = vmatpush1.msra.mxu0 0.0
        %1755 = vmatprep.subr.mxu0 0.0
        %1756 = vmatpush1.msra.mxu0 0.0
        %1757 = vmatprep.subr.mxu0 0.0
        %1758 = vmatpush1.msra.mxu0 0.0
        %1759 = vmatprep.subr.mxu0 0.0
        %1760 = vmatpush1.msra.mxu0 0.0
        %1761 = vmatprep.subr.mxu0 0.0
        %1762 = vmatpush1.msra.mxu0 0.0
        %1763 = vmatprep.subr.mxu0 0.0
        %1764 = vmatpush1.msra.mxu0 0.0
        %1765 = vmatprep.subr.mxu0 0.0
        %1766 = vmatpush1.msra.mxu0 0.0
        %1767 = vmatprep.mubr.f32.mxu0 0.0
        %1768 = vmatmul.mubr.f32.gmra.mrb[0].mxu0 %v1698
        %v1769 = vpop.f32.mrb[0].mxu0
        %v1770 = vadd.f32 %v1694, %v1769
        %v1771 = vpop.f32.mrb[0].mxu0
        %1772 = vmatprep.mubr.f32.mxu0 0.0
        %1773 = vmatmul.mubr.f32.gmra.mrb[0].mxu0 %v1701
        %v1774 = vpop.f32.mrb[0].mxu0
        %v1775 = vadd.f32 %v1694, %v1774
        %v1776 = vpop.f32.mrb[0].mxu0
        %1777 = vdwg.mxu0
        %v1778 = vadd.f32 %v1569, %v1770
        %v1779 = vadd.f32 %v1570, %v1775
        %s1780 = scalar_lea.vmem %s6, 2
        %v1781 = vld [vmem:[%s1780] sm:$0x1]
        %s1782 = scalar_lea.vmem %s6, 3
        %v1783 = vld [vmem:[%s1782] sm:$0x1]
        %v1784 = vsel %vm510, %v1778, 0.0
        %1785 = vadd.xlane.f32.xlu0 %v1784
        %v1786 = vpop.xlane.xlu0 %1785
        %v1787 = vsel %vm510, %v1779, 0.0
        %1788 = vadd.xlane.f32.xlu0 %v1787
        %v1789 = vpop.xlane.xlu0 %1788
        %v1790 = vmul.f32 %v1786, %v1534
        %v1791 = vmul.f32 %v1789, %v1534
        %v1792 = vsub.f32 %v1778, %v1790
        %v1793 = vsub.f32 %v1779, %v1791
        %v1794 = vmul.f32 %v1792, %v1792
        %v1795 = vmul.f32 %v1793, %v1793
        %v1796 = vsel %vm510, %v1794, 0.0
        %1797 = vadd.xlane.f32.xlu0 %v1796
        %v1798 = vpop.xlane.xlu0 %1797
        %v1799 = vsel %vm510, %v1795, 0.0
        %1800 = vadd.xlane.f32.xlu0 %v1799
        %v1801 = vpop.xlane.xlu0 %1800
        %v1802 = vmul.f32 %v1798, %v1534
        %v1803 = vmul.f32 %v1801, %v1534
        %v1804 = vadd.f32 %v1802, 1e-05
        %v1805 = vadd.f32 %v1803, 1e-05
        %v1806 = vrsqrt.pop %v1804
        %v1807 = vrsqrt.pop %v1805
        %v1808 = vmul.f32 %v1792, %v1806
        %v1809 = vmul.f32 %v1793, %v1807
        %v1811 = vlaneseq
        %v1812 = vshrl.u32 %v1811, 7
        %v1813 = vsub.s32 0, %v1812
        %v1814 = vrot.slane %v1781, %v1813
        %v1816 = vmul.f32 %v1808, %v1814
        %v1817 = vmul.f32 %v1809, %v1814
        %v1819 = vlaneseq
        %v1820 = vshrl.u32 %v1819, 7
        %v1821 = vsub.s32 0, %v1820
        %v1822 = vrot.slane %v1783, %v1821
        %v1824 = vadd.f32 %v1816, %v1822
        %v1825 = vadd.f32 %v1817, %v1822
        %s1826 = scalar_lea.vmem %s2, 32
        %v1827 = vld [vmem:[%s1826] sm:$0xff]
        %v1828 = vld [vmem:[%s1826 + $0x8] sm:$0xff]
        %v1829 = vld [vmem:[%s1826 + $0x10] sm:$0xff]
        %v1830 = vld [vmem:[%s1826 + $0x18] sm:$0xff]
        %s1831 = scalar_lea.vmem %s3, 1
        %v1832 = vld [vmem:[%s1831] sm:$0x1]
        %v1834 = vlaneseq
        %v1835 = vshrl.u32 %v1834, 7
        %v1836 = vsub.s32 0, %v1835
        %v1837 = vrot.slane %v1832, %v1836
        %v1840 = vsel %vm510, %v1824, 0
        %v1843 = vsel %vm510, %v1825, 0
        %1845 = vmatprep.subr.mxu0 0.0
        %1846 = vmatpush1.msra.mxu0 %v1827
        %1847 = vmatprep.subr.mxu0 0.0
        %1848 = vmatpush1.msra.mxu0 %v1828
        %1849 = vmatprep.subr.mxu0 0.0
        %1850 = vmatpush1.msra.mxu0 %v1829
        %1851 = vmatprep.subr.mxu0 0.0
        %1852 = vmatpush1.msra.mxu0 %v1830
        %1853 = vmatprep.subr.mxu0 0.0
        %1854 = vmatpush1.msra.mxu0 0.0
        %1855 = vmatprep.subr.mxu0 0.0
        %1856 = vmatpush1.msra.mxu0 0.0
        %1857 = vmatprep.subr.mxu0 0.0
        %1858 = vmatpush1.msra.mxu0 0.0
        %1859 = vmatprep.subr.mxu0 0.0
        %1860 = vmatpush1.msra.mxu0 0.0
        %1861 = vmatprep.subr.mxu0 0.0
        %1862 = vmatpush1.msra.mxu0 0.0
        %1863 = vmatprep.subr.mxu0 0.0
        %1864 = vmatpush1.msra.mxu0 0.0
        %1865 = vmatprep.subr.mxu0 0.0
        %1866 = vmatpush1.msra.mxu0 0.0
        %1867 = vmatprep.subr.mxu0 0.0
        %1868 = vmatpush1.msra.mxu0 0.0
        %1869 = vmatprep.subr.mxu0 0.0
        %1870 = vmatpush1.msra.mxu0 0.0
        %1871 = vmatprep.subr.mxu0 0.0
        %1872 = vmatpush1.msra.mxu0 0.0
        %1873 = vmatprep.subr.mxu0 0.0
        %1874 = vmatpush1.msra.mxu0 0.0
        %1875 = vmatprep.subr.mxu0 0.0
        %1876 = vmatpush1.msra.mxu0 0.0
        %1877 = vmatprep.subr.mxu0 0.0
        %1878 = vmatpush1.msra.mxu0 0.0
        %1879 = vmatprep.subr.mxu0 0.0
        %1880 = vmatpush1.msra.mxu0 0.0
        %1881 = vmatprep.subr.mxu0 0.0
        %1882 = vmatpush1.msra.mxu0 0.0
        %1883 = vmatprep.subr.mxu0 0.0
        %1884 = vmatpush1.msra.mxu0 0.0
        %1885 = vmatprep.subr.mxu0 0.0
        %1886 = vmatpush1.msra.mxu0 0.0
        %1887 = vmatprep.subr.mxu0 0.0
        %1888 = vmatpush1.msra.mxu0 0.0
        %1889 = vmatprep.subr.mxu0 0.0
        %1890 = vmatpush1.msra.mxu0 0.0
        %1891 = vmatprep.subr.mxu0 0.0
        %1892 = vmatpush1.msra.mxu0 0.0
        %1893 = vmatprep.subr.mxu0 0.0
        %1894 = vmatpush1.msra.mxu0 0.0
        %1895 = vmatprep.subr.mxu0 0.0
        %1896 = vmatpush1.msra.mxu0 0.0
        %1897 = vmatprep.subr.mxu0 0.0
        %1898 = vmatpush1.msra.mxu0 0.0
        %1899 = vmatprep.subr.mxu0 0.0
        %1900 = vmatpush1.msra.mxu0 0.0
        %1901 = vmatprep.subr.mxu0 0.0
        %1902 = vmatpush1.msra.mxu0 0.0
        %1903 = vmatprep.subr.mxu0 0.0
        %1904 = vmatpush1.msra.mxu0 0.0
        %1905 = vmatprep.subr.mxu0 0.0
        %1906 = vmatpush1.msra.mxu0 0.0
        %1907 = vmatprep.subr.mxu0 0.0
        %1908 = vmatpush1.msra.mxu0 0.0
        %1909 = vmatprep.mubr.f32.mxu0 0.0
        %1910 = vmatmul.mubr.f32.gmra.mrb[0].mxu0 %v1840
        %v1911 = vpop.f32.mrb[0].mxu0
        %v1912 = vadd.f32 %v1837, %v1911
        %v1913 = vpop.f32.mrb[0].mxu0
        %1914 = vmatprep.mubr.f32.mxu0 0.0
        %1915 = vmatmul.mubr.f32.gmra.mrb[0].mxu0 %v1843
        %v1916 = vpop.f32.mrb[0].mxu0
        %v1917 = vadd.f32 %v1837, %v1916
        %v1918 = vpop.f32.mrb[0].mxu0
        %1919 = vdwg.mxu0
        %1922 = vrot.lane.b32.xlu0 %v1912, 96
        %v1923 = vpop.permute.xlu0 %1922
        %1924 = vrot.lane.b32.xlu0 %v1917, 96
        %v1925 = vpop.permute.xlu0 %1924
        %v1926 = vsel %vm598, %v1912, 0
        %v1928 = vsel %vm598, %v1917, 0
        %v1930 = vsel %vm598, %v1923, 0
        %v1932 = vsel %vm598, %v1925, 0
        %1934 = vmatprep.subr.mxu0 0.0
        %1935 = vmatpush1.xpose.msra.mxu0 %v1930
        %1936 = vmatprep.subr.mxu0 0.0
        %1937 = vmatpush1.xpose.msra.mxu0 %v1932
        %1938 = vmatprep.subr.mxu0 0.0
        %1939 = vmatpush1.xpose.msra.mxu0 0.0
        %1940 = vmatprep.subr.mxu0 0.0
        %1941 = vmatpush1.xpose.msra.mxu0 0.0
        %1942 = vmatprep.subr.mxu0 0.0
        %1943 = vmatpush1.xpose.msra.mxu0 0.0
        %1944 = vmatprep.subr.mxu0 0.0
        %1945 = vmatpush1.xpose.msra.mxu0 0.0
        %1946 = vmatprep.subr.mxu0 0.0
        %1947 = vmatpush1.xpose.msra.mxu0 0.0
        %1948 = vmatprep.subr.mxu0 0.0
        %1949 = vmatpush1.xpose.msra.mxu0 0.0
        %1950 = vmatprep.subr.mxu0 0.0
        %1951 = vmatpush1.xpose.msra.mxu0 0.0
        %1952 = vmatprep.subr.mxu0 0.0
        %1953 = vmatpush1.xpose.msra.mxu0 0.0
        %1954 = vmatprep.subr.mxu0 0.0
        %1955 = vmatpush1.xpose.msra.mxu0 0.0
        %1956 = vmatprep.subr.mxu0 0.0
        %1957 = vmatpush1.xpose.msra.mxu0 0.0
        %1958 = vmatprep.subr.mxu0 0.0
        %1959 = vmatpush1.xpose.msra.mxu0 0.0
        %1960 = vmatprep.subr.mxu0 0.0
        %1961 = vmatpush1.xpose.msra.mxu0 0.0
        %1962 = vmatprep.subr.mxu0 0.0
        %1963 = vmatpush1.xpose.msra.mxu0 0.0
        %1964 = vmatprep.subr.mxu0 0.0
        %1965 = vmatpush1.xpose.msra.mxu0 0.0
        %1966 = vmatprep.subr.mxu0 0.0
        %1967 = vmatpush1.xpose.msra.mxu0 0.0
        %1968 = vmatprep.subr.mxu0 0.0
        %1969 = vmatpush1.xpose.msra.mxu0 0.0
        %1970 = vmatprep.subr.mxu0 0.0
        %1971 = vmatpush1.xpose.msra.mxu0 0.0
        %1972 = vmatprep.subr.mxu0 0.0
        %1973 = vmatpush1.xpose.msra.mxu0 0.0
        %1974 = vmatprep.subr.mxu0 0.0
        %1975 = vmatpush1.xpose.msra.mxu0 0.0
        %1976 = vmatprep.subr.mxu0 0.0
        %1977 = vmatpush1.xpose.msra.mxu0 0.0
        %1978 = vmatprep.subr.mxu0 0.0
        %1979 = vmatpush1.xpose.msra.mxu0 0.0
        %1980 = vmatprep.subr.mxu0 0.0
        %1981 = vmatpush1.xpose.msra.mxu0 0.0
        %1982 = vmatprep.subr.mxu0 0.0
        %1983 = vmatpush1.xpose.msra.mxu0 0.0
        %1984 = vmatprep.subr.mxu0 0.0
        %1985 = vmatpush1.xpose.msra.mxu0 0.0
        %1986 = vmatprep.subr.mxu0 0.0
        %1987 = vmatpush1.xpose.msra.mxu0 0.0
        %1988 = vmatprep.subr.mxu0 0.0
        %1989 = vmatpush1.xpose.msra.mxu0 0.0
        %1990 = vmatprep.subr.mxu0 0.0
        %1991 = vmatpush1.xpose.msra.mxu0 0.0
        %1992 = vmatprep.subr.mxu0 0.0
        %1993 = vmatpush1.xpose.msra.mxu0 0.0
        %1994 = vmatprep.subr.mxu0 0.0
        %1995 = vmatpush1.xpose.msra.mxu0 0.0
        %1996 = vmatprep.subr.mxu0 0.0
        %1997 = vmatpush1.xpose.msra.mxu0 0.0
        %1998 = vmatprep.mubr.f32.mxu0 0.0
        %1999 = vmatmul.mubr.f32.gmra.mrb[0].mxu0 %v1926
        %v2000 = vpop.f32.mrb[0].mxu0
        %v2001 = vadd.f32 0.0, %v2000
        %v2002 = vpop.f32.mrb[0].mxu0
        %2003 = vmatprep.mubr.f32.mxu0 0.0
        %2004 = vmatmul.mubr.f32.gmra.mrb[0].mxu0 %v1928
        %v2005 = vpop.f32.mrb[0].mxu0
        %v2006 = vadd.f32 0.0, %v2005
        %v2007 = vpop.f32.mrb[0].mxu0
        %2008 = vdwg.mxu0
        %v2009 = vmul.f32 %v2001, 0.35355338
        %v2010 = vmul.f32 %v2006, 0.35355338
        %v2011 = vsel %vm684, %v2009, -inf
        %2012 = vmax.xlane.f32.xlu0 %v2011
        %v2013 = vpop.xlane.xlu0 %2012
        %v2014 = vsel %vm684, %v2010, -inf
        %2015 = vmax.xlane.f32.xlu0 %v2014
        %v2016 = vpop.xlane.xlu0 %2015
        %v2017 = vsub.f32 %v2009, %v2013
        %v2018 = vsub.f32 %v2010, %v2016
        %v2019 = vmul.f32 %v2017, 1.442695
        %v2020 = vpow.pop %v2019
        %v2021 = vmul.f32 %v2018, 1.442695
        %v2022 = vpow.pop %v2021
        %v2023 = vsel %vm684, %v2020, 0.0
        %2024 = vadd.xlane.f32.xlu0 %v2023
        %v2025 = vpop.xlane.xlu0 %2024
        %v2026 = vsel %vm684, %v2022, 0.0
        %2027 = vadd.xlane.f32.xlu0 %v2026
        %v2028 = vpop.xlane.xlu0 %2027
        %v2029 = vrcp.pop %v2025
        %v2030 = vrcp.pop %v2028
        %v2031 = vmul.f32 %v2020, %v2029
        %v2032 = vmul.f32 %v2022, %v2030
        %2033 = vrot.lane.b32.xlu0 %v1912, 64
        %v2034 = vpop.permute.xlu0 %2033
        %2035 = vrot.lane.b32.xlu0 %v1917, 64
        %v2036 = vpop.permute.xlu0 %2035
        %v2040 = vsel %vm684, %v2031, 0
        %v2043 = vsel %vm684, %v2032, 0
        %2045 = vmatprep.subr.mxu0 0.0
        %2046 = vmatpush1.msra.mxu0 %v2034
        %2047 = vmatprep.subr.mxu0 0.0
        %2048 = vmatpush1.msra.mxu0 %v2036
        %2049 = vmatprep.subr.mxu0 0.0
        %2050 = vmatpush1.msra.mxu0 0.0
        %2051 = vmatprep.subr.mxu0 0.0
        %2052 = vmatpush1.msra.mxu0 0.0
        %2053 = vmatprep.subr.mxu0 0.0
        %2054 = vmatpush1.msra.mxu0 0.0
        %2055 = vmatprep.subr.mxu0 0.0
        %2056 = vmatpush1.msra.mxu0 0.0
        %2057 = vmatprep.subr.mxu0 0.0
        %2058 = vmatpush1.msra.mxu0 0.0
        %2059 = vmatprep.subr.mxu0 0.0
        %2060 = vmatpush1.msra.mxu0 0.0
        %2061 = vmatprep.subr.mxu0 0.0
        %2062 = vmatpush1.msra.mxu0 0.0
        %2063 = vmatprep.subr.mxu0 0.0
        %2064 = vmatpush1.msra.mxu0 0.0
        %2065 = vmatprep.subr.mxu0 0.0
        %2066 = vmatpush1.msra.mxu0 0.0
        %2067 = vmatprep.subr.mxu0 0.0
        %2068 = vmatpush1.msra.mxu0 0.0
        %2069 = vmatprep.subr.mxu0 0.0
        %2070 = vmatpush1.msra.mxu0 0.0
        %2071 = vmatprep.subr.mxu0 0.0
        %2072 = vmatpush1.msra.mxu0 0.0
        %2073 = vmatprep.subr.mxu0 0.0
        %2074 = vmatpush1.msra.mxu0 0.0
        %2075 = vmatprep.subr.mxu0 0.0
        %2076 = vmatpush1.msra.mxu0 0.0
        %2077 = vmatprep.subr.mxu0 0.0
        %2078 = vmatpush1.msra.mxu0 0.0
        %2079 = vmatprep.subr.mxu0 0.0
        %2080 = vmatpush1.msra.mxu0 0.0
        %2081 = vmatprep.subr.mxu0 0.0
        %2082 = vmatpush1.msra.mxu0 0.0
        %2083 = vmatprep.subr.mxu0 0.0
        %2084 = vmatpush1.msra.mxu0 0.0
        %2085 = vmatprep.subr.mxu0 0.0
        %2086 = vmatpush1.msra.mxu0 0.0
        %2087 = vmatprep.subr.mxu0 0.0
        %2088 = vmatpush1.msra.mxu0 0.0
        %2089 = vmatprep.subr.mxu0 0.0
        %2090 = vmatpush1.msra.mxu0 0.0
        %2091 = vmatprep.subr.mxu0 0.0
        %2092 = vmatpush1.msra.mxu0 0.0
        %2093 = vmatprep.subr.mxu0 0.0
        %2094 = vmatpush1.msra.mxu0 0.0
        %2095 = vmatprep.subr.mxu0 0.0
        %2096 = vmatpush1.msra.mxu0 0.0
        %2097 = vmatprep.subr.mxu0 0.0
        %2098 = vmatpush1.msra.mxu0 0.0
        %2099 = vmatprep.subr.mxu0 0.0
        %2100 = vmatpush1.msra.mxu0 0.0
        %2101 = vmatprep.subr.mxu0 0.0
        %2102 = vmatpush1.msra.mxu0 0.0
        %2103 = vmatprep.subr.mxu0 0.0
        %2104 = vmatpush1.msra.mxu0 0.0
        %2105 = vmatprep.subr.mxu0 0.0
        %2106 = vmatpush1.msra.mxu0 0.0
        %2107 = vmatprep.subr.mxu0 0.0
        %2108 = vmatpush1.msra.mxu0 0.0
        %2109 = vmatprep.mubr.f32.mxu0 0.0
        %2110 = vmatmul.mubr.f32.gmra.mrb[0].mxu0 %v2040
        %v2111 = vpop.f32.mrb[0].mxu0
        %v2112 = vadd.f32 0.0, %v2111
        %v2113 = vpop.f32.mrb[0].mxu0
        %2114 = vmatprep.mubr.f32.mxu0 0.0
        %2115 = vmatmul.mubr.f32.gmra.mrb[0].mxu0 %v2043
        %v2116 = vpop.f32.mrb[0].mxu0
        %v2117 = vadd.f32 0.0, %v2116
        %v2118 = vpop.f32.mrb[0].mxu0
        %2119 = vdwg.mxu0
        %2120 = vrot.lane.b32.xlu0 %v1912, 120
        %v2121 = vpop.permute.xlu0 %2120
        %2122 = vrot.lane.b32.xlu0 %v1917, 120
        %v2123 = vpop.permute.xlu0 %2122
        %2124 = vrot.lane.b32.xlu0 %v1912, 88
        %v2125 = vpop.permute.xlu0 %2124
        %2126 = vrot.lane.b32.xlu0 %v1917, 88
        %v2127 = vpop.permute.xlu0 %2126
        %v2128 = vsel %vm598, %v2121, 0
        %v2130 = vsel %vm598, %v2123, 0
        %v2132 = vsel %vm598, %v2125, 0
        %v2134 = vsel %vm598, %v2127, 0
        %2136 = vmatprep.subr.mxu0 0.0
        %2137 = vmatpush1.xpose.msra.mxu0 %v2132
        %2138 = vmatprep.subr.mxu0 0.0
        %2139 = vmatpush1.xpose.msra.mxu0 %v2134
        %2140 = vmatprep.subr.mxu0 0.0
        %2141 = vmatpush1.xpose.msra.mxu0 0.0
        %2142 = vmatprep.subr.mxu0 0.0
        %2143 = vmatpush1.xpose.msra.mxu0 0.0
        %2144 = vmatprep.subr.mxu0 0.0
        %2145 = vmatpush1.xpose.msra.mxu0 0.0
        %2146 = vmatprep.subr.mxu0 0.0
        %2147 = vmatpush1.xpose.msra.mxu0 0.0
        %2148 = vmatprep.subr.mxu0 0.0
        %2149 = vmatpush1.xpose.msra.mxu0 0.0
        %2150 = vmatprep.subr.mxu0 0.0
        %2151 = vmatpush1.xpose.msra.mxu0 0.0
        %2152 = vmatprep.subr.mxu0 0.0
        %2153 = vmatpush1.xpose.msra.mxu0 0.0
        %2154 = vmatprep.subr.mxu0 0.0
        %2155 = vmatpush1.xpose.msra.mxu0 0.0
        %2156 = vmatprep.subr.mxu0 0.0
        %2157 = vmatpush1.xpose.msra.mxu0 0.0
        %2158 = vmatprep.subr.mxu0 0.0
        %2159 = vmatpush1.xpose.msra.mxu0 0.0
        %2160 = vmatprep.subr.mxu0 0.0
        %2161 = vmatpush1.xpose.msra.mxu0 0.0
        %2162 = vmatprep.subr.mxu0 0.0
        %2163 = vmatpush1.xpose.msra.mxu0 0.0
        %2164 = vmatprep.subr.mxu0 0.0
        %2165 = vmatpush1.xpose.msra.mxu0 0.0
        %2166 = vmatprep.subr.mxu0 0.0
        %2167 = vmatpush1.xpose.msra.mxu0 0.0
        %2168 = vmatprep.subr.mxu0 0.0
        %2169 = vmatpush1.xpose.msra.mxu0 0.0
        %2170 = vmatprep.subr.mxu0 0.0
        %2171 = vmatpush1.xpose.msra.mxu0 0.0
        %2172 = vmatprep.subr.mxu0 0.0
        %2173 = vmatpush1.xpose.msra.mxu0 0.0
        %2174 = vmatprep.subr.mxu0 0.0
        %2175 = vmatpush1.xpose.msra.mxu0 0.0
        %2176 = vmatprep.subr.mxu0 0.0
        %2177 = vmatpush1.xpose.msra.mxu0 0.0
        %2178 = vmatprep.subr.mxu0 0.0
        %2179 = vmatpush1.xpose.msra.mxu0 0.0
        %2180 = vmatprep.subr.mxu0 0.0
        %2181 = vmatpush1.xpose.msra.mxu0 0.0
        %2182 = vmatprep.subr.mxu0 0.0
        %2183 = vmatpush1.xpose.msra.mxu0 0.0
        %2184 = vmatprep.subr.mxu0 0.0
        %2185 = vmatpush1.xpose.msra.mxu0 0.0
        %2186 = vmatprep.subr.mxu0 0.0
        %2187 = vmatpush1.xpose.msra.mxu0 0.0
        %2188 = vmatprep.subr.mxu0 0.0
        %2189 = vmatpush1.xpose.msra.mxu0 0.0
        %2190 = vmatprep.subr.mxu0 0.0
        %2191 = vmatpush1.xpose.msra.mxu0 0.0
        %2192 = vmatprep.subr.mxu0 0.0
        %2193 = vmatpush1.xpose.msra.mxu0 0.0
        %2194 = vmatprep.subr.mxu0 0.0
        %2195 = vmatpush1.xpose.msra.mxu0 0.0
        %2196 = vmatprep.subr.mxu0 0.0
        %2197 = vmatpush1.xpose.msra.mxu0 0.0
        %2198 = vmatprep.subr.mxu0 0.0
        %2199 = vmatpush1.xpose.msra.mxu0 0.0
        %2200 = vmatprep.mubr.f32.mxu0 0.0
        %2201 = vmatmul.mubr.f32.gmra.mrb[0].mxu0 %v2128
        %v2202 = vpop.f32.mrb[0].mxu0
        %v2203 = vadd.f32 0.0, %v2202
        %v2204 = vpop.f32.mrb[0].mxu0
        %2205 = vmatprep.mubr.f32.mxu0 0.0
        %2206 = vmatmul.mubr.f32.gmra.mrb[0].mxu0 %v2130
        %v2207 = vpop.f32.mrb[0].mxu0
        %v2208 = vadd.f32 0.0, %v2207
        %v2209 = vpop.f32.mrb[0].mxu0
        %2210 = vdwg.mxu0
        %v2211 = vmul.f32 %v2203, 0.35355338
        %v2212 = vmul.f32 %v2208, 0.35355338
        %v2213 = vsel %vm684, %v2211, -inf
        %2214 = vmax.xlane.f32.xlu0 %v2213
        %v2215 = vpop.xlane.xlu0 %2214
        %v2216 = vsel %vm684, %v2212, -inf
        %2217 = vmax.xlane.f32.xlu0 %v2216
        %v2218 = vpop.xlane.xlu0 %2217
        %v2219 = vsub.f32 %v2211, %v2215
        %v2220 = vsub.f32 %v2212, %v2218
        %v2221 = vmul.f32 %v2219, 1.442695
        %v2222 = vpow.pop %v2221
        %v2223 = vmul.f32 %v2220, 1.442695
        %v2224 = vpow.pop %v2223
        %v2225 = vsel %vm684, %v2222, 0.0
        %2226 = vadd.xlane.f32.xlu0 %v2225
        %v2227 = vpop.xlane.xlu0 %2226
        %v2228 = vsel %vm684, %v2224, 0.0
        %2229 = vadd.xlane.f32.xlu0 %v2228
        %v2230 = vpop.xlane.xlu0 %2229
        %v2231 = vrcp.pop %v2227
        %v2232 = vrcp.pop %v2230
        %v2233 = vmul.f32 %v2222, %v2231
        %v2234 = vmul.f32 %v2224, %v2232
        %2235 = vrot.lane.b32.xlu0 %v1912, 56
        %v2236 = vpop.permute.xlu0 %2235
        %2237 = vrot.lane.b32.xlu0 %v1917, 56
        %v2238 = vpop.permute.xlu0 %2237
        %v2242 = vsel %vm684, %v2233, 0
        %v2245 = vsel %vm684, %v2234, 0
        %2247 = vmatprep.subr.mxu0 0.0
        %2248 = vmatpush1.msra.mxu0 %v2236
        %2249 = vmatprep.subr.mxu0 0.0
        %2250 = vmatpush1.msra.mxu0 %v2238
        %2251 = vmatprep.subr.mxu0 0.0
        %2252 = vmatpush1.msra.mxu0 0.0
        %2253 = vmatprep.subr.mxu0 0.0
        %2254 = vmatpush1.msra.mxu0 0.0
        %2255 = vmatprep.subr.mxu0 0.0
        %2256 = vmatpush1.msra.mxu0 0.0
        %2257 = vmatprep.subr.mxu0 0.0
        %2258 = vmatpush1.msra.mxu0 0.0
        %2259 = vmatprep.subr.mxu0 0.0
        %2260 = vmatpush1.msra.mxu0 0.0
        %2261 = vmatprep.subr.mxu0 0.0
        %2262 = vmatpush1.msra.mxu0 0.0
        %2263 = vmatprep.subr.mxu0 0.0
        %2264 = vmatpush1.msra.mxu0 0.0
        %2265 = vmatprep.subr.mxu0 0.0
        %2266 = vmatpush1.msra.mxu0 0.0
        %2267 = vmatprep.subr.mxu0 0.0
        %2268 = vmatpush1.msra.mxu0 0.0
        %2269 = vmatprep.subr.mxu0 0.0
        %2270 = vmatpush1.msra.mxu0 0.0
        %2271 = vmatprep.subr.mxu0 0.0
        %2272 = vmatpush1.msra.mxu0 0.0
        %2273 = vmatprep.subr.mxu0 0.0
        %2274 = vmatpush1.msra.mxu0 0.0
        %2275 = vmatprep.subr.mxu0 0.0
        %2276 = vmatpush1.msra.mxu0 0.0
        %2277 = vmatprep.subr.mxu0 0.0
        %2278 = vmatpush1.msra.mxu0 0.0
        %2279 = vmatprep.subr.mxu0 0.0
        %2280 = vmatpush1.msra.mxu0 0.0
        %2281 = vmatprep.subr.mxu0 0.0
        %2282 = vmatpush1.msra.mxu0 0.0
        %2283 = vmatprep.subr.mxu0 0.0
        %2284 = vmatpush1.msra.mxu0 0.0
        %2285 = vmatprep.subr.mxu0 0.0
        %2286 = vmatpush1.msra.mxu0 0.0
        %2287 = vmatprep.subr.mxu0 0.0
        %2288 = vmatpush1.msra.mxu0 0.0
        %2289 = vmatprep.subr.mxu0 0.0
        %2290 = vmatpush1.msra.mxu0 0.0
        %2291 = vmatprep.subr.mxu0 0.0
        %2292 = vmatpush1.msra.mxu0 0.0
        %2293 = vmatprep.subr.mxu0 0.0
        %2294 = vmatpush1.msra.mxu0 0.0
        %2295 = vmatprep.subr.mxu0 0.0
        %2296 = vmatpush1.msra.mxu0 0.0
        %2297 = vmatprep.subr.mxu0 0.0
        %2298 = vmatpush1.msra.mxu0 0.0
        %2299 = vmatprep.subr.mxu0 0.0
        %2300 = vmatpush1.msra.mxu0 0.0
        %2301 = vmatprep.subr.mxu0 0.0
        %2302 = vmatpush1.msra.mxu0 0.0
        %2303 = vmatprep.subr.mxu0 0.0
        %2304 = vmatpush1.msra.mxu0 0.0
        %2305 = vmatprep.subr.mxu0 0.0
        %2306 = vmatpush1.msra.mxu0 0.0
        %2307 = vmatprep.subr.mxu0 0.0
        %2308 = vmatpush1.msra.mxu0 0.0
        %2309 = vmatprep.subr.mxu0 0.0
        %2310 = vmatpush1.msra.mxu0 0.0
        %2311 = vmatprep.mubr.f32.mxu0 0.0
        %2312 = vmatmul.mubr.f32.gmra.mrb[0].mxu0 %v2242
        %v2313 = vpop.f32.mrb[0].mxu0
        %v2314 = vadd.f32 0.0, %v2313
        %v2315 = vpop.f32.mrb[0].mxu0
        %2316 = vmatprep.mubr.f32.mxu0 0.0
        %2317 = vmatmul.mubr.f32.gmra.mrb[0].mxu0 %v2245
        %v2318 = vpop.f32.mrb[0].mxu0
        %v2319 = vadd.f32 0.0, %v2318
        %v2320 = vpop.f32.mrb[0].mxu0
        %2321 = vdwg.mxu0
        %2322 = vrot.lane.b32.xlu0 %v1912, 112
        %v2323 = vpop.permute.xlu0 %2322
        %2324 = vrot.lane.b32.xlu0 %v1917, 112
        %v2325 = vpop.permute.xlu0 %2324
        %2326 = vrot.lane.b32.xlu0 %v1912, 80
        %v2327 = vpop.permute.xlu0 %2326
        %2328 = vrot.lane.b32.xlu0 %v1917, 80
        %v2329 = vpop.permute.xlu0 %2328
        %v2330 = vsel %vm598, %v2323, 0
        %v2332 = vsel %vm598, %v2325, 0
        %v2334 = vsel %vm598, %v2327, 0
        %v2336 = vsel %vm598, %v2329, 0
        %2338 = vmatprep.subr.mxu0 0.0
        %2339 = vmatpush1.xpose.msra.mxu0 %v2334
        %2340 = vmatprep.subr.mxu0 0.0
        %2341 = vmatpush1.xpose.msra.mxu0 %v2336
        %2342 = vmatprep.subr.mxu0 0.0
        %2343 = vmatpush1.xpose.msra.mxu0 0.0
        %2344 = vmatprep.subr.mxu0 0.0
        %2345 = vmatpush1.xpose.msra.mxu0 0.0
        %2346 = vmatprep.subr.mxu0 0.0
        %2347 = vmatpush1.xpose.msra.mxu0 0.0
        %2348 = vmatprep.subr.mxu0 0.0
        %2349 = vmatpush1.xpose.msra.mxu0 0.0
        %2350 = vmatprep.subr.mxu0 0.0
        %2351 = vmatpush1.xpose.msra.mxu0 0.0
        %2352 = vmatprep.subr.mxu0 0.0
        %2353 = vmatpush1.xpose.msra.mxu0 0.0
        %2354 = vmatprep.subr.mxu0 0.0
        %2355 = vmatpush1.xpose.msra.mxu0 0.0
        %2356 = vmatprep.subr.mxu0 0.0
        %2357 = vmatpush1.xpose.msra.mxu0 0.0
        %2358 = vmatprep.subr.mxu0 0.0
        %2359 = vmatpush1.xpose.msra.mxu0 0.0
        %2360 = vmatprep.subr.mxu0 0.0
        %2361 = vmatpush1.xpose.msra.mxu0 0.0
        %2362 = vmatprep.subr.mxu0 0.0
        %2363 = vmatpush1.xpose.msra.mxu0 0.0
        %2364 = vmatprep.subr.mxu0 0.0
        %2365 = vmatpush1.xpose.msra.mxu0 0.0
        %2366 = vmatprep.subr.mxu0 0.0
        %2367 = vmatpush1.xpose.msra.mxu0 0.0
        %2368 = vmatprep.subr.mxu0 0.0
        %2369 = vmatpush1.xpose.msra.mxu0 0.0
        %2370 = vmatprep.subr.mxu0 0.0
        %2371 = vmatpush1.xpose.msra.mxu0 0.0
        %2372 = vmatprep.subr.mxu0 0.0
        %2373 = vmatpush1.xpose.msra.mxu0 0.0
        %2374 = vmatprep.subr.mxu0 0.0
        %2375 = vmatpush1.xpose.msra.mxu0 0.0
        %2376 = vmatprep.subr.mxu0 0.0
        %2377 = vmatpush1.xpose.msra.mxu0 0.0
        %2378 = vmatprep.subr.mxu0 0.0
        %2379 = vmatpush1.xpose.msra.mxu0 0.0
        %2380 = vmatprep.subr.mxu0 0.0
        %2381 = vmatpush1.xpose.msra.mxu0 0.0
        %2382 = vmatprep.subr.mxu0 0.0
        %2383 = vmatpush1.xpose.msra.mxu0 0.0
        %2384 = vmatprep.subr.mxu0 0.0
        %2385 = vmatpush1.xpose.msra.mxu0 0.0
        %2386 = vmatprep.subr.mxu0 0.0
        %2387 = vmatpush1.xpose.msra.mxu0 0.0
        %2388 = vmatprep.subr.mxu0 0.0
        %2389 = vmatpush1.xpose.msra.mxu0 0.0
        %2390 = vmatprep.subr.mxu0 0.0
        %2391 = vmatpush1.xpose.msra.mxu0 0.0
        %2392 = vmatprep.subr.mxu0 0.0
        %2393 = vmatpush1.xpose.msra.mxu0 0.0
        %2394 = vmatprep.subr.mxu0 0.0
        %2395 = vmatpush1.xpose.msra.mxu0 0.0
        %2396 = vmatprep.subr.mxu0 0.0
        %2397 = vmatpush1.xpose.msra.mxu0 0.0
        %2398 = vmatprep.subr.mxu0 0.0
        %2399 = vmatpush1.xpose.msra.mxu0 0.0
        %2400 = vmatprep.subr.mxu0 0.0
        %2401 = vmatpush1.xpose.msra.mxu0 0.0
        %2402 = vmatprep.mubr.f32.mxu0 0.0
        %2403 = vmatmul.mubr.f32.gmra.mrb[0].mxu0 %v2330
        %v2404 = vpop.f32.mrb[0].mxu0
        %v2405 = vadd.f32 0.0, %v2404
        %v2406 = vpop.f32.mrb[0].mxu0
        %2407 = vmatprep.mubr.f32.mxu0 0.0
        %2408 = vmatmul.mubr.f32.gmra.mrb[0].mxu0 %v2332
        %v2409 = vpop.f32.mrb[0].mxu0
        %v2410 = vadd.f32 0.0, %v2409
        %v2411 = vpop.f32.mrb[0].mxu0
        %2412 = vdwg.mxu0
        %v2413 = vmul.f32 %v2405, 0.35355338
        %v2414 = vmul.f32 %v2410, 0.35355338
        %v2415 = vsel %vm684, %v2413, -inf
        %2416 = vmax.xlane.f32.xlu0 %v2415
        %v2417 = vpop.xlane.xlu0 %2416
        %v2418 = vsel %vm684, %v2414, -inf
        %2419 = vmax.xlane.f32.xlu0 %v2418
        %v2420 = vpop.xlane.xlu0 %2419
        %v2421 = vsub.f32 %v2413, %v2417
        %v2422 = vsub.f32 %v2414, %v2420
        %v2423 = vmul.f32 %v2421, 1.442695
        %v2424 = vpow.pop %v2423
        %v2425 = vmul.f32 %v2422, 1.442695
        %v2426 = vpow.pop %v2425
        %v2427 = vsel %vm684, %v2424, 0.0
        %2428 = vadd.xlane.f32.xlu0 %v2427
        %v2429 = vpop.xlane.xlu0 %2428
        %v2430 = vsel %vm684, %v2426, 0.0
        %2431 = vadd.xlane.f32.xlu0 %v2430
        %v2432 = vpop.xlane.xlu0 %2431
        %v2433 = vrcp.pop %v2429
        %v2434 = vrcp.pop %v2432
        %v2435 = vmul.f32 %v2424, %v2433
        %v2436 = vmul.f32 %v2426, %v2434
        %2437 = vrot.lane.b32.xlu0 %v1912, 48
        %v2438 = vpop.permute.xlu0 %2437
        %2439 = vrot.lane.b32.xlu0 %v1917, 48
        %v2440 = vpop.permute.xlu0 %2439
        %v2444 = vsel %vm684, %v2435, 0
        %v2447 = vsel %vm684, %v2436, 0
        %2449 = vmatprep.subr.mxu0 0.0
        %2450 = vmatpush1.msra.mxu0 %v2438
        %2451 = vmatprep.subr.mxu0 0.0
        %2452 = vmatpush1.msra.mxu0 %v2440
        %2453 = vmatprep.subr.mxu0 0.0
        %2454 = vmatpush1.msra.mxu0 0.0
        %2455 = vmatprep.subr.mxu0 0.0
        %2456 = vmatpush1.msra.mxu0 0.0
        %2457 = vmatprep.subr.mxu0 0.0
        %2458 = vmatpush1.msra.mxu0 0.0
        %2459 = vmatprep.subr.mxu0 0.0
        %2460 = vmatpush1.msra.mxu0 0.0
        %2461 = vmatprep.subr.mxu0 0.0
        %2462 = vmatpush1.msra.mxu0 0.0
        %2463 = vmatprep.subr.mxu0 0.0
        %2464 = vmatpush1.msra.mxu0 0.0
        %2465 = vmatprep.subr.mxu0 0.0
        %2466 = vmatpush1.msra.mxu0 0.0
        %2467 = vmatprep.subr.mxu0 0.0
        %2468 = vmatpush1.msra.mxu0 0.0
        %2469 = vmatprep.subr.mxu0 0.0
        %2470 = vmatpush1.msra.mxu0 0.0
        %2471 = vmatprep.subr.mxu0 0.0
        %2472 = vmatpush1.msra.mxu0 0.0
        %2473 = vmatprep.subr.mxu0 0.0
        %2474 = vmatpush1.msra.mxu0 0.0
        %2475 = vmatprep.subr.mxu0 0.0
        %2476 = vmatpush1.msra.mxu0 0.0
        %2477 = vmatprep.subr.mxu0 0.0
        %2478 = vmatpush1.msra.mxu0 0.0
        %2479 = vmatprep.subr.mxu0 0.0
        %2480 = vmatpush1.msra.mxu0 0.0
        %2481 = vmatprep.subr.mxu0 0.0
        %2482 = vmatpush1.msra.mxu0 0.0
        %2483 = vmatprep.subr.mxu0 0.0
        %2484 = vmatpush1.msra.mxu0 0.0
        %2485 = vmatprep.subr.mxu0 0.0
        %2486 = vmatpush1.msra.mxu0 0.0
        %2487 = vmatprep.subr.mxu0 0.0
        %2488 = vmatpush1.msra.mxu0 0.0
        %2489 = vmatprep.subr.mxu0 0.0
        %2490 = vmatpush1.msra.mxu0 0.0
        %2491 = vmatprep.subr.mxu0 0.0
        %2492 = vmatpush1.msra.mxu0 0.0
        %2493 = vmatprep.subr.mxu0 0.0
        %2494 = vmatpush1.msra.mxu0 0.0
        %2495 = vmatprep.subr.mxu0 0.0
        %2496 = vmatpush1.msra.mxu0 0.0
        %2497 = vmatprep.subr.mxu0 0.0
        %2498 = vmatpush1.msra.mxu0 0.0
        %2499 = vmatprep.subr.mxu0 0.0
        %2500 = vmatpush1.msra.mxu0 0.0
        %2501 = vmatprep.subr.mxu0 0.0
        %2502 = vmatpush1.msra.mxu0 0.0
        %2503 = vmatprep.subr.mxu0 0.0
        %2504 = vmatpush1.msra.mxu0 0.0
        %2505 = vmatprep.subr.mxu0 0.0
        %2506 = vmatpush1.msra.mxu0 0.0
        %2507 = vmatprep.subr.mxu0 0.0
        %2508 = vmatpush1.msra.mxu0 0.0
        %2509 = vmatprep.subr.mxu0 0.0
        %2510 = vmatpush1.msra.mxu0 0.0
        %2511 = vmatprep.subr.mxu0 0.0
        %2512 = vmatpush1.msra.mxu0 0.0
        %2513 = vmatprep.mubr.f32.mxu0 0.0
        %2514 = vmatmul.mubr.f32.gmra.mrb[0].mxu0 %v2444
        %v2515 = vpop.f32.mrb[0].mxu0
        %v2516 = vadd.f32 0.0, %v2515
        %v2517 = vpop.f32.mrb[0].mxu0
        %2518 = vmatprep.mubr.f32.mxu0 0.0
        %2519 = vmatmul.mubr.f32.gmra.mrb[0].mxu0 %v2447
        %v2520 = vpop.f32.mrb[0].mxu0
        %v2521 = vadd.f32 0.0, %v2520
        %v2522 = vpop.f32.mrb[0].mxu0
        %2523 = vdwg.mxu0
        %2524 = vrot.lane.b32.xlu0 %v1912, 104
        %v2525 = vpop.permute.xlu0 %2524
        %2526 = vrot.lane.b32.xlu0 %v1917, 104
        %v2527 = vpop.permute.xlu0 %2526
        %2528 = vrot.lane.b32.xlu0 %v1912, 72
        %v2529 = vpop.permute.xlu0 %2528
        %2530 = vrot.lane.b32.xlu0 %v1917, 72
        %v2531 = vpop.permute.xlu0 %2530
        %v2532 = vsel %vm598, %v2525, 0
        %v2534 = vsel %vm598, %v2527, 0
        %v2536 = vsel %vm598, %v2529, 0
        %v2538 = vsel %vm598, %v2531, 0
        %2540 = vmatprep.subr.mxu0 0.0
        %2541 = vmatpush1.xpose.msra.mxu0 %v2536
        %2542 = vmatprep.subr.mxu0 0.0
        %2543 = vmatpush1.xpose.msra.mxu0 %v2538
        %2544 = vmatprep.subr.mxu0 0.0
        %2545 = vmatpush1.xpose.msra.mxu0 0.0
        %2546 = vmatprep.subr.mxu0 0.0
        %2547 = vmatpush1.xpose.msra.mxu0 0.0
        %2548 = vmatprep.subr.mxu0 0.0
        %2549 = vmatpush1.xpose.msra.mxu0 0.0
        %2550 = vmatprep.subr.mxu0 0.0
        %2551 = vmatpush1.xpose.msra.mxu0 0.0
        %2552 = vmatprep.subr.mxu0 0.0
        %2553 = vmatpush1.xpose.msra.mxu0 0.0
        %2554 = vmatprep.subr.mxu0 0.0
        %2555 = vmatpush1.xpose.msra.mxu0 0.0
        %2556 = vmatprep.subr.mxu0 0.0
        %2557 = vmatpush1.xpose.msra.mxu0 0.0
        %2558 = vmatprep.subr.mxu0 0.0
        %2559 = vmatpush1.xpose.msra.mxu0 0.0
        %2560 = vmatprep.subr.mxu0 0.0
        %2561 = vmatpush1.xpose.msra.mxu0 0.0
        %2562 = vmatprep.subr.mxu0 0.0
        %2563 = vmatpush1.xpose.msra.mxu0 0.0
        %2564 = vmatprep.subr.mxu0 0.0
        %2565 = vmatpush1.xpose.msra.mxu0 0.0
        %2566 = vmatprep.subr.mxu0 0.0
        %2567 = vmatpush1.xpose.msra.mxu0 0.0
        %2568 = vmatprep.subr.mxu0 0.0
        %2569 = vmatpush1.xpose.msra.mxu0 0.0
        %2570 = vmatprep.subr.mxu0 0.0
        %2571 = vmatpush1.xpose.msra.mxu0 0.0
        %2572 = vmatprep.subr.mxu0 0.0
        %2573 = vmatpush1.xpose.msra.mxu0 0.0
        %2574 = vmatprep.subr.mxu0 0.0
        %2575 = vmatpush1.xpose.msra.mxu0 0.0
        %2576 = vmatprep.subr.mxu0 0.0
        %2577 = vmatpush1.xpose.msra.mxu0 0.0
        %2578 = vmatprep.subr.mxu0 0.0
        %2579 = vmatpush1.xpose.msra.mxu0 0.0
        %2580 = vmatprep.subr.mxu0 0.0
        %2581 = vmatpush1.xpose.msra.mxu0 0.0
        %2582 = vmatprep.subr.mxu0 0.0
        %2583 = vmatpush1.xpose.msra.mxu0 0.0
        %2584 = vmatprep.subr.mxu0 0.0
        %2585 = vmatpush1.xpose.msra.mxu0 0.0
        %2586 = vmatprep.subr.mxu0 0.0
        %2587 = vmatpush1.xpose.msra.mxu0 0.0
        %2588 = vmatprep.subr.mxu0 0.0
        %2589 = vmatpush1.xpose.msra.mxu0 0.0
        %2590 = vmatprep.subr.mxu0 0.0
        %2591 = vmatpush1.xpose.msra.mxu0 0.0
        %2592 = vmatprep.subr.mxu0 0.0
        %2593 = vmatpush1.xpose.msra.mxu0 0.0
        %2594 = vmatprep.subr.mxu0 0.0
        %2595 = vmatpush1.xpose.msra.mxu0 0.0
        %2596 = vmatprep.subr.mxu0 0.0
        %2597 = vmatpush1.xpose.msra.mxu0 0.0
        %2598 = vmatprep.subr.mxu0 0.0
        %2599 = vmatpush1.xpose.msra.mxu0 0.0
        %2600 = vmatprep.subr.mxu0 0.0
        %2601 = vmatpush1.xpose.msra.mxu0 0.0
        %2602 = vmatprep.subr.mxu0 0.0
        %2603 = vmatpush1.xpose.msra.mxu0 0.0
        %2604 = vmatprep.mubr.f32.mxu0 0.0
        %2605 = vmatmul.mubr.f32.gmra.mrb[0].mxu0 %v2532
        %v2606 = vpop.f32.mrb[0].mxu0
        %v2607 = vadd.f32 0.0, %v2606
        %v2608 = vpop.f32.mrb[0].mxu0
        %2609 = vmatprep.mubr.f32.mxu0 0.0
        %2610 = vmatmul.mubr.f32.gmra.mrb[0].mxu0 %v2534
        %v2611 = vpop.f32.mrb[0].mxu0
        %v2612 = vadd.f32 0.0, %v2611
        %v2613 = vpop.f32.mrb[0].mxu0
        %2614 = vdwg.mxu0
        %v2615 = vmul.f32 %v2607, 0.35355338
        %v2616 = vmul.f32 %v2612, 0.35355338
        %v2617 = vsel %vm684, %v2615, -inf
        %2618 = vmax.xlane.f32.xlu0 %v2617
        %v2619 = vpop.xlane.xlu0 %2618
        %v2620 = vsel %vm684, %v2616, -inf
        %2621 = vmax.xlane.f32.xlu0 %v2620
        %v2622 = vpop.xlane.xlu0 %2621
        %v2623 = vsub.f32 %v2615, %v2619
        %v2624 = vsub.f32 %v2616, %v2622
        %v2625 = vmul.f32 %v2623, 1.442695
        %v2626 = vpow.pop %v2625
        %v2627 = vmul.f32 %v2624, 1.442695
        %v2628 = vpow.pop %v2627
        %v2629 = vsel %vm684, %v2626, 0.0
        %2630 = vadd.xlane.f32.xlu0 %v2629
        %v2631 = vpop.xlane.xlu0 %2630
        %v2632 = vsel %vm684, %v2628, 0.0
        %2633 = vadd.xlane.f32.xlu0 %v2632
        %v2634 = vpop.xlane.xlu0 %2633
        %v2635 = vrcp.pop %v2631
        %v2636 = vrcp.pop %v2634
        %v2637 = vmul.f32 %v2626, %v2635
        %v2638 = vmul.f32 %v2628, %v2636
        %2639 = vrot.lane.b32.xlu0 %v1912, 40
        %v2640 = vpop.permute.xlu0 %2639
        %2641 = vrot.lane.b32.xlu0 %v1917, 40
        %v2642 = vpop.permute.xlu0 %2641
        %v2646 = vsel %vm684, %v2637, 0
        %v2649 = vsel %vm684, %v2638, 0
        %2651 = vmatprep.subr.mxu0 0.0
        %2652 = vmatpush1.msra.mxu0 %v2640
        %2653 = vmatprep.subr.mxu0 0.0
        %2654 = vmatpush1.msra.mxu0 %v2642
        %2655 = vmatprep.subr.mxu0 0.0
        %2656 = vmatpush1.msra.mxu0 0.0
        %2657 = vmatprep.subr.mxu0 0.0
        %2658 = vmatpush1.msra.mxu0 0.0
        %2659 = vmatprep.subr.mxu0 0.0
        %2660 = vmatpush1.msra.mxu0 0.0
        %2661 = vmatprep.subr.mxu0 0.0
        %2662 = vmatpush1.msra.mxu0 0.0
        %2663 = vmatprep.subr.mxu0 0.0
        %2664 = vmatpush1.msra.mxu0 0.0
        %2665 = vmatprep.subr.mxu0 0.0
        %2666 = vmatpush1.msra.mxu0 0.0
        %2667 = vmatprep.subr.mxu0 0.0
        %2668 = vmatpush1.msra.mxu0 0.0
        %2669 = vmatprep.subr.mxu0 0.0
        %2670 = vmatpush1.msra.mxu0 0.0
        %2671 = vmatprep.subr.mxu0 0.0
        %2672 = vmatpush1.msra.mxu0 0.0
        %2673 = vmatprep.subr.mxu0 0.0
        %2674 = vmatpush1.msra.mxu0 0.0
        %2675 = vmatprep.subr.mxu0 0.0
        %2676 = vmatpush1.msra.mxu0 0.0
        %2677 = vmatprep.subr.mxu0 0.0
        %2678 = vmatpush1.msra.mxu0 0.0
        %2679 = vmatprep.subr.mxu0 0.0
        %2680 = vmatpush1.msra.mxu0 0.0
        %2681 = vmatprep.subr.mxu0 0.0
        %2682 = vmatpush1.msra.mxu0 0.0
        %2683 = vmatprep.subr.mxu0 0.0
        %2684 = vmatpush1.msra.mxu0 0.0
        %2685 = vmatprep.subr.mxu0 0.0
        %2686 = vmatpush1.msra.mxu0 0.0
        %2687 = vmatprep.subr.mxu0 0.0
        %2688 = vmatpush1.msra.mxu0 0.0
        %2689 = vmatprep.subr.mxu0 0.0
        %2690 = vmatpush1.msra.mxu0 0.0
        %2691 = vmatprep.subr.mxu0 0.0
        %2692 = vmatpush1.msra.mxu0 0.0
        %2693 = vmatprep.subr.mxu0 0.0
        %2694 = vmatpush1.msra.mxu0 0.0
        %2695 = vmatprep.subr.mxu0 0.0
        %2696 = vmatpush1.msra.mxu0 0.0
        %2697 = vmatprep.subr.mxu0 0.0
        %2698 = vmatpush1.msra.mxu0 0.0
        %2699 = vmatprep.subr.mxu0 0.0
        %2700 = vmatpush1.msra.mxu0 0.0
        %2701 = vmatprep.subr.mxu0 0.0
        %2702 = vmatpush1.msra.mxu0 0.0
        %2703 = vmatprep.subr.mxu0 0.0
        %2704 = vmatpush1.msra.mxu0 0.0
        %2705 = vmatprep.subr.mxu0 0.0
        %2706 = vmatpush1.msra.mxu0 0.0
        %2707 = vmatprep.subr.mxu0 0.0
        %2708 = vmatpush1.msra.mxu0 0.0
        %2709 = vmatprep.subr.mxu0 0.0
        %2710 = vmatpush1.msra.mxu0 0.0
        %2711 = vmatprep.subr.mxu0 0.0
        %2712 = vmatpush1.msra.mxu0 0.0
        %2713 = vmatprep.subr.mxu0 0.0
        %2714 = vmatpush1.msra.mxu0 0.0
        %2715 = vmatprep.mubr.f32.mxu0 0.0
        %2716 = vmatmul.mubr.f32.gmra.mrb[0].mxu0 %v2646
        %v2717 = vpop.f32.mrb[0].mxu0
        %v2718 = vadd.f32 0.0, %v2717
        %v2719 = vpop.f32.mrb[0].mxu0
        %2720 = vmatprep.mubr.f32.mxu0 0.0
        %2721 = vmatmul.mubr.f32.gmra.mrb[0].mxu0 %v2649
        %v2722 = vpop.f32.mrb[0].mxu0
        %v2723 = vadd.f32 0.0, %v2722
        %v2724 = vpop.f32.mrb[0].mxu0
        %2725 = vdwg.mxu0
        %2728 = vrot.lane.b32.xlu0 %v2314, 8
        %v2729 = vpop.permute.xlu0 %2728
        %2730 = vrot.lane.b32.xlu0 %v2319, 8
        %v2731 = vpop.permute.xlu0 %2730
        %2736 = vrot.lane.b32.xlu0 %v2516, 16
        %v2737 = vpop.permute.xlu0 %2736
        %2738 = vrot.lane.b32.xlu0 %v2521, 16
        %v2739 = vpop.permute.xlu0 %2738
        %2744 = vrot.lane.b32.xlu0 %v2718, 24
        %v2745 = vpop.permute.xlu0 %2744
        %2746 = vrot.lane.b32.xlu0 %v2723, 24
        %v2747 = vpop.permute.xlu0 %2746
        %v2750 = vsel %vm598, %v2112, %v2729
        %v2751 = vsel %vm598, %v2117, %v2731
        %v2752 = vsel %vm684, %v2750, %v2737
        %v2753 = vsel %vm684, %v2751, %v2739
        %v2754 = vsel %vm1428, %v2752, %v2745
        %v2755 = vsel %vm1428, %v2753, %v2747
        %s2756 = scalar_lea.vmem %s4, 32
        %v2757 = vld [vmem:[%s2756] sm:$0xff]
        %v2758 = vld [vmem:[%s2756 + $0x8] sm:$0xff]
        %v2759 = vld [vmem:[%s2756 + $0x10] sm:$0xff]
        %v2760 = vld [vmem:[%s2756 + $0x18] sm:$0xff]
        %s2761 = scalar_lea.vmem %s5, 1
        %v2762 = vld [vmem:[%s2761] sm:$0x1]
        %v2764 = vlaneseq
        %v2765 = vshrl.u32 %v2764, 7
        %v2766 = vsub.s32 0, %v2765
        %v2767 = vrot.slane %v2762, %v2766
        %v2770 = vsel %vm510, %v2754, 0
        %v2773 = vsel %vm510, %v2755, 0
        %2775 = vmatprep.subr.mxu0 0.0
        %2776 = vmatpush1.msra.mxu0 %v2757
        %2777 = vmatprep.subr.mxu0 0.0
        %2778 = vmatpush1.msra.mxu0 %v2758
        %2779 = vmatprep.subr.mxu0 0.0
        %2780 = vmatpush1.msra.mxu0 %v2759
        %2781 = vmatprep.subr.mxu0 0.0
        %2782 = vmatpush1.msra.mxu0 %v2760
        %2783 = vmatprep.subr.mxu0 0.0
        %2784 = vmatpush1.msra.mxu0 0.0
        %2785 = vmatprep.subr.mxu0 0.0
        %2786 = vmatpush1.msra.mxu0 0.0
        %2787 = vmatprep.subr.mxu0 0.0
        %2788 = vmatpush1.msra.mxu0 0.0
        %2789 = vmatprep.subr.mxu0 0.0
        %2790 = vmatpush1.msra.mxu0 0.0
        %2791 = vmatprep.subr.mxu0 0.0
        %2792 = vmatpush1.msra.mxu0 0.0
        %2793 = vmatprep.subr.mxu0 0.0
        %2794 = vmatpush1.msra.mxu0 0.0
        %2795 = vmatprep.subr.mxu0 0.0
        %2796 = vmatpush1.msra.mxu0 0.0
        %2797 = vmatprep.subr.mxu0 0.0
        %2798 = vmatpush1.msra.mxu0 0.0
        %2799 = vmatprep.subr.mxu0 0.0
        %2800 = vmatpush1.msra.mxu0 0.0
        %2801 = vmatprep.subr.mxu0 0.0
        %2802 = vmatpush1.msra.mxu0 0.0
        %2803 = vmatprep.subr.mxu0 0.0
        %2804 = vmatpush1.msra.mxu0 0.0
        %2805 = vmatprep.subr.mxu0 0.0
        %2806 = vmatpush1.msra.mxu0 0.0
        %2807 = vmatprep.subr.mxu0 0.0
        %2808 = vmatpush1.msra.mxu0 0.0
        %2809 = vmatprep.subr.mxu0 0.0
        %2810 = vmatpush1.msra.mxu0 0.0
        %2811 = vmatprep.subr.mxu0 0.0
        %2812 = vmatpush1.msra.mxu0 0.0
        %2813 = vmatprep.subr.mxu0 0.0
        %2814 = vmatpush1.msra.mxu0 0.0
        %2815 = vmatprep.subr.mxu0 0.0
        %2816 = vmatpush1.msra.mxu0 0.0
        %2817 = vmatprep.subr.mxu0 0.0
        %2818 = vmatpush1.msra.mxu0 0.0
        %2819 = vmatprep.subr.mxu0 0.0
        %2820 = vmatpush1.msra.mxu0 0.0
        %2821 = vmatprep.subr.mxu0 0.0
        %2822 = vmatpush1.msra.mxu0 0.0
        %2823 = vmatprep.subr.mxu0 0.0
        %2824 = vmatpush1.msra.mxu0 0.0
        %2825 = vmatprep.subr.mxu0 0.0
        %2826 = vmatpush1.msra.mxu0 0.0
        %2827 = vmatprep.subr.mxu0 0.0
        %2828 = vmatpush1.msra.mxu0 0.0
        %2829 = vmatprep.subr.mxu0 0.0
        %2830 = vmatpush1.msra.mxu0 0.0
        %2831 = vmatprep.subr.mxu0 0.0
        %2832 = vmatpush1.msra.mxu0 0.0
        %2833 = vmatprep.subr.mxu0 0.0
        %2834 = vmatpush1.msra.mxu0 0.0
        %2835 = vmatprep.subr.mxu0 0.0
        %2836 = vmatpush1.msra.mxu0 0.0
        %2837 = vmatprep.subr.mxu0 0.0
        %2838 = vmatpush1.msra.mxu0 0.0
        %2839 = vmatprep.mubr.f32.mxu0 0.0
        %2840 = vmatmul.mubr.f32.gmra.mrb[0].mxu0 %v2770
        %v2841 = vpop.f32.mrb[0].mxu0
        %v2842 = vadd.f32 %v2767, %v2841
        %v2843 = vpop.f32.mrb[0].mxu0
        %2844 = vmatprep.mubr.f32.mxu0 0.0
        %2845 = vmatmul.mubr.f32.gmra.mrb[0].mxu0 %v2773
        %v2846 = vpop.f32.mrb[0].mxu0
        %v2847 = vadd.f32 %v2767, %v2846
        %v2848 = vpop.f32.mrb[0].mxu0
        %2849 = vdwg.mxu0
        %v2850 = vadd.f32 %v1824, %v2842
        %v2851 = vadd.f32 %v1825, %v2847
        %s2852 = scalar_lea.vmem %s6, 4
        %v2853 = vld [vmem:[%s2852] sm:$0x1]
        %s2854 = scalar_lea.vmem %s6, 5
        %v2855 = vld [vmem:[%s2854] sm:$0x1]
        %v2856 = vsel %vm510, %v2850, 0.0
        %2857 = vadd.xlane.f32.xlu0 %v2856
        %v2858 = vpop.xlane.xlu0 %2857
        %v2859 = vsel %vm510, %v2851, 0.0
        %2860 = vadd.xlane.f32.xlu0 %v2859
        %v2861 = vpop.xlane.xlu0 %2860
        %v2862 = vmul.f32 %v2858, %v1534
        %v2863 = vmul.f32 %v2861, %v1534
        %v2864 = vsub.f32 %v2850, %v2862
        %v2865 = vsub.f32 %v2851, %v2863
        %v2866 = vmul.f32 %v2864, %v2864
        %v2867 = vmul.f32 %v2865, %v2865
        %v2868 = vsel %vm510, %v2866, 0.0
        %2869 = vadd.xlane.f32.xlu0 %v2868
        %v2870 = vpop.xlane.xlu0 %2869
        %v2871 = vsel %vm510, %v2867, 0.0
        %2872 = vadd.xlane.f32.xlu0 %v2871
        %v2873 = vpop.xlane.xlu0 %2872
        %v2874 = vmul.f32 %v2870, %v1534
        %v2875 = vmul.f32 %v2873, %v1534
        %v2876 = vadd.f32 %v2874, 1e-05
        %v2877 = vadd.f32 %v2875, 1e-05
        %v2878 = vrsqrt.pop %v2876
        %v2879 = vrsqrt.pop %v2877
        %v2880 = vmul.f32 %v2864, %v2878
        %v2881 = vmul.f32 %v2865, %v2879
        %v2883 = vlaneseq
        %v2884 = vshrl.u32 %v2883, 7
        %v2885 = vsub.s32 0, %v2884
        %v2886 = vrot.slane %v2853, %v2885
        %v2888 = vmul.f32 %v2880, %v2886
        %v2889 = vmul.f32 %v2881, %v2886
        %v2891 = vlaneseq
        %v2892 = vshrl.u32 %v2891, 7
        %v2893 = vsub.s32 0, %v2892
        %v2894 = vrot.slane %v2855, %v2893
        %v2896 = vadd.f32 %v2888, %v2894
        %v2897 = vadd.f32 %v2889, %v2894
        %s2898 = scalar_lea.vmem %s7, 32
        %v2899 = vld [vmem:[%s2898] sm:$0xff]
        %v2900 = vld [vmem:[%s2898 + $0x8] sm:$0xff]
        %v2901 = vld [vmem:[%s2898 + $0x10] sm:$0xff]
        %v2902 = vld [vmem:[%s2898 + $0x18] sm:$0xff]
        %s2903 = scalar_lea.vmem %s8, 1
        %v2904 = vld [vmem:[%s2903] sm:$0x1]
        %v2906 = vlaneseq
        %v2907 = vshrl.u32 %v2906, 7
        %v2908 = vsub.s32 0, %v2907
        %v2909 = vrot.slane %v2904, %v2908
        %v2912 = vsel %vm510, %v2896, 0
        %v2915 = vsel %vm510, %v2897, 0
        %2917 = vmatprep.subr.mxu0 0.0
        %2918 = vmatpush1.msra.mxu0 %v2899
        %2919 = vmatprep.subr.mxu0 0.0
        %2920 = vmatpush1.msra.mxu0 %v2900
        %2921 = vmatprep.subr.mxu0 0.0
        %2922 = vmatpush1.msra.mxu0 %v2901
        %2923 = vmatprep.subr.mxu0 0.0
        %2924 = vmatpush1.msra.mxu0 %v2902
        %2925 = vmatprep.subr.mxu0 0.0
        %2926 = vmatpush1.msra.mxu0 0.0
        %2927 = vmatprep.subr.mxu0 0.0
        %2928 = vmatpush1.msra.mxu0 0.0
        %2929 = vmatprep.subr.mxu0 0.0
        %2930 = vmatpush1.msra.mxu0 0.0
        %2931 = vmatprep.subr.mxu0 0.0
        %2932 = vmatpush1.msra.mxu0 0.0
        %2933 = vmatprep.subr.mxu0 0.0
        %2934 = vmatpush1.msra.mxu0 0.0
        %2935 = vmatprep.subr.mxu0 0.0
        %2936 = vmatpush1.msra.mxu0 0.0
        %2937 = vmatprep.subr.mxu0 0.0
        %2938 = vmatpush1.msra.mxu0 0.0
        %2939 = vmatprep.subr.mxu0 0.0
        %2940 = vmatpush1.msra.mxu0 0.0
        %2941 = vmatprep.subr.mxu0 0.0
        %2942 = vmatpush1.msra.mxu0 0.0
        %2943 = vmatprep.subr.mxu0 0.0
        %2944 = vmatpush1.msra.mxu0 0.0
        %2945 = vmatprep.subr.mxu0 0.0
        %2946 = vmatpush1.msra.mxu0 0.0
        %2947 = vmatprep.subr.mxu0 0.0
        %2948 = vmatpush1.msra.mxu0 0.0
        %2949 = vmatprep.subr.mxu0 0.0
        %2950 = vmatpush1.msra.mxu0 0.0
        %2951 = vmatprep.subr.mxu0 0.0
        %2952 = vmatpush1.msra.mxu0 0.0
        %2953 = vmatprep.subr.mxu0 0.0
        %2954 = vmatpush1.msra.mxu0 0.0
        %2955 = vmatprep.subr.mxu0 0.0
        %2956 = vmatpush1.msra.mxu0 0.0
        %2957 = vmatprep.subr.mxu0 0.0
        %2958 = vmatpush1.msra.mxu0 0.0
        %2959 = vmatprep.subr.mxu0 0.0
        %2960 = vmatpush1.msra.mxu0 0.0
        %2961 = vmatprep.subr.mxu0 0.0
        %2962 = vmatpush1.msra.mxu0 0.0
        %2963 = vmatprep.subr.mxu0 0.0
        %2964 = vmatpush1.msra.mxu0 0.0
        %2965 = vmatprep.subr.mxu0 0.0
        %2966 = vmatpush1.msra.mxu0 0.0
        %2967 = vmatprep.subr.mxu0 0.0
        %2968 = vmatpush1.msra.mxu0 0.0
        %2969 = vmatprep.subr.mxu0 0.0
        %2970 = vmatpush1.msra.mxu0 0.0
        %2971 = vmatprep.subr.mxu0 0.0
        %2972 = vmatpush1.msra.mxu0 0.0
        %2973 = vmatprep.subr.mxu0 0.0
        %2974 = vmatpush1.msra.mxu0 0.0
        %2975 = vmatprep.subr.mxu0 0.0
        %2976 = vmatpush1.msra.mxu0 0.0
        %2977 = vmatprep.subr.mxu0 0.0
        %2978 = vmatpush1.msra.mxu0 0.0
        %2979 = vmatprep.subr.mxu0 0.0
        %2980 = vmatpush1.msra.mxu0 0.0
        %2981 = vmatprep.mubr.f32.mxu0 0.0
        %2982 = vmatmul.mubr.f32.gmra.mrb[0].mxu0 %v2912
        %v2983 = vpop.f32.mrb[0].mxu0
        %v2984 = vadd.f32 %v2909, %v2983
        %v2985 = vpop.f32.mrb[0].mxu0
        %2986 = vmatprep.mubr.f32.mxu0 0.0
        %2987 = vmatmul.mubr.f32.gmra.mrb[0].mxu0 %v2915
        %v2988 = vpop.f32.mrb[0].mxu0
        %v2989 = vadd.f32 %v2909, %v2988
        %v2990 = vpop.f32.mrb[0].mxu0
        %2991 = vdwg.mxu0
        %v2992 = vmul.f32 %v2984, 0.5
        %v2993 = vmul.f32 %v2989, 0.5
        %v2994 = vmul.f32 %v2984, 0.044715
        %v2995 = vmul.f32 %v2989, 0.044715
        %v2996 = vmul.f32 %v2994, %v2984
        %v2997 = vmul.f32 %v2995, %v2989
        %v2998 = vmul.f32 %v2996, %v2984
        %v2999 = vmul.f32 %v2997, %v2989
        %v3000 = vadd.f32 %v2984, %v2998
        %v3001 = vadd.f32 %v2989, %v2999
        %v3002 = vmul.f32 %v3000, 0.7978846
        %v3003 = vmul.f32 %v3001, 0.7978846
        %v3004 = vtanh.pop %v3002
        %v3005 = vtanh.pop %v3003
        %v3006 = vadd.f32 %v3004, 1.0
        %v3007 = vadd.f32 %v3005, 1.0
        %v3008 = vmul.f32 %v2992, %v3006
        %v3009 = vmul.f32 %v2993, %v3007
        %s3010 = scalar_lea.vmem %s9, 64
        %v3011 = vld [vmem:[%s3010] sm:$0xff]
        %v3012 = vld [vmem:[%s3010 + $0x8] sm:$0xff]
        %v3013 = vld [vmem:[%s3010 + $0x10] sm:$0xff]
        %v3014 = vld [vmem:[%s3010 + $0x18] sm:$0xff]
        %v3015 = vld [vmem:[%s3010 + $0x20] sm:$0xff]
        %v3016 = vld [vmem:[%s3010 + $0x28] sm:$0xff]
        %v3017 = vld [vmem:[%s3010 + $0x30] sm:$0xff]
        %v3018 = vld [vmem:[%s3010 + $0x38] sm:$0xff]
        %s3019 = scalar_lea.vmem %s10, 1
        %v3020 = vld [vmem:[%s3019] sm:$0x1]
        %v3022 = vlaneseq
        %v3023 = vshrl.u32 %v3022, 7
        %v3024 = vsub.s32 0, %v3023
        %v3025 = vrot.slane %v3020, %v3024
        %v3028 = vsel %vm1696, %v3008, 0
        %v3031 = vsel %vm1696, %v3009, 0
        %3033 = vmatprep.subr.mxu0 0.0
        %3034 = vmatpush1.msra.mxu0 %v3011
        %3035 = vmatprep.subr.mxu0 0.0
        %3036 = vmatpush1.msra.mxu0 %v3012
        %3037 = vmatprep.subr.mxu0 0.0
        %3038 = vmatpush1.msra.mxu0 %v3013
        %3039 = vmatprep.subr.mxu0 0.0
        %3040 = vmatpush1.msra.mxu0 %v3014
        %3041 = vmatprep.subr.mxu0 0.0
        %3042 = vmatpush1.msra.mxu0 %v3015
        %3043 = vmatprep.subr.mxu0 0.0
        %3044 = vmatpush1.msra.mxu0 %v3016
        %3045 = vmatprep.subr.mxu0 0.0
        %3046 = vmatpush1.msra.mxu0 %v3017
        %3047 = vmatprep.subr.mxu0 0.0
        %3048 = vmatpush1.msra.mxu0 %v3018
        %3049 = vmatprep.subr.mxu0 0.0
        %3050 = vmatpush1.msra.mxu0 0.0
        %3051 = vmatprep.subr.mxu0 0.0
        %3052 = vmatpush1.msra.mxu0 0.0
        %3053 = vmatprep.subr.mxu0 0.0
        %3054 = vmatpush1.msra.mxu0 0.0
        %3055 = vmatprep.subr.mxu0 0.0
        %3056 = vmatpush1.msra.mxu0 0.0
        %3057 = vmatprep.subr.mxu0 0.0
        %3058 = vmatpush1.msra.mxu0 0.0
        %3059 = vmatprep.subr.mxu0 0.0
        %3060 = vmatpush1.msra.mxu0 0.0
        %3061 = vmatprep.subr.mxu0 0.0
        %3062 = vmatpush1.msra.mxu0 0.0
        %3063 = vmatprep.subr.mxu0 0.0
        %3064 = vmatpush1.msra.mxu0 0.0
        %3065 = vmatprep.subr.mxu0 0.0
        %3066 = vmatpush1.msra.mxu0 0.0
        %3067 = vmatprep.subr.mxu0 0.0
        %3068 = vmatpush1.msra.mxu0 0.0
        %3069 = vmatprep.subr.mxu0 0.0
        %3070 = vmatpush1.msra.mxu0 0.0
        %3071 = vmatprep.subr.mxu0 0.0
        %3072 = vmatpush1.msra.mxu0 0.0
        %3073 = vmatprep.subr.mxu0 0.0
        %3074 = vmatpush1.msra.mxu0 0.0
        %3075 = vmatprep.subr.mxu0 0.0
        %3076 = vmatpush1.msra.mxu0 0.0
        %3077 = vmatprep.subr.mxu0 0.0
        %3078 = vmatpush1.msra.mxu0 0.0
        %3079 = vmatprep.subr.mxu0 0.0
        %3080 = vmatpush1.msra.mxu0 0.0
        %3081 = vmatprep.subr.mxu0 0.0
        %3082 = vmatpush1.msra.mxu0 0.0
        %3083 = vmatprep.subr.mxu0 0.0
        %3084 = vmatpush1.msra.mxu0 0.0
        %3085 = vmatprep.subr.mxu0 0.0
        %3086 = vmatpush1.msra.mxu0 0.0
        %3087 = vmatprep.subr.mxu0 0.0
        %3088 = vmatpush1.msra.mxu0 0.0
        %3089 = vmatprep.subr.mxu0 0.0
        %3090 = vmatpush1.msra.mxu0 0.0
        %3091 = vmatprep.subr.mxu0 0.0
        %3092 = vmatpush1.msra.mxu0 0.0
        %3093 = vmatprep.subr.mxu0 0.0
        %3094 = vmatpush1.msra.mxu0 0.0
        %3095 = vmatprep.subr.mxu0 0.0
        %3096 = vmatpush1.msra.mxu0 0.0
        %3097 = vmatprep.mubr.f32.mxu0 0.0
        %3098 = vmatmul.mubr.f32.gmra.mrb[0].mxu0 %v3028
        %v3099 = vpop.f32.mrb[0].mxu0
        %v3100 = vadd.f32 %v3025, %v3099
        %v3101 = vpop.f32.mrb[0].mxu0
        %3102 = vmatprep.mubr.f32.mxu0 0.0
        %3103 = vmatmul.mubr.f32.gmra.mrb[0].mxu0 %v3031
        %v3104 = vpop.f32.mrb[0].mxu0
        %v3105 = vadd.f32 %v3025, %v3104
        %v3106 = vpop.f32.mrb[0].mxu0
        %3107 = vdwg.mxu0
        %v3108 = vadd.f32 %v2896, %v3100
        %v3109 = vadd.f32 %v2897, %v3105
        %s3110 = scalar_lea.vmem %s6, 6
        %v3111 = vld [vmem:[%s3110] sm:$0x1]
        %s3112 = scalar_lea.vmem %s6, 7
        %v3113 = vld [vmem:[%s3112] sm:$0x1]
        %v3114 = vsel %vm510, %v3108, 0.0
        %3115 = vadd.xlane.f32.xlu0 %v3114
        %v3116 = vpop.xlane.xlu0 %3115
        %v3117 = vsel %vm510, %v3109, 0.0
        %3118 = vadd.xlane.f32.xlu0 %v3117
        %v3119 = vpop.xlane.xlu0 %3118
        %v3120 = vmul.f32 %v3116, %v1534
        %v3121 = vmul.f32 %v3119, %v1534
        %v3122 = vsub.f32 %v3108, %v3120
        %v3123 = vsub.f32 %v3109, %v3121
        %v3124 = vmul.f32 %v3122, %v3122
        %v3125 = vmul.f32 %v3123, %v3123
        %v3126 = vsel %vm510, %v3124, 0.0
        %3127 = vadd.xlane.f32.xlu0 %v3126
        %v3128 = vpop.xlane.xlu0 %3127
        %v3129 = vsel %vm510, %v3125, 0.0
        %3130 = vadd.xlane.f32.xlu0 %v3129
        %v3131 = vpop.xlane.xlu0 %3130
        %v3132 = vmul.f32 %v3128, %v1534
        %v3133 = vmul.f32 %v3131, %v1534
        %v3134 = vadd.f32 %v3132, 1e-05
        %v3135 = vadd.f32 %v3133, 1e-05
        %v3136 = vrsqrt.pop %v3134
        %v3137 = vrsqrt.pop %v3135
        %v3138 = vmul.f32 %v3122, %v3136
        %v3139 = vmul.f32 %v3123, %v3137
        %v3141 = vlaneseq
        %v3142 = vshrl.u32 %v3141, 7
        %v3143 = vsub.s32 0, %v3142
        %v3144 = vrot.slane %v3111, %v3143
        %v3146 = vmul.f32 %v3138, %v3144
        %v3147 = vmul.f32 %v3139, %v3144
        %v3149 = vlaneseq
        %v3150 = vshrl.u32 %v3149, 7
        %v3151 = vsub.s32 0, %v3150
        %v3152 = vrot.slane %v3113, %v3151
        %v3154 = vadd.f32 %v3146, %v3152
        %v3155 = vadd.f32 %v3147, %v3152
        %v3156 = vld [vmem:[%s11] sm:$0xff]
        %v3157 = vld [vmem:[%s11 + $0x8] sm:$0xff]
        %v3158 = vld [vmem:[%s11 + $0x10] sm:$0xff]
        %v3159 = vld [vmem:[%s11 + $0x18] sm:$0xff]
        %v3160 = vld [vmem:[%s12] sm:$0x1]
        %v3162 = vlaneseq
        %v3163 = vshrl.u32 %v3162, 7
        %v3164 = vsub.s32 0, %v3163
        %v3165 = vrot.slane %v3160, %v3164
        %v3168 = vsel %vm510, %v3154, 0
        %v3171 = vsel %vm510, %v3155, 0
        %3173 = vmatprep.subr.mxu0 0.0
        %3174 = vmatpush1.msra.mxu0 %v3156
        %3175 = vmatprep.subr.mxu0 0.0
        %3176 = vmatpush1.msra.mxu0 %v3157
        %3177 = vmatprep.subr.mxu0 0.0
        %3178 = vmatpush1.msra.mxu0 %v3158
        %3179 = vmatprep.subr.mxu0 0.0
        %3180 = vmatpush1.msra.mxu0 %v3159
        %3181 = vmatprep.subr.mxu0 0.0
        %3182 = vmatpush1.msra.mxu0 0.0
        %3183 = vmatprep.subr.mxu0 0.0
        %3184 = vmatpush1.msra.mxu0 0.0
        %3185 = vmatprep.subr.mxu0 0.0
        %3186 = vmatpush1.msra.mxu0 0.0
        %3187 = vmatprep.subr.mxu0 0.0
        %3188 = vmatpush1.msra.mxu0 0.0
        %3189 = vmatprep.subr.mxu0 0.0
        %3190 = vmatpush1.msra.mxu0 0.0
        %3191 = vmatprep.subr.mxu0 0.0
        %3192 = vmatpush1.msra.mxu0 0.0
        %3193 = vmatprep.subr.mxu0 0.0
        %3194 = vmatpush1.msra.mxu0 0.0
        %3195 = vmatprep.subr.mxu0 0.0
        %3196 = vmatpush1.msra.mxu0 0.0
        %3197 = vmatprep.subr.mxu0 0.0
        %3198 = vmatpush1.msra.mxu0 0.0
        %3199 = vmatprep.subr.mxu0 0.0
        %3200 = vmatpush1.msra.mxu0 0.0
        %3201 = vmatprep.subr.mxu0 0.0
        %3202 = vmatpush1.msra.mxu0 0.0
        %3203 = vmatprep.subr.mxu0 0.0
        %3204 = vmatpush1.msra.mxu0 0.0
        %3205 = vmatprep.subr.mxu0 0.0
        %3206 = vmatpush1.msra.mxu0 0.0
        %3207 = vmatprep.subr.mxu0 0.0
        %3208 = vmatpush1.msra.mxu0 0.0
        %3209 = vmatprep.subr.mxu0 0.0
        %3210 = vmatpush1.msra.mxu0 0.0
        %3211 = vmatprep.subr.mxu0 0.0
        %3212 = vmatpush1.msra.mxu0 0.0
        %3213 = vmatprep.subr.mxu0 0.0
        %3214 = vmatpush1.msra.mxu0 0.0
        %3215 = vmatprep.subr.mxu0 0.0
        %3216 = vmatpush1.msra.mxu0 0.0
        %3217 = vmatprep.subr.mxu0 0.0
        %3218 = vmatpush1.msra.mxu0 0.0
        %3219 = vmatprep.subr.mxu0 0.0
        %3220 = vmatpush1.msra.mxu0 0.0
        %3221 = vmatprep.subr.mxu0 0.0
        %3222 = vmatpush1.msra.mxu0 0.0
        %3223 = vmatprep.subr.mxu0 0.0
        %3224 = vmatpush1.msra.mxu0 0.0
        %3225 = vmatprep.subr.mxu0 0.0
        %3226 = vmatpush1.msra.mxu0 0.0
        %3227 = vmatprep.subr.mxu0 0.0
        %3228 = vmatpush1.msra.mxu0 0.0
        %3229 = vmatprep.subr.mxu0 0.0
        %3230 = vmatpush1.msra.mxu0 0.0
        %3231 = vmatprep.subr.mxu0 0.0
        %3232 = vmatpush1.msra.mxu0 0.0
        %3233 = vmatprep.subr.mxu0 0.0
        %3234 = vmatpush1.msra.mxu0 0.0
        %3235 = vmatprep.subr.mxu0 0.0
        %3236 = vmatpush1.msra.mxu0 0.0
        %3237 = vmatprep.mubr.f32.mxu0 0.0
        %3238 = vmatmul.mubr.f32.gmra.mrb[0].mxu0 %v3168
        %v3239 = vpop.f32.mrb[0].mxu0
        %v3240 = vadd.f32 %v3165, %v3239
        %v3241 = vpop.f32.mrb[0].mxu0
        %3242 = vmatprep.mubr.f32.mxu0 0.0
        %3243 = vmatmul.mubr.f32.gmra.mrb[0].mxu0 %v3171
        %v3244 = vpop.f32.mrb[0].mxu0
        %v3245 = vadd.f32 %v3165, %v3244
        %v3246 = vpop.f32.mrb[0].mxu0
        %3247 = vdwg.mxu0
        %v3248 = vld [vmem:[%s13] sm:$0xff]
        %v3249 = vld [vmem:[%s13 + $0x8] sm:$0xff]
        %v3250 = vld [vmem:[%s14] sm:$0x1]
        %v3252 = vlaneseq
        %v3253 = vshrl.u32 %v3252, 7
        %v3254 = vsub.s32 0, %v3253
        %v3255 = vrot.slane %v3250, %v3254
        %v3258 = vsel %vm684, %v3240, 0
        %v3261 = vsel %vm684, %v3245, 0
        %3263 = vmatprep.subr.mxu0 0.0
        %3264 = vmatpush1.msra.mxu0 %v3248
        %3265 = vmatprep.subr.mxu0 0.0
        %3266 = vmatpush1.msra.mxu0 %v3249
        %3267 = vmatprep.subr.mxu0 0.0
        %3268 = vmatpush1.msra.mxu0 0.0
        %3269 = vmatprep.subr.mxu0 0.0
        %3270 = vmatpush1.msra.mxu0 0.0
        %3271 = vmatprep.subr.mxu0 0.0
        %3272 = vmatpush1.msra.mxu0 0.0
        %3273 = vmatprep.subr.mxu0 0.0
        %3274 = vmatpush1.msra.mxu0 0.0
        %3275 = vmatprep.subr.mxu0 0.0
        %3276 = vmatpush1.msra.mxu0 0.0
        %3277 = vmatprep.subr.mxu0 0.0
        %3278 = vmatpush1.msra.mxu0 0.0
        %3279 = vmatprep.subr.mxu0 0.0
        %3280 = vmatpush1.msra.mxu0 0.0
        %3281 = vmatprep.subr.mxu0 0.0
        %3282 = vmatpush1.msra.mxu0 0.0
        %3283 = vmatprep.subr.mxu0 0.0
        %3284 = vmatpush1.msra.mxu0 0.0
        %3285 = vmatprep.subr.mxu0 0.0
        %3286 = vmatpush1.msra.mxu0 0.0
        %3287 = vmatprep.subr.mxu0 0.0
        %3288 = vmatpush1.msra.mxu0 0.0
        %3289 = vmatprep.subr.mxu0 0.0
        %3290 = vmatpush1.msra.mxu0 0.0
        %3291 = vmatprep.subr.mxu0 0.0
        %3292 = vmatpush1.msra.mxu0 0.0
        %3293 = vmatprep.subr.mxu0 0.0
        %3294 = vmatpush1.msra.mxu0 0.0
        %3295 = vmatprep.subr.mxu0 0.0
        %3296 = vmatpush1.msra.mxu0 0.0
        %3297 = vmatprep.subr.mxu0 0.0
        %3298 = vmatpush1.msra.mxu0 0.0
        %3299 = vmatprep.subr.mxu0 0.0
        %3300 = vmatpush1.msra.mxu0 0.0
        %3301 = vmatprep.subr.mxu0 0.0
        %3302 = vmatpush1.msra.mxu0 0.0
        %3303 = vmatprep.subr.mxu0 0.0
        %3304 = vmatpush1.msra.mxu0 0.0
        %3305 = vmatprep.subr.mxu0 0.0
        %3306 = vmatpush1.msra.mxu0 0.0
        %3307 = vmatprep.subr.mxu0 0.0
        %3308 = vmatpush1.msra.mxu0 0.0
        %3309 = vmatprep.subr.mxu0 0.0
        %3310 = vmatpush1.msra.mxu0 0.0
        %3311 = vmatprep.subr.mxu0 0.0
        %3312 = vmatpush1.msra.mxu0 0.0
        %3313 = vmatprep.subr.mxu0 0.0
        %3314 = vmatpush1.msra.mxu0 0.0
        %3315 = vmatprep.subr.mxu0 0.0
        %3316 = vmatpush1.msra.mxu0 0.0
        %3317 = vmatprep.subr.mxu0 0.0
        %3318 = vmatpush1.msra.mxu0 0.0
        %3319 = vmatprep.subr.mxu0 0.0
        %3320 = vmatpush1.msra.mxu0 0.0
        %3321 = vmatprep.subr.mxu0 0.0
        %3322 = vmatpush1.msra.mxu0 0.0
        %3323 = vmatprep.subr.mxu0 0.0
        %3324 = vmatpush1.msra.mxu0 0.0
        %3325 = vmatprep.subr.mxu0 0.0
        %3326 = vmatpush1.msra.mxu0 0.0
        %3327 = vmatprep.mubr.f32.mxu0 0.0
        %3328 = vmatmul.mubr.f32.gmra.mrb[0].mxu0 %v3258
        %v3329 = vpop.f32.mrb[0].mxu0
        %v3330 = vadd.f32 %v3255, %v3329
        %v3331 = vpop.f32.mrb[0].mxu0
        %3332 = vmatprep.mubr.f32.mxu0 0.0
        %3333 = vmatmul.mubr.f32.gmra.mrb[0].mxu0 %v3261
        %v3334 = vpop.f32.mrb[0].mxu0
        %v3335 = vadd.f32 %v3255, %v3334
        %v3336 = vpop.f32.mrb[0].mxu0
        %3337 = vdwg.mxu0
        %3338 = vst.msk [vmem:[%s487] sm:$0xff] %vm684, %v3330
        %3339 = vst.msk [vmem:[%s487 + $0x8] sm:$0xff] %vm684, %v3335
        %s3340 = sand.u32 %s357, 1
        %s3341 = scalar_lea.sflag [#allocation3], %s3340
        %s3342 = sand.u32 %s357, 1
        %s3343 = smul.addr %s3342, 16
        %s3344 = scalar_lea.vmem [#allocation2], %s3343
        // Predicated region
        $region81: #{_lambda_.3} parent=79 // pred_check
          %p3345 = pneg %p367
        $region82: #{_lambda_.3} parent=79 // pred_check_branch
          %3347 = sbr.rel (%p3345) target = $region84
        $region83: #{_lambda_.3} parent=79 // pred_region
          %s3349 = ssub.s32 256, 256
          %3350 = vsyncadd %s3341, %s3349
          %s3351 = smul.addr %s29, 2
          %s3352 = smul.addr %s3351, 128
          %s3353 = scalar_lea.hbm %s15, %s3352
          %s3354 = sshll.u32 %s3344, 4
          %s3355 = int_to_ptr.vmem [resolvable:$true] %s3354
          %3360 = dma.vmem_to_hbm [thread:$0]  %s3355, 256, %s3353, %s3341, 128, 128, 8
        $region84: #{_lambda_.3} parent=79 // pred_fallthru
          _
      $region80: #{_lambda_.3} parent=5 // pred_fallthru
        _
      %p3361 = scmp.le.s32.totalorder 2, %s24
      // Predicated region
      $region85: #{_lambda_.3} parent=5 // pred_check
        %p3362 = pneg %p3361
      $region86: #{_lambda_.3} parent=5 // pred_check_branch
        %3364 = sbr.rel (%p3362) target = $region88
      $region87: #{_lambda_.3} parent=5 // pred_region
        %s3365 = ssub.s32 %s24, 2
        // Predicated region
        $region89: #{_lambda_.3} parent=87 // pred_check
          %p3366 = pneg %p373
        $region90: #{_lambda_.3} parent=87 // pred_check_branch
          %3368 = sbr.rel (%p3366) target = $region92
        $region91: #{_lambda_.3} parent=87 // pred_region
          %s3369 = sand.u32 %s358, 1
          %s3370 = scalar_lea.sflag [#allocation3], %s3369
          %s3371 = sand.u32 %s358, 1
          %s3372 = smul.addr %s3371, 16
          %s3373 = scalar_lea.vmem [#allocation2], %s3372
          %3374 = dma.done %s3370, 256
        $region92: #{_lambda_.3} parent=87 // pred_fallthru
          _
      $region88: #{_lambda_.3} parent=5 // pred_fallthru
        _
    $region6: #{_lambda_.3} parent=1 // loop_footer
      %s28 = sadd.s32 1, %s24
    $region7: #{_lambda_.3} parent=1 // loop_footer_branch
      %23 = sbr.rel target = $region3
    $region8: #{_lambda_.3} parent=1 // loop_exit
      _
    %3375 = vsyncpa [#allocation3], 1
    %s3376 = scalar_lea.sflag [#allocation3], 1
    %3377 = vsyncpa %s3376, 1

</llo_original>
